<compile_context>
chip_gen: v6e
topology: v6e:2x2x1
jax: 0.10.0
libtpu: 0.0.40
codegen_flags: <defaults>
</compile_context>

<pallas_src>
import jax
import jax.numpy as jnp
from jax.experimental import pallas as pl
from jax.experimental.pallas import tpu as pltpu

# Small, forward-consistent shapes.
N = 2             # batch
C_IN = 3          # RGB
H = W = 8         # spatial
HW = H * W
NHW = N * HW      # pixel rows per branch (= 128)
HIDDEN = 2048     # resnext50 final feature width (fc input)
ENC_DIM = 256     # enc_dim
NUM_BRANCHES = 2  # encoder1 / encoder2


def dual_encoder_kernel(x_ref, wstem_ref, bstem_ref, wfc_ref, bfc_ref, out_ref):
    # Per-branch views (branch axis squeezed by the BlockSpecs):
    #   x_ref:     (NHW, C_IN)        f32
    #   wstem_ref: (C_IN, HIDDEN)     f32
    #   bstem_ref: (1, HIDDEN)        f32
    #   wfc_ref:   (HIDDEN, ENC_DIM)  bf16
    #   bfc_ref:   (1, ENC_DIM)       f32
    #   out_ref:   (N, ENC_DIM)       f32
    x = x_ref[...]
    w_stem = wstem_ref[...]

    # 1x1-conv stem stand-in: K=3 contraction done as 3 VPU broadcast-FMAs
    # (keeps the MXU free for the fc matmul, no (128,3) relayout/push).
    h = x[:, 0:1] * w_stem[0:1, :]
    for c in range(1, C_IN):
        h = h + x[:, c:c + 1] * w_stem[c:c + 1, :]
    h = jnp.maximum(h + bstem_ref[...], 0.0)                       # (NHW, HIDDEN)

    # Global average pool per image: sublane-split 128 -> (N, 64) stays inside
    # the (8,128) tile; reduction runs on the otherwise-idle XLU/VPU.
    feat = jnp.sum(h.reshape(N, HW, HIDDEN), axis=1) * (1.0 / HW)  # (N, HIDDEN)

    # encoder.fc : Linear(2048 -> enc_dim). Weights travel HBM->VMEM as bf16
    # (half the DMA); upcast once and accumulate in f32 on the MXU.
    w_fc = wfc_ref[...].astype(jnp.float32)
    z = jnp.dot(feat, w_fc, preferred_element_type=jnp.float32) + bfc_ref[...]

    # _normalize: x / ||x||_2 (dim=1). rsqrt goes to the EUP slot; eps avoids 0/0.
    ssq = jnp.sum(z * z, axis=1, keepdims=True)
    out_ref[...] = z * jax.lax.rsqrt(jnp.maximum(ssq, 1e-24))


def dual_branch_forward_train(x1_nchw, x2_nchw, params1, params2):
    """forward_train: (normalize(encoder1(x1)), normalize(encoder2(x2))) in one fused call."""
    # Stack branches, single NCHW -> (branch, N*H*W, C) relayout for both inputs.
    xs = jnp.stack([x1_nchw, x2_nchw])                              # (2, N, C, H, W)
    xs = jnp.transpose(xs, (0, 1, 3, 4, 2)).reshape(NUM_BRANCHES, NHW, C_IN)

    w_stem = jnp.stack([params1[0], params2[0]])                    # (2, C_IN, HIDDEN)    f32
    b_stem = jnp.stack([params1[1], params2[1]])                    # (2, 1, HIDDEN)       f32
    w_fc = jnp.stack([params1[2], params2[2]])                      # (2, HIDDEN, ENC_DIM) bf16
    b_fc = jnp.stack([params1[3], params2[3]])                      # (2, 1, ENC_DIM)      f32

    out = pl.pallas_call(
        dual_encoder_kernel,
        out_shape=jax.ShapeDtypeStruct((NUM_BRANCHES, N, ENC_DIM), jnp.float32),
        grid_spec=pltpu.PrefetchScalarGridSpec(
            num_scalar_prefetch=0,
            grid=(NUM_BRANCHES,),
            in_specs=[
                pl.BlockSpec((pl.Squeezed(), NHW, C_IN), lambda b: (b, 0, 0)),
                pl.BlockSpec((pl.Squeezed(), C_IN, HIDDEN), lambda b: (b, 0, 0)),
                pl.BlockSpec((pl.Squeezed(), 1, HIDDEN), lambda b: (b, 0, 0)),
                pl.BlockSpec((pl.Squeezed(), HIDDEN, ENC_DIM), lambda b: (b, 0, 0)),
                pl.BlockSpec((pl.Squeezed(), 1, ENC_DIM), lambda b: (b, 0, 0)),
            ],
            out_specs=pl.BlockSpec((pl.Squeezed(), N, ENC_DIM), lambda b: (b, 0, 0)),
        ),
        compiler_params=pltpu.CompilerParams(
            # Branch axis is fully independent: shards one encoder per TensorCore on
            # v7x; default double-buffering also prefetches branch-2 weights while
            # branch-1 computes on single-TC v5e/v6e.
            dimension_semantics=("parallel",),
        ),
    )(xs, w_stem, b_stem, w_fc, b_fc)
    return out[0], out[1]


def _make_encoder_params(key):
    k1, k2, k3, k4 = jax.random.split(key, 4)
    w_stem = jax.random.normal(k1, (C_IN, HIDDEN), jnp.float32) * 0.1
    b_stem = jax.random.normal(k2, (1, HIDDEN), jnp.float32) * 0.01
    # fc weights stored bf16: the single largest HBM transfer, halved.
    w_fc = (jax.random.normal(k3, (HIDDEN, ENC_DIM), jnp.float32)
            * (1.0 / (HIDDEN ** 0.5))).astype(jnp.bfloat16)
    b_fc = jax.random.normal(k4, (1, ENC_DIM), jnp.float32) * 0.01
    return (w_stem, b_stem, w_fc, b_fc)


def _reference_encoder(x_nchw, params):
    # Pure-JAX reference of the same simplified encoder, for correctness check.
    w_stem, b_stem, w_fc, b_fc = params
    x = jnp.transpose(x_nchw, (0, 2, 3, 1)).reshape(N * H * W, C_IN)
    h = jnp.maximum(
        jnp.dot(x, w_stem, precision=jax.lax.Precision.HIGHEST) + b_stem, 0.0)
    feat = h.reshape(N, HW, HIDDEN).mean(axis=1)
    z = jnp.dot(feat, w_fc.astype(jnp.float32),
                precision=jax.lax.Precision.HIGHEST) + b_fc
    return z / jnp.linalg.norm(z, axis=1, keepdims=True)


if __name__ == "__main__":
    key = jax.random.PRNGKey(0)
    kx1, kx2, kp1, kp2 = jax.random.split(key, 4)

    x1 = jax.random.normal(kx1, (N, C_IN, H, W), jnp.float32)
    x2 = jax.random.normal(kx2, (N, C_IN, H, W), jnp.float32)

    params1 = _make_encoder_params(kp1)
    params2 = _make_encoder_params(kp2)

    enc1, enc2 = dual_branch_forward_train(x1, x2, params1, params2)
    jax.block_until_ready((enc1, enc2))

    ref1 = _reference_encoder(x1, params1)
    ref2 = _reference_encoder(x2, params2)
    assert enc1.shape == (N, ENC_DIM) and enc2.shape == (N, ENC_DIM)
    assert jnp.allclose(enc1, ref1, atol=2e-4, rtol=2e-4), float(jnp.max(jnp.abs(enc1 - ref1)))
    assert jnp.allclose(enc2, ref2, atol=2e-4, rtol=2e-4), float(jnp.max(jnp.abs(enc2 - ref2)))

    print("KERNEL_OK")
</pallas_src>

<mosaic_0001>
module attributes {stable_mosaic.version = 11 : i64} {
  func.func @dual_encoder_kernel(%arg0: i32, %arg1: memref<1x128x3xf32, #tpu.memory_space<vmem>>, %arg2: memref<1x3x2048xf32, #tpu.memory_space<vmem>>, %arg3: memref<1x1x2048xf32, #tpu.memory_space<vmem>>, %arg4: memref<1x2048x256xbf16, #tpu.memory_space<vmem>>, %arg5: memref<1x1x256xf32, #tpu.memory_space<vmem>>, %arg6: memref<1x2x256xf32, #tpu.memory_space<vmem>>) attributes {dimension_semantics = [#tpu.dimension_semantics<parallel>], iteration_bounds = array<i64: 2>, scalar_prefetch = 0 : i64, scratch_operands = 0 : i64, tpu.core_type = #tpu.core_type<tc>, window_params = [{transform_indices = @transform_0, window_bounds = array<i64: 1, 128, 3>}, {transform_indices = @transform_1, window_bounds = array<i64: 1, 3, 2048>}, {transform_indices = @transform_2, window_bounds = array<i64: 1, 1, 2048>}, {transform_indices = @transform_3, window_bounds = array<i64: 1, 2048, 256>}, {transform_indices = @transform_4, window_bounds = array<i64: 1, 1, 256>}, {transform_indices = @transform_5, window_bounds = array<i64: 1, 2, 256>}]} {
    %c0 = arith.constant 0 : index
    %c0_0 = arith.constant 0 : index
    %c0_1 = arith.constant 0 : index
    %0 = vector.load %arg1[%c0, %c0_0, %c0_1] : memref<1x128x3xf32, #tpu.memory_space<vmem>>, vector<1x128x3xf32>
    %1 = vector.shape_cast %0 : vector<1x128x3xf32> to vector<128x3xf32>
    %c0_2 = arith.constant 0 : index
    %c0_3 = arith.constant 0 : index
    %c0_4 = arith.constant 0 : index
    %2 = vector.load %arg2[%c0_2, %c0_3, %c0_4] : memref<1x3x2048xf32, #tpu.memory_space<vmem>>, vector<1x3x2048xf32>
    %3 = vector.shape_cast %2 : vector<1x3x2048xf32> to vector<3x2048xf32>
    %4 = vector.extract_strided_slice %1 {offsets = [0, 0], sizes = [128, 1], strides = [1, 1]} : vector<128x3xf32> to vector<128x1xf32>
    %5 = vector.extract_strided_slice %3 {offsets = [0, 0], sizes = [1, 2048], strides = [1, 1]} : vector<3x2048xf32> to vector<1x2048xf32>
    %6 = vector.broadcast %4 : vector<128x1xf32> to vector<128x2048xf32>
    %7 = vector.broadcast %5 : vector<1x2048xf32> to vector<128x2048xf32>
    %8 = arith.mulf %6, %7 : vector<128x2048xf32>
    %9 = vector.extract_strided_slice %1 {offsets = [0, 1], sizes = [128, 1], strides = [1, 1]} : vector<128x3xf32> to vector<128x1xf32>
    %10 = vector.extract_strided_slice %3 {offsets = [1, 0], sizes = [1, 2048], strides = [1, 1]} : vector<3x2048xf32> to vector<1x2048xf32>
    %11 = vector.broadcast %9 : vector<128x1xf32> to vector<128x2048xf32>
    %12 = vector.broadcast %10 : vector<1x2048xf32> to vector<128x2048xf32>
    %13 = arith.mulf %11, %12 : vector<128x2048xf32>
    %14 = arith.addf %8, %13 : vector<128x2048xf32>
    %15 = vector.extract_strided_slice %1 {offsets = [0, 2], sizes = [128, 1], strides = [1, 1]} : vector<128x3xf32> to vector<128x1xf32>
    %16 = vector.extract_strided_slice %3 {offsets = [2, 0], sizes = [1, 2048], strides = [1, 1]} : vector<3x2048xf32> to vector<1x2048xf32>
    %17 = vector.broadcast %15 : vector<128x1xf32> to vector<128x2048xf32>
    %18 = vector.broadcast %16 : vector<1x2048xf32> to vector<128x2048xf32>
    %19 = arith.mulf %17, %18 : vector<128x2048xf32>
    %20 = arith.addf %14, %19 : vector<128x2048xf32>
    %c0_5 = arith.constant 0 : index
    %c0_6 = arith.constant 0 : index
    %c0_7 = arith.constant 0 : index
    %21 = vector.load %arg3[%c0_5, %c0_6, %c0_7] : memref<1x1x2048xf32, #tpu.memory_space<vmem>>, vector<1x1x2048xf32>
    %22 = vector.shape_cast %21 : vector<1x1x2048xf32> to vector<1x2048xf32>
    %23 = vector.broadcast %22 : vector<1x2048xf32> to vector<128x2048xf32>
    %24 = arith.addf %20, %23 : vector<128x2048xf32>
    %cst = arith.constant 0.000000e+00 : f32
    %25 = vector.broadcast %cst : f32 to vector<128x2048xf32>
    %26 = arith.maximumf %24, %25 : vector<128x2048xf32>
    %27 = vector.shape_cast %26 : vector<128x2048xf32> to vector<2x64x2048xf32>
    %cst_8 = arith.constant dense<0.000000e+00> : vector<2x2048xf32>
    %28 = vector.multi_reduction <add>, %27, %cst_8 [1] : vector<2x64x2048xf32> to vector<2x2048xf32>
    %cst_9 = arith.constant 1.562500e-02 : f32
    %29 = vector.broadcast %cst_9 : f32 to vector<2x2048xf32>
    %30 = arith.mulf %28, %29 : vector<2x2048xf32>
    %c0_10 = arith.constant 0 : index
    %c0_11 = arith.constant 0 : index
    %c0_12 = arith.constant 0 : index
    %31 = vector.load %arg4[%c0_10, %c0_11, %c0_12] : memref<1x2048x256xbf16, #tpu.memory_space<vmem>>, vector<1x2048x256xbf16>
    %32 = vector.shape_cast %31 : vector<1x2048x256xbf16> to vector<2048x256xbf16>
    %33 = arith.extf %32 : vector<2048x256xbf16> to vector<2048x256xf32>
    %cst_13 = arith.constant dense<0.000000e+00> : vector<2x256xf32>
    %34 = tpu.matmul %30, %33, %cst_13 {dimension_numbers = #tpu.dot_dimension_numbers<[1], [0], [0], [1], [0, 0, 1, 1], [], []>} : vector<2x2048xf32>, vector<2048x256xf32>, vector<2x256xf32> -> vector<2x256xf32>
    %c0_14 = arith.constant 0 : index
    %c0_15 = arith.constant 0 : index
    %c0_16 = arith.constant 0 : index
    %35 = vector.load %arg5[%c0_14, %c0_15, %c0_16] : memref<1x1x256xf32, #tpu.memory_space<vmem>>, vector<1x1x256xf32>
    %36 = vector.shape_cast %35 : vector<1x1x256xf32> to vector<1x256xf32>
    %37 = vector.broadcast %36 : vector<1x256xf32> to vector<2x256xf32>
    %38 = arith.addf %34, %37 : vector<2x256xf32>
    %39 = arith.mulf %38, %38 : vector<2x256xf32>
    %cst_17 = arith.constant dense<0.000000e+00> : vector<2xf32>
    %40 = vector.multi_reduction <add>, %39, %cst_17 [1] : vector<2x256xf32> to vector<2xf32>
    %41 = vector.shape_cast %40 : vector<2xf32> to vector<2x1xf32>
    %cst_18 = arith.constant 1.000000e-24 : f32
    %42 = vector.broadcast %cst_18 : f32 to vector<2x1xf32>
    %43 = arith.maximumf %41, %42 : vector<2x1xf32>
    %44 = math.rsqrt %43 : vector<2x1xf32>
    %45 = vector.broadcast %44 : vector<2x1xf32> to vector<2x256xf32>
    %46 = arith.mulf %38, %45 : vector<2x256xf32>
    %c0_19 = arith.constant 0 : index
    %c0_20 = arith.constant 0 : index
    %c0_21 = arith.constant 0 : index
    %47 = vector.load %arg6[%c0_19, %c0_20, %c0_21] : memref<1x2x256xf32, #tpu.memory_space<vmem>>, vector<1x2x256xf32>
    %48 = vector.shape_cast %47 : vector<1x2x256xf32> to vector<2x256xf32>
    %49 = vector.shape_cast %46 : vector<2x256xf32> to vector<1x2x256xf32>
    tpu.vector_store %arg6[%c0_19, %c0_20, %c0_21], %49 {strides = array<i32>} : memref<1x2x256xf32, #tpu.memory_space<vmem>>, vector<1x2x256xf32>,
    return
  }
  func.func @transform_0(%arg0: i32) -> (i32, i32, i32) {
    %c0_i32 = arith.constant 0 : i32
    %c0_i32_0 = arith.constant 0 : i32
    %c0_i32_1 = arith.constant 0 : i32
    return %arg0, %c0_i32, %c0_i32_0 : i32, i32, i32
  }
  func.func @transform_1(%arg0: i32) -> (i32, i32, i32) {
    %c0_i32 = arith.constant 0 : i32
    %c0_i32_0 = arith.constant 0 : i32
    %c0_i32_1 = arith.constant 0 : i32
    return %arg0, %c0_i32, %c0_i32_0 : i32, i32, i32
  }
  func.func @transform_2(%arg0: i32) -> (i32, i32, i32) {
    %c0_i32 = arith.constant 0 : i32
    %c0_i32_0 = arith.constant 0 : i32
    %c0_i32_1 = arith.constant 0 : i32
    return %arg0, %c0_i32, %c0_i32_0 : i32, i32, i32
  }
  func.func @transform_3(%arg0: i32) -> (i32, i32, i32) {
    %c0_i32 = arith.constant 0 : i32
    %c0_i32_0 = arith.constant 0 : i32
    %c0_i32_1 = arith.constant 0 : i32
    return %arg0, %c0_i32, %c0_i32_0 : i32, i32, i32
  }
  func.func @transform_4(%arg0: i32) -> (i32, i32, i32) {
    %c0_i32 = arith.constant 0 : i32
    %c0_i32_0 = arith.constant 0 : i32
    %c0_i32_1 = arith.constant 0 : i32
    return %arg0, %c0_i32, %c0_i32_0 : i32, i32, i32
  }
  func.func @transform_5(%arg0: i32) -> (i32, i32, i32) {
    %c0_i32 = arith.constant 0 : i32
    %c0_i32_0 = arith.constant 0 : i32
    %c0_i32_1 = arith.constant 0 : i32
    return %arg0, %c0_i32, %c0_i32_0 : i32, i32, i32
  }
}

</mosaic_0001>

<llo_original>
// kernel: tpu_custom_call.1
$region0: #{tpu_custom_call.1}
  #allocation0 [shape = 'u32[]', space=smem, size = 0x4, offset = 0x4, fixed_abs, tag = 'smem constant byte address 0x4 - core index']
  #allocation1 [shape = 'u32[144,128]{1,0:T(1,128)}', space=vmem, size = 0x12000, scoped, tag = 'internal scratch']
  %s0 = inlined_call_operand.vmem [shape: f32[2,128,3], index: 0, kind: input, shape index: {}]
  %s1 = inlined_call_operand.vmem [shape: f32[2,3,2048], index: 1, kind: input, shape index: {}]
  %s2 = inlined_call_operand.hbm [shape: f32[2,1,2048], index: 2, kind: input, shape index: {}]
  %s3 = inlined_call_operand.hbm [shape: bf16[2,2048,256], index: 3, kind: input, shape index: {}]
  %s4 = inlined_call_operand.hbm [shape: f32[2,1,256], index: 4, kind: input, shape index: {}]
  %s5 = inlined_call_operand.hbm [shape: f32[2,2,256], index: 5, kind: output, shape index: {}]
  %s6 = sld [smem:[#allocation0]]
  $region65: #{tpu_custom_call.1} parent=0
    _
  %s8 = ssub.s32 1, %s6
  %s9 = scalar_select 0, %s8, %s6
  $region1: #{tpu_custom_call.1} parent=0
    #allocation2 [shape = 'u8[16384]{0}', space=vmem, size = 0x4000, scoped, tag = 'input window, operand 2']
    #allocation3 [shape = 's32[2]{0}', space=sflag, size = 0x8, scoped, tag = 'scoped memory for tpu_custom_call.1']
    #allocation4 [shape = 's32[2]{0}', space=sflag, size = 0x8, scoped, tag = 'scoped memory for tpu_custom_call.1']
    #allocation5 [shape = 'u8[2097152]{0}', space=vmem, size = 0x200000, scoped, tag = 'input window, operand 3']
    #allocation6 [shape = 's32[2]{0}', space=sflag, size = 0x8, scoped, tag = 'scoped memory for tpu_custom_call.1']
    #allocation7 [shape = 'u8[2048]{0}', space=vmem, size = 0x800, scoped, tag = 'input window, operand 4']
    #allocation8 [shape = 'u8[4096]{0}', space=vmem, size = 0x1000, scoped, tag = 'output window, operand 0']
    %10 = vsyncpa [#allocation3], 0
    %s11 = scalar_lea.sflag [#allocation3], 1
    %12 = vsyncpa %s11, 0
    %13 = vsyncpa [#allocation6], 0
    %s14 = scalar_lea.sflag [#allocation6], 1
    %15 = vsyncpa %s14, 0
    %16 = vsyncpa [#allocation4], 0
    %s17 = scalar_lea.sflag [#allocation4], 1
    %18 = vsyncpa %s17, 0
    loop: start=0, step=1, limit=4
    $region2: #{tpu_custom_call.1} parent=1 // loop_pre_header
      _
    $region3: #{tpu_custom_call.1} parent=1 // loop_header
      %s20 = sphi 0, %s24
      %p21 = scmp.ge.s32.totalorder %s20, 4
      %s30 = sphi 0, %s32
      %s33 = sphi 0, %s30
      %s34 = sphi 0, %s33
      %s50 = sphi 0, %s34
      %s56 = sphi 0, %s58
      %s59 = sphi 0, %s56
      %s60 = sphi 0, %s59
      %s76 = sphi 0, %s60
      %s82 = sphi 0, %s84
      %s85 = sphi 0, %s82
      %s86 = sphi 0, %s85
      %s102 = sphi 0, %s86
      %s108 = sphi 0, %s110
      %s111 = sphi 0, %s108
      %s112 = sphi 0, %s111
      %s128 = sphi 0, %s112
      %s134 = sphi 0, %s136
      %s137 = sphi 0, %s134
      %s138 = sphi 0, %s137
      %s154 = sphi 0, %s138
      %s160 = sphi 0, %s162
      %s163 = sphi 0, %s160
      %s164 = sphi 0, %s163
      %s180 = sphi 0, %s164
    $region4: #{tpu_custom_call.1} parent=1 // loop_header_branch
      %23 = sbr.rel (%p21) target = $region8
    $region5: #{tpu_custom_call.1} parent=1 // loop_body
      %s25 = ssub.s32 %s20, 1
      %s26 = ssub.s32 %s20, 2
      %s27 = sadd.s32 %s20, 1
      %s28 = ssub.s32 %s20, %s27
      %p29 = scmp.eq.s32.totalorder %s28, 0
      %s31 = sadd.s32 %s30, 1
      %s32 = scalar_select %p29, %s30, %s31
      %p35 = pneg %p29
      %p36 = scmp.eq.s32.totalorder %s20, 1
      %p37 = por %p35, %p36
      %p38 = scmp.ne.s32.totalorder %s30, %s33
      %p39 = scmp.eq.s32.totalorder %s20, 0
      %p40 = por %p38, %p39
      %p41 = scmp.ne.s32.totalorder %s30, %s33
      %p42 = scmp.eq.s32.totalorder %s25, 1
      %p43 = por %p41, %p42
      %p44 = scmp.ne.s32.totalorder %s33, %s34
      %p45 = scmp.eq.s32.totalorder %s25, 0
      %p46 = por %p44, %p45
      %p47 = scmp.ne.s32.totalorder %s33, %s34
      %p48 = scmp.eq.s32.totalorder %s26, 1
      %p49 = por %p47, %p48
      %p51 = scmp.ne.s32.totalorder %s34, %s50
      %p52 = scmp.eq.s32.totalorder %s26, 0
      %p53 = por %p51, %p52
      %s54 = ssub.s32 %s20, %s27
      %p55 = scmp.eq.s32.totalorder %s54, 0
      %s57 = sadd.s32 %s56, 1
      %s58 = scalar_select %p55, %s56, %s57
      %p61 = pneg %p55
      %p62 = scmp.eq.s32.totalorder %s20, 1
      %p63 = por %p61, %p62
      %p64 = scmp.ne.s32.totalorder %s56, %s59
      %p65 = scmp.eq.s32.totalorder %s20, 0
      %p66 = por %p64, %p65
      %p67 = scmp.ne.s32.totalorder %s56, %s59
      %p68 = scmp.eq.s32.totalorder %s25, 1
      %p69 = por %p67, %p68
      %p70 = scmp.ne.s32.totalorder %s59, %s60
      %p71 = scmp.eq.s32.totalorder %s25, 0
      %p72 = por %p70, %p71
      %p73 = scmp.ne.s32.totalorder %s59, %s60
      %p74 = scmp.eq.s32.totalorder %s26, 1
      %p75 = por %p73, %p74
      %p77 = scmp.ne.s32.totalorder %s60, %s76
      %p78 = scmp.eq.s32.totalorder %s26, 0
      %p79 = por %p77, %p78
      %s80 = ssub.s32 %s20, %s27
      %p81 = scmp.eq.s32.totalorder %s80, 0
      %s83 = sadd.s32 %s82, 1
      %s84 = scalar_select %p81, %s82, %s83
      %p87 = pneg %p81
      %p88 = scmp.eq.s32.totalorder %s20, 1
      %p89 = por %p87, %p88
      %p90 = scmp.ne.s32.totalorder %s82, %s85
      %p91 = scmp.eq.s32.totalorder %s20, 0
      %p92 = por %p90, %p91
      %p93 = scmp.ne.s32.totalorder %s82, %s85
      %p94 = scmp.eq.s32.totalorder %s25, 1
      %p95 = por %p93, %p94
      %p96 = scmp.ne.s32.totalorder %s85, %s86
      %p97 = scmp.eq.s32.totalorder %s25, 0
      %p98 = por %p96, %p97
      %p99 = scmp.ne.s32.totalorder %s85, %s86
      %p100 = scmp.eq.s32.totalorder %s26, 1
      %p101 = por %p99, %p100
      %p103 = scmp.ne.s32.totalorder %s86, %s102
      %p104 = scmp.eq.s32.totalorder %s26, 0
      %p105 = por %p103, %p104
      %s106 = ssub.s32 %s20, %s27
      %p107 = scmp.eq.s32.totalorder %s106, 0
      %s109 = sadd.s32 %s108, 1
      %s110 = scalar_select %p107, %s108, %s109
      %p113 = pneg %p107
      %p114 = scmp.eq.s32.totalorder %s20, 1
      %p115 = por %p113, %p114
      %p116 = scmp.ne.s32.totalorder %s108, %s111
      %p117 = scmp.eq.s32.totalorder %s20, 0
      %p118 = por %p116, %p117
      %p119 = scmp.ne.s32.totalorder %s108, %s111
      %p120 = scmp.eq.s32.totalorder %s25, 1
      %p121 = por %p119, %p120
      %p122 = scmp.ne.s32.totalorder %s111, %s112
      %p123 = scmp.eq.s32.totalorder %s25, 0
      %p124 = por %p122, %p123
      %p125 = scmp.ne.s32.totalorder %s111, %s112
      %p126 = scmp.eq.s32.totalorder %s26, 1
      %p127 = por %p125, %p126
      %p129 = scmp.ne.s32.totalorder %s112, %s128
      %p130 = scmp.eq.s32.totalorder %s26, 0
      %p131 = por %p129, %p130
      %s132 = ssub.s32 %s20, %s27
      %p133 = scmp.eq.s32.totalorder %s132, 0
      %s135 = sadd.s32 %s134, 1
      %s136 = scalar_select %p133, %s134, %s135
      %p139 = pneg %p133
      %p140 = scmp.eq.s32.totalorder %s20, 1
      %p141 = por %p139, %p140
      %p142 = scmp.ne.s32.totalorder %s134, %s137
      %p143 = scmp.eq.s32.totalorder %s20, 0
      %p144 = por %p142, %p143
      %p145 = scmp.ne.s32.totalorder %s134, %s137
      %p146 = scmp.eq.s32.totalorder %s25, 1
      %p147 = por %p145, %p146
      %p148 = scmp.ne.s32.totalorder %s137, %s138
      %p149 = scmp.eq.s32.totalorder %s25, 0
      %p150 = por %p148, %p149
      %p151 = scmp.ne.s32.totalorder %s137, %s138
      %p152 = scmp.eq.s32.totalorder %s26, 1
      %p153 = por %p151, %p152
      %p155 = scmp.ne.s32.totalorder %s138, %s154
      %p156 = scmp.eq.s32.totalorder %s26, 0
      %p157 = por %p155, %p156
      %s158 = ssub.s32 %s20, %s27
      %p159 = scmp.eq.s32.totalorder %s158, 0
      %s161 = sadd.s32 %s160, 1
      %s162 = scalar_select %p159, %s160, %s161
      %p165 = pneg %p159
      %p166 = scmp.eq.s32.totalorder %s20, 1
      %p167 = por %p165, %p166
      %p168 = scmp.ne.s32.totalorder %s160, %s163
      %p169 = scmp.eq.s32.totalorder %s20, 0
      %p170 = por %p168, %p169
      %p171 = scmp.ne.s32.totalorder %s160, %s163
      %p172 = scmp.eq.s32.totalorder %s25, 1
      %p173 = por %p171, %p172
      %p174 = scmp.ne.s32.totalorder %s163, %s164
      %p175 = scmp.eq.s32.totalorder %s25, 0
      %p176 = por %p174, %p175
      %p177 = scmp.ne.s32.totalorder %s163, %s164
      %p178 = scmp.eq.s32.totalorder %s26, 1
      %p179 = por %p177, %p178
      %p181 = scmp.ne.s32.totalorder %s164, %s180
      %p182 = scmp.eq.s32.totalorder %s26, 0
      %p183 = por %p181, %p182
      %p184 = scmp.le.s32.totalorder 1, %s20
      %p185 = scmp.lt.s32.totalorder %s20, 3
      %p186 = pnand %p184, %p185
      %p187 = pneg %p186
      // Predicated region
      $region9: #{tpu_custom_call.1} parent=5 // pred_check
        _
      $region10: #{tpu_custom_call.1} parent=5 // pred_check_branch
        %189 = sbr.rel (%p186) target = $region12
      $region11: #{tpu_custom_call.1} parent=5 // pred_region
        %s190 = ssub.s32 %s20, 1
      $region12: #{tpu_custom_call.1} parent=5 // pred_fallthru
        _
      %p191 = scmp.lt.s32.totalorder %s20, 2
      // Predicated region
      $region13: #{tpu_custom_call.1} parent=5 // pred_check
        %p192 = pneg %p191
      $region14: #{tpu_custom_call.1} parent=5 // pred_check_branch
        %194 = sbr.rel (%p192) target = $region16
      $region15: #{tpu_custom_call.1} parent=5 // pred_region
        // Predicated region
        $region17: #{tpu_custom_call.1} parent=15 // pred_check
          %p195 = pneg %p40
        $region18: #{tpu_custom_call.1} parent=15 // pred_check_branch
          %197 = sbr.rel (%p195) target = $region20
        $region19: #{tpu_custom_call.1} parent=15 // pred_region
          %p198 = scmp.lt.s32.totalorder %s20, 1
          %s199 = scalar_select %p198, %s20, 1
          %s200 = smul.addr %s199, 16
          %s201 = smul.addr %s200, 8
          %s202 = scalar_lea.vmem %s0, %s201
        $region20: #{tpu_custom_call.1} parent=15 // pred_fallthru
          _
        // Predicated region
        $region21: #{tpu_custom_call.1} parent=15 // pred_check
          %p203 = pneg %p66
        $region22: #{tpu_custom_call.1} parent=15 // pred_check_branch
          %205 = sbr.rel (%p203) target = $region24
        $region23: #{tpu_custom_call.1} parent=15 // pred_region
          %p206 = scmp.lt.s32.totalorder %s20, 1
          %s207 = scalar_select %p206, %s20, 1
          %s208 = smul.addr %s207, 16
          %s209 = smul.addr %s208, 4
          %s210 = scalar_lea.vmem %s1, %s209
        $region24: #{tpu_custom_call.1} parent=15 // pred_fallthru
          _
        // Predicated region
        $region25: #{tpu_custom_call.1} parent=15 // pred_check
          %p211 = pneg %p92
        $region26: #{tpu_custom_call.1} parent=15 // pred_check_branch
          %213 = sbr.rel (%p211) target = $region28
        $region27: #{tpu_custom_call.1} parent=15 // pred_region
          %s214 = sand.u32 %s82, 1
          %s215 = scalar_lea.sflag [#allocation3], %s214
          %s216 = sand.u32 %s82, 1
          %s217 = smul.addr %s216, 16
          %s218 = scalar_lea.vmem [#allocation2], %s217
          %s220 = ssub.s32 256, 256
          %221 = vsyncadd %s215, %s220
          %s222 = smul.addr %s20, 16
          %s223 = smul.addr %s222, 16
          %s224 = scalar_lea.hbm %s2, %s223
          %s226 = sshll.u32 %s218, 4
          %s227 = int_to_ptr.vmem [resolvable:$true] %s226
          %229 = dma.hbm_to_vmem [thread:$0]  %s224, 256, %s227, %s215
        $region28: #{tpu_custom_call.1} parent=15 // pred_fallthru
          _
        // Predicated region
        $region29: #{tpu_custom_call.1} parent=15 // pred_check
          %p230 = pneg %p118
        $region30: #{tpu_custom_call.1} parent=15 // pred_check_branch
          %232 = sbr.rel (%p230) target = $region32
        $region31: #{tpu_custom_call.1} parent=15 // pred_region
          %s233 = sand.u32 %s20, 1
          %s234 = scalar_lea.sflag [#allocation6], %s233
          %s235 = sand.u32 %s108, 1
          %s236 = smul.addr %s235, 2048
          %s237 = scalar_lea.vmem [#allocation5], %s236
          %s239 = ssub.s32 32768, 32768
          %240 = vsyncadd %s234, %s239
          %s241 = smul.addr %s20, 512
          %s242 = smul.addr %s241, 64
          %s243 = scalar_lea.hbm %s3, %s242
          %s244 = sshll.u32 %s237, 4
          %s245 = int_to_ptr.vmem [resolvable:$true] %s244
          %250 = dma.hbm_to_vmem [thread:$0]  %s243, 32768, %s245, %s234, 128, 128, 8
        $region32: #{tpu_custom_call.1} parent=15 // pred_fallthru
          _
        // Predicated region
        $region33: #{tpu_custom_call.1} parent=15 // pred_check
          %p251 = pneg %p144
        $region34: #{tpu_custom_call.1} parent=15 // pred_check_branch
          %253 = sbr.rel (%p251) target = $region36
        $region35: #{tpu_custom_call.1} parent=15 // pred_region
          %s254 = sand.u32 %s20, 1
          %s255 = scalar_lea.sflag [#allocation6], %s254
          %s256 = sand.u32 %s134, 1
          %s257 = smul.addr %s256, 2
          %s258 = scalar_lea.vmem [#allocation7], %s257
          %s260 = ssub.s32 32, 32
          %261 = vsyncadd %s255, %s260
          %s262 = smul.addr %s20, 2
          %s263 = smul.addr %s262, 16
          %s264 = scalar_lea.hbm %s4, %s263
          %s266 = sshll.u32 %s258, 4
          %s267 = int_to_ptr.vmem [resolvable:$true] %s266
          %269 = dma.hbm_to_vmem [thread:$0]  %s264, 32, %s267, %s255
        $region36: #{tpu_custom_call.1} parent=15 // pred_fallthru
          _
      $region16: #{tpu_custom_call.1} parent=5 // pred_fallthru
        _
      %p270 = scmp.le.s32.totalorder 1, %s20
      %p271 = scmp.lt.s32.totalorder %s20, 3
      %p272 = pnand %p270, %p271
      %p273 = pneg %p272
      // Predicated region
      $region37: #{tpu_custom_call.1} parent=5 // pred_check
        _
      $region38: #{tpu_custom_call.1} parent=5 // pred_check_branch
        %275 = sbr.rel (%p272) target = $region40
      $region39: #{tpu_custom_call.1} parent=5 // pred_region
        %s276 = ssub.s32 %s20, 1
        %s277 = sand.u32 %s85, 1
        %s278 = scalar_lea.sflag [#allocation3], %s277
        %s279 = sand.u32 %s85, 1
        %s280 = smul.addr %s279, 16
        %s281 = scalar_lea.vmem [#allocation2], %s280
        // Predicated region
        $region41: #{tpu_custom_call.1} parent=39 // pred_check
          %p282 = pneg %p98
        $region42: #{tpu_custom_call.1} parent=39 // pred_check_branch
          %284 = sbr.rel (%p282) target = $region44
        $region43: #{tpu_custom_call.1} parent=39 // pred_region
          %285 = dma.done %s278, 256
        $region44: #{tpu_custom_call.1} parent=39 // pred_fallthru
          _
        %s286 = sand.u32 %s25, 1
        %s287 = scalar_lea.sflag [#allocation6], %s286
        %s288 = sand.u32 %s111, 1
        %s289 = smul.addr %s288, 2048
        %s290 = scalar_lea.vmem [#allocation5], %s289
        // Predicated region
        $region45: #{tpu_custom_call.1} parent=39 // pred_check
          %p291 = pneg %p124
        $region46: #{tpu_custom_call.1} parent=39 // pred_check_branch
          %293 = sbr.rel (%p291) target = $region48
        $region47: #{tpu_custom_call.1} parent=39 // pred_region
          %294 = dma.done %s287, 32768
        $region48: #{tpu_custom_call.1} parent=39 // pred_fallthru
          _
        %s295 = sand.u32 %s25, 1
        %s296 = scalar_lea.sflag [#allocation6], %s295
        %s297 = sand.u32 %s137, 1
        %s298 = smul.addr %s297, 2
        %s299 = scalar_lea.vmem [#allocation7], %s298
        // Predicated region
        $region49: #{tpu_custom_call.1} parent=39 // pred_check
          %p300 = pneg %p150
        $region50: #{tpu_custom_call.1} parent=39 // pred_check_branch
          %302 = sbr.rel (%p300) target = $region52
        $region51: #{tpu_custom_call.1} parent=39 // pred_region
          %303 = dma.done %s296, 32
        $region52: #{tpu_custom_call.1} parent=39 // pred_fallthru
          _
        %p304 = scmp.lt.s32.totalorder %s25, 1
        %s305 = scalar_select %p304, %s25, 1
        %s306 = smul.addr %s305, 16
        %s307 = smul.addr %s306, 8
        %s308 = scalar_lea.vmem %s0, %s307
        %p309 = pneg %p46
        %p310 = pneg %p43
        %p311 = scmp.lt.s32.totalorder %s25, 1
        %s312 = scalar_select %p311, %s25, 1
        %s313 = smul.addr %s312, 16
        %s314 = smul.addr %s313, 4
        %s315 = scalar_lea.vmem %s1, %s314
        %p316 = pneg %p72
        %p317 = pneg %p69
        %s318 = sand.u32 %s85, 1
        %s319 = scalar_lea.sflag [#allocation3], %s318
        %s320 = sand.u32 %s85, 1
        %s321 = smul.addr %s320, 16
        %s322 = scalar_lea.vmem [#allocation2], %s321
        %p323 = pneg %p98
        %p324 = pneg %p95
        %s325 = sand.u32 %s25, 1
        %s326 = scalar_lea.sflag [#allocation6], %s325
        %s327 = sand.u32 %s111, 1
        %s328 = smul.addr %s327, 2048
        %s329 = scalar_lea.vmem [#allocation5], %s328
        %p330 = pneg %p124
        %p331 = pneg %p121
        %s332 = sand.u32 %s25, 1
        %s333 = scalar_lea.sflag [#allocation6], %s332
        %s334 = sand.u32 %s137, 1
        %s335 = smul.addr %s334, 2
        %s336 = scalar_lea.vmem [#allocation7], %s335
        %p337 = pneg %p150
        %p338 = pneg %p147
        %p339 = pneg %p176
        %p340 = pneg %p173
        %s341 = sand.u32 %s163, 1
        %s342 = scalar_lea.sflag [#allocation4], %s341
        %s343 = sand.u32 %s163, 1
        %s344 = smul.addr %s343, 4
        %s345 = scalar_lea.vmem [#allocation8], %s344
        %p346 = scmp.lt.s32.totalorder %s25, 1
        %s347 = scalar_select %p346, %s25, 1
        %s348 = smul.addr %s347, 16
        %s349 = smul.addr %s348, 8
        %s350 = scalar_lea.vmem %s0, %s349
        %p351 = scmp.lt.s32.totalorder %s25, 1
        %s352 = scalar_select %p351, %s25, 1
        %s353 = smul.addr %s352, 16
        %s354 = smul.addr %s353, 4
        %s355 = scalar_lea.vmem %s1, %s354
        %v356 = vld [vmem:[%s350] sm:$0xff]
        %v357 = vld [vmem:[%s350 + $0x8] sm:$0xff]
        %v358 = vld [vmem:[%s350 + $0x10] sm:$0xff]
        %v359 = vld [vmem:[%s350 + $0x18] sm:$0xff]
        %v360 = vld [vmem:[%s350 + $0x20] sm:$0xff]
        %v361 = vld [vmem:[%s350 + $0x28] sm:$0xff]
        %v362 = vld [vmem:[%s350 + $0x30] sm:$0xff]
        %v363 = vld [vmem:[%s350 + $0x38] sm:$0xff]
        %v364 = vld [vmem:[%s350 + $0x40] sm:$0xff]
        %v365 = vld [vmem:[%s350 + $0x48] sm:$0xff]
        %v366 = vld [vmem:[%s350 + $0x50] sm:$0xff]
        %v367 = vld [vmem:[%s350 + $0x58] sm:$0xff]
        %v368 = vld [vmem:[%s350 + $0x60] sm:$0xff]
        %v369 = vld [vmem:[%s350 + $0x68] sm:$0xff]
        %v370 = vld [vmem:[%s350 + $0x70] sm:$0xff]
        %v371 = vld [vmem:[%s350 + $0x78] sm:$0xff]
        %v372 = vld [vmem:[%s355] sm:$0x77]
        %v373 = vld [vmem:[%s355 + $0x8] sm:$0x77]
        %v374 = vld [vmem:[%s355 + $0x10] sm:$0x77]
        %v375 = vld [vmem:[%s355 + $0x18] sm:$0x77]
        %v376 = vld [vmem:[%s355 + $0x20] sm:$0x77]
        %v377 = vld [vmem:[%s355 + $0x28] sm:$0x77]
        %v378 = vld [vmem:[%s355 + $0x30] sm:$0x77]
        %v379 = vld [vmem:[%s355 + $0x38] sm:$0x77]
        %381 = vset.pattern.permute.xlu0 0
        %382 = vperm.xlu0 %381, %v356
        %v383 = vpop.permute.xlu0 %382
        %386 = vset.pattern.permute.xlu0 0
        %387 = vperm.xlu0 %386, %v357
        %v388 = vpop.permute.xlu0 %387
        %391 = vset.pattern.permute.xlu0 0
        %392 = vperm.xlu0 %391, %v358
        %v393 = vpop.permute.xlu0 %392
        %396 = vset.pattern.permute.xlu0 0
        %397 = vperm.xlu0 %396, %v359
        %v398 = vpop.permute.xlu0 %397
        %401 = vset.pattern.permute.xlu0 0
        %402 = vperm.xlu0 %401, %v360
        %v403 = vpop.permute.xlu0 %402
        %406 = vset.pattern.permute.xlu0 0
        %407 = vperm.xlu0 %406, %v361
        %v408 = vpop.permute.xlu0 %407
        %411 = vset.pattern.permute.xlu0 0
        %412 = vperm.xlu0 %411, %v362
        %v413 = vpop.permute.xlu0 %412
        %416 = vset.pattern.permute.xlu0 0
        %417 = vperm.xlu0 %416, %v363
        %v418 = vpop.permute.xlu0 %417
        %421 = vset.pattern.permute.xlu0 0
        %422 = vperm.xlu0 %421, %v364
        %v423 = vpop.permute.xlu0 %422
        %426 = vset.pattern.permute.xlu0 0
        %427 = vperm.xlu0 %426, %v365
        %v428 = vpop.permute.xlu0 %427
        %431 = vset.pattern.permute.xlu0 0
        %432 = vperm.xlu0 %431, %v366
        %v433 = vpop.permute.xlu0 %432
        %436 = vset.pattern.permute.xlu0 0
        %437 = vperm.xlu0 %436, %v367
        %v438 = vpop.permute.xlu0 %437
        %441 = vset.pattern.permute.xlu0 0
        %442 = vperm.xlu0 %441, %v368
        %v443 = vpop.permute.xlu0 %442
        %446 = vset.pattern.permute.xlu0 0
        %447 = vperm.xlu0 %446, %v369
        %v448 = vpop.permute.xlu0 %447
        %451 = vset.pattern.permute.xlu0 0
        %452 = vperm.xlu0 %451, %v370
        %v453 = vpop.permute.xlu0 %452
        %456 = vset.pattern.permute.xlu0 0
        %457 = vperm.xlu0 %456, %v371
        %v458 = vpop.permute.xlu0 %457
        %v468 = vlaneseq
        %v469 = vshrl.u32 %v468, 7
        %v470 = vsub.s32 0, %v469
        %v471 = vrot.slane %v372, %v470
        %v472 = vlaneseq
        %v473 = vshrl.u32 %v472, 7
        %v474 = vsub.s32 4, %v473
        %v475 = vrot.slane %v372, %v474
        %v476 = vlaneseq
        %v477 = vshrl.u32 %v476, 7
        %v478 = vsub.s32 0, %v477
        %v479 = vrot.slane %v373, %v478
        %v480 = vlaneseq
        %v481 = vshrl.u32 %v480, 7
        %v482 = vsub.s32 4, %v481
        %v483 = vrot.slane %v373, %v482
        %v484 = vlaneseq
        %v485 = vshrl.u32 %v484, 7
        %v486 = vsub.s32 0, %v485
        %v487 = vrot.slane %v374, %v486
        %v488 = vlaneseq
        %v489 = vshrl.u32 %v488, 7
        %v490 = vsub.s32 4, %v489
        %v491 = vrot.slane %v374, %v490
        %v492 = vlaneseq
        %v493 = vshrl.u32 %v492, 7
        %v494 = vsub.s32 0, %v493
        %v495 = vrot.slane %v375, %v494
        %v496 = vlaneseq
        %v497 = vshrl.u32 %v496, 7
        %v498 = vsub.s32 4, %v497
        %v499 = vrot.slane %v375, %v498
        %v500 = vlaneseq
        %v501 = vshrl.u32 %v500, 7
        %v502 = vsub.s32 0, %v501
        %v503 = vrot.slane %v376, %v502
        %v504 = vlaneseq
        %v505 = vshrl.u32 %v504, 7
        %v506 = vsub.s32 4, %v505
        %v507 = vrot.slane %v376, %v506
        %v508 = vlaneseq
        %v509 = vshrl.u32 %v508, 7
        %v510 = vsub.s32 0, %v509
        %v511 = vrot.slane %v377, %v510
        %v512 = vlaneseq
        %v513 = vshrl.u32 %v512, 7
        %v514 = vsub.s32 4, %v513
        %v515 = vrot.slane %v377, %v514
        %v516 = vlaneseq
        %v517 = vshrl.u32 %v516, 7
        %v518 = vsub.s32 0, %v517
        %v519 = vrot.slane %v378, %v518
        %v520 = vlaneseq
        %v521 = vshrl.u32 %v520, 7
        %v522 = vsub.s32 4, %v521
        %v523 = vrot.slane %v378, %v522
        %v524 = vlaneseq
        %v525 = vshrl.u32 %v524, 7
        %v526 = vsub.s32 0, %v525
        %v527 = vrot.slane %v379, %v526
        %v528 = vlaneseq
        %v529 = vshrl.u32 %v528, 7
        %v530 = vsub.s32 4, %v529
        %v531 = vrot.slane %v379, %v530
        %v548 = vlaneseq
        %v549 = vshrl.u32 %v548, 7
        %v550 = vsub.s32 0, %v549
        %v551 = vrot.slane %v471, %v550
        %v552 = vlaneseq
        %v553 = vshrl.u32 %v552, 7
        %v554 = vsub.s32 0, %v553
        %v555 = vrot.slane %v475, %v554
        %v556 = vlaneseq
        %v557 = vshrl.u32 %v556, 7
        %v558 = vsub.s32 0, %v557
        %v559 = vrot.slane %v479, %v558
        %v560 = vlaneseq
        %v561 = vshrl.u32 %v560, 7
        %v562 = vsub.s32 0, %v561
        %v563 = vrot.slane %v483, %v562
        %v564 = vlaneseq
        %v565 = vshrl.u32 %v564, 7
        %v566 = vsub.s32 0, %v565
        %v567 = vrot.slane %v487, %v566
        %v568 = vlaneseq
        %v569 = vshrl.u32 %v568, 7
        %v570 = vsub.s32 0, %v569
        %v571 = vrot.slane %v491, %v570
        %v572 = vlaneseq
        %v573 = vshrl.u32 %v572, 7
        %v574 = vsub.s32 0, %v573
        %v575 = vrot.slane %v495, %v574
        %v576 = vlaneseq
        %v577 = vshrl.u32 %v576, 7
        %v578 = vsub.s32 0, %v577
        %v579 = vrot.slane %v499, %v578
        %v580 = vlaneseq
        %v581 = vshrl.u32 %v580, 7
        %v582 = vsub.s32 0, %v581
        %v583 = vrot.slane %v503, %v582
        %v584 = vlaneseq
        %v585 = vshrl.u32 %v584, 7
        %v586 = vsub.s32 0, %v585
        %v587 = vrot.slane %v507, %v586
        %v588 = vlaneseq
        %v589 = vshrl.u32 %v588, 7
        %v590 = vsub.s32 0, %v589
        %v591 = vrot.slane %v511, %v590
        %v592 = vlaneseq
        %v593 = vshrl.u32 %v592, 7
        %v594 = vsub.s32 0, %v593
        %v595 = vrot.slane %v515, %v594
        %v596 = vlaneseq
        %v597 = vshrl.u32 %v596, 7
        %v598 = vsub.s32 0, %v597
        %v599 = vrot.slane %v519, %v598
        %v600 = vlaneseq
        %v601 = vshrl.u32 %v600, 7
        %v602 = vsub.s32 0, %v601
        %v603 = vrot.slane %v523, %v602
        %v604 = vlaneseq
        %v605 = vshrl.u32 %v604, 7
        %v606 = vsub.s32 0, %v605
        %v607 = vrot.slane %v527, %v606
        %v608 = vlaneseq
        %v609 = vshrl.u32 %v608, 7
        %v610 = vsub.s32 0, %v609
        %v611 = vrot.slane %v531, %v610
        %v612 = vmul.f32 %v383, %v551
        %v613 = vmul.f32 %v383, %v555
        %v614 = vmul.f32 %v383, %v559
        %v615 = vmul.f32 %v383, %v563
        %v616 = vmul.f32 %v383, %v567
        %v617 = vmul.f32 %v383, %v571
        %v618 = vmul.f32 %v383, %v575
        %v619 = vmul.f32 %v383, %v579
        %v620 = vmul.f32 %v383, %v583
        %v621 = vmul.f32 %v383, %v587
        %v622 = vmul.f32 %v383, %v591
        %v623 = vmul.f32 %v383, %v595
        %v624 = vmul.f32 %v383, %v599
        %v625 = vmul.f32 %v383, %v603
        %v626 = vmul.f32 %v383, %v607
        %v627 = vmul.f32 %v383, %v611
        %v628 = vmul.f32 %v388, %v551
        %v629 = vmul.f32 %v388, %v555
        %v630 = vmul.f32 %v388, %v559
        %v631 = vmul.f32 %v388, %v563
        %v632 = vmul.f32 %v388, %v567
        %v633 = vmul.f32 %v388, %v571
        %v634 = vmul.f32 %v388, %v575
        %v635 = vmul.f32 %v388, %v579
        %v636 = vmul.f32 %v388, %v583
        %v637 = vmul.f32 %v388, %v587
        %v638 = vmul.f32 %v388, %v591
        %v639 = vmul.f32 %v388, %v595
        %v640 = vmul.f32 %v388, %v599
        %v641 = vmul.f32 %v388, %v603
        %v642 = vmul.f32 %v388, %v607
        %v643 = vmul.f32 %v388, %v611
        %v644 = vmul.f32 %v393, %v551
        %v645 = vmul.f32 %v393, %v555
        %v646 = vmul.f32 %v393, %v559
        %v647 = vmul.f32 %v393, %v563
        %v648 = vmul.f32 %v393, %v567
        %v649 = vmul.f32 %v393, %v571
        %v650 = vmul.f32 %v393, %v575
        %v651 = vmul.f32 %v393, %v579
        %v652 = vmul.f32 %v393, %v583
        %v653 = vmul.f32 %v393, %v587
        %v654 = vmul.f32 %v393, %v591
        %v655 = vmul.f32 %v393, %v595
        %v656 = vmul.f32 %v393, %v599
        %v657 = vmul.f32 %v393, %v603
        %v658 = vmul.f32 %v393, %v607
        %v659 = vmul.f32 %v393, %v611
        %v660 = vmul.f32 %v398, %v551
        %v661 = vmul.f32 %v398, %v555
        %v662 = vmul.f32 %v398, %v559
        %v663 = vmul.f32 %v398, %v563
        %v664 = vmul.f32 %v398, %v567
        %v665 = vmul.f32 %v398, %v571
        %v666 = vmul.f32 %v398, %v575
        %v667 = vmul.f32 %v398, %v579
        %v668 = vmul.f32 %v398, %v583
        %v669 = vmul.f32 %v398, %v587
        %v670 = vmul.f32 %v398, %v591
        %v671 = vmul.f32 %v398, %v595
        %v672 = vmul.f32 %v398, %v599
        %v673 = vmul.f32 %v398, %v603
        %v674 = vmul.f32 %v398, %v607
        %v675 = vmul.f32 %v398, %v611
        %v676 = vmul.f32 %v403, %v551
        %v677 = vmul.f32 %v403, %v555
        %v678 = vmul.f32 %v403, %v559
        %v679 = vmul.f32 %v403, %v563
        %v680 = vmul.f32 %v403, %v567
        %v681 = vmul.f32 %v403, %v571
        %v682 = vmul.f32 %v403, %v575
        %v683 = vmul.f32 %v403, %v579
        %v684 = vmul.f32 %v403, %v583
        %v685 = vmul.f32 %v403, %v587
        %v686 = vmul.f32 %v403, %v591
        %v687 = vmul.f32 %v403, %v595
        %v688 = vmul.f32 %v403, %v599
        %v689 = vmul.f32 %v403, %v603
        %v690 = vmul.f32 %v403, %v607
        %v691 = vmul.f32 %v403, %v611
        %v692 = vmul.f32 %v408, %v551
        %v693 = vmul.f32 %v408, %v555
        %v694 = vmul.f32 %v408, %v559
        %v695 = vmul.f32 %v408, %v563
        %v696 = vmul.f32 %v408, %v567
        %v697 = vmul.f32 %v408, %v571
        %v698 = vmul.f32 %v408, %v575
        %v699 = vmul.f32 %v408, %v579
        %v700 = vmul.f32 %v408, %v583
        %v701 = vmul.f32 %v408, %v587
        %v702 = vmul.f32 %v408, %v591
        %v703 = vmul.f32 %v408, %v595
        %v704 = vmul.f32 %v408, %v599
        %v705 = vmul.f32 %v408, %v603
        %v706 = vmul.f32 %v408, %v607
        %v707 = vmul.f32 %v408, %v611
        %v708 = vmul.f32 %v413, %v551
        %v709 = vmul.f32 %v413, %v555
        %v710 = vmul.f32 %v413, %v559
        %v711 = vmul.f32 %v413, %v563
        %v712 = vmul.f32 %v413, %v567
        %v713 = vmul.f32 %v413, %v571
        %v714 = vmul.f32 %v413, %v575
        %v715 = vmul.f32 %v413, %v579
        %v716 = vmul.f32 %v413, %v583
        %v717 = vmul.f32 %v413, %v587
        %v718 = vmul.f32 %v413, %v591
        %v719 = vmul.f32 %v413, %v595
        %v720 = vmul.f32 %v413, %v599
        %v721 = vmul.f32 %v413, %v603
        %v722 = vmul.f32 %v413, %v607
        %v723 = vmul.f32 %v413, %v611
        %v724 = vmul.f32 %v418, %v551
        %v725 = vmul.f32 %v418, %v555
        %v726 = vmul.f32 %v418, %v559
        %v727 = vmul.f32 %v418, %v563
        %v728 = vmul.f32 %v418, %v567
        %v729 = vmul.f32 %v418, %v571
        %v730 = vmul.f32 %v418, %v575
        %v731 = vmul.f32 %v418, %v579
        %v732 = vmul.f32 %v418, %v583
        %v733 = vmul.f32 %v418, %v587
        %v734 = vmul.f32 %v418, %v591
        %v735 = vmul.f32 %v418, %v595
        %v736 = vmul.f32 %v418, %v599
        %v737 = vmul.f32 %v418, %v603
        %v738 = vmul.f32 %v418, %v607
        %v739 = vmul.f32 %v418, %v611
        %v740 = vmul.f32 %v423, %v551
        %v741 = vmul.f32 %v423, %v555
        %v742 = vmul.f32 %v423, %v559
        %v743 = vmul.f32 %v423, %v563
        %v744 = vmul.f32 %v423, %v567
        %v745 = vmul.f32 %v423, %v571
        %v746 = vmul.f32 %v423, %v575
        %v747 = vmul.f32 %v423, %v579
        %v748 = vmul.f32 %v423, %v583
        %v749 = vmul.f32 %v423, %v587
        %v750 = vmul.f32 %v423, %v591
        %v751 = vmul.f32 %v423, %v595
        %v752 = vmul.f32 %v423, %v599
        %v753 = vmul.f32 %v423, %v603
        %v754 = vmul.f32 %v423, %v607
        %v755 = vmul.f32 %v423, %v611
        %v756 = vmul.f32 %v428, %v551
        %v757 = vmul.f32 %v428, %v555
        %v758 = vmul.f32 %v428, %v559
        %v759 = vmul.f32 %v428, %v563
        %v760 = vmul.f32 %v428, %v567
        %v761 = vmul.f32 %v428, %v571
        %v762 = vmul.f32 %v428, %v575
        %v763 = vmul.f32 %v428, %v579
        %v764 = vmul.f32 %v428, %v583
        %v765 = vmul.f32 %v428, %v587
        %v766 = vmul.f32 %v428, %v591
        %v767 = vmul.f32 %v428, %v595
        %v768 = vmul.f32 %v428, %v599
        %v769 = vmul.f32 %v428, %v603
        %v770 = vmul.f32 %v428, %v607
        %v771 = vmul.f32 %v428, %v611
        %v772 = vmul.f32 %v433, %v551
        %v773 = vmul.f32 %v433, %v555
        %v774 = vmul.f32 %v433, %v559
        %v775 = vmul.f32 %v433, %v563
        %v776 = vmul.f32 %v433, %v567
        %v777 = vmul.f32 %v433, %v571
        %v778 = vmul.f32 %v433, %v575
        %v779 = vmul.f32 %v433, %v579
        %v780 = vmul.f32 %v433, %v583
        %v781 = vmul.f32 %v433, %v587
        %v782 = vmul.f32 %v433, %v591
        %v783 = vmul.f32 %v433, %v595
        %v784 = vmul.f32 %v433, %v599
        %v785 = vmul.f32 %v433, %v603
        %v786 = vmul.f32 %v433, %v607
        %v787 = vmul.f32 %v433, %v611
        %v788 = vmul.f32 %v438, %v551
        %v789 = vmul.f32 %v438, %v555
        %v790 = vmul.f32 %v438, %v559
        %v791 = vmul.f32 %v438, %v563
        %v792 = vmul.f32 %v438, %v567
        %v793 = vmul.f32 %v438, %v571
        %v794 = vmul.f32 %v438, %v575
        %v795 = vmul.f32 %v438, %v579
        %v796 = vmul.f32 %v438, %v583
        %v797 = vmul.f32 %v438, %v587
        %v798 = vmul.f32 %v438, %v591
        %v799 = vmul.f32 %v438, %v595
        %v800 = vmul.f32 %v438, %v599
        %v801 = vmul.f32 %v438, %v603
        %v802 = vmul.f32 %v438, %v607
        %v803 = vmul.f32 %v438, %v611
        %v804 = vmul.f32 %v443, %v551
        %v805 = vmul.f32 %v443, %v555
        %v806 = vmul.f32 %v443, %v559
        %v807 = vmul.f32 %v443, %v563
        %v808 = vmul.f32 %v443, %v567
        %v809 = vmul.f32 %v443, %v571
        %v810 = vmul.f32 %v443, %v575
        %v811 = vmul.f32 %v443, %v579
        %v812 = vmul.f32 %v443, %v583
        %v813 = vmul.f32 %v443, %v587
        %v814 = vmul.f32 %v443, %v591
        %v815 = vmul.f32 %v443, %v595
        %v816 = vmul.f32 %v443, %v599
        %v817 = vmul.f32 %v443, %v603
        %v818 = vmul.f32 %v443, %v607
        %v819 = vmul.f32 %v443, %v611
        %v820 = vmul.f32 %v448, %v551
        %v821 = vmul.f32 %v448, %v555
        %v822 = vmul.f32 %v448, %v559
        %v823 = vmul.f32 %v448, %v563
        %v824 = vmul.f32 %v448, %v567
        %v825 = vmul.f32 %v448, %v571
        %v826 = vmul.f32 %v448, %v575
        %v827 = vmul.f32 %v448, %v579
        %v828 = vmul.f32 %v448, %v583
        %v829 = vmul.f32 %v448, %v587
        %v830 = vmul.f32 %v448, %v591
        %v831 = vmul.f32 %v448, %v595
        %v832 = vmul.f32 %v448, %v599
        %v833 = vmul.f32 %v448, %v603
        %v834 = vmul.f32 %v448, %v607
        %v835 = vmul.f32 %v448, %v611
        %v836 = vmul.f32 %v453, %v551
        %v837 = vmul.f32 %v453, %v555
        %v838 = vmul.f32 %v453, %v559
        %v839 = vmul.f32 %v453, %v563
        %v840 = vmul.f32 %v453, %v567
        %v841 = vmul.f32 %v453, %v571
        %v842 = vmul.f32 %v453, %v575
        %v843 = vmul.f32 %v453, %v579
        %v844 = vmul.f32 %v453, %v583
        %v845 = vmul.f32 %v453, %v587
        %v846 = vmul.f32 %v453, %v591
        %v847 = vmul.f32 %v453, %v595
        %v848 = vmul.f32 %v453, %v599
        %v849 = vmul.f32 %v453, %v603
        %v850 = vmul.f32 %v453, %v607
        %v851 = vmul.f32 %v453, %v611
        %v852 = vmul.f32 %v458, %v551
        %v853 = vmul.f32 %v458, %v555
        %v854 = vmul.f32 %v458, %v559
        %v855 = vmul.f32 %v458, %v563
        %v856 = vmul.f32 %v458, %v567
        %v857 = vmul.f32 %v458, %v571
        %v858 = vmul.f32 %v458, %v575
        %v859 = vmul.f32 %v458, %v579
        %v860 = vmul.f32 %v458, %v583
        %v861 = vmul.f32 %v458, %v587
        %v862 = vmul.f32 %v458, %v591
        %v863 = vmul.f32 %v458, %v595
        %v864 = vmul.f32 %v458, %v599
        %v865 = vmul.f32 %v458, %v603
        %v866 = vmul.f32 %v458, %v607
        %v867 = vmul.f32 %v458, %v611
        %868 = vset.pattern.permute.xlu0 1
        %869 = vperm.xlu0 %868, %v356
        %v870 = vpop.permute.xlu0 %869
        %872 = vset.pattern.permute.xlu0 1
        %873 = vperm.xlu0 %872, %v357
        %v874 = vpop.permute.xlu0 %873
        %876 = vset.pattern.permute.xlu0 1
        %877 = vperm.xlu0 %876, %v358
        %v878 = vpop.permute.xlu0 %877
        %880 = vset.pattern.permute.xlu0 1
        %881 = vperm.xlu0 %880, %v359
        %v882 = vpop.permute.xlu0 %881
        %884 = vset.pattern.permute.xlu0 1
        %885 = vperm.xlu0 %884, %v360
        %v886 = vpop.permute.xlu0 %885
        %888 = vset.pattern.permute.xlu0 1
        %889 = vperm.xlu0 %888, %v361
        %v890 = vpop.permute.xlu0 %889
        %892 = vset.pattern.permute.xlu0 1
        %893 = vperm.xlu0 %892, %v362
        %v894 = vpop.permute.xlu0 %893
        %896 = vset.pattern.permute.xlu0 1
        %897 = vperm.xlu0 %896, %v363
        %v898 = vpop.permute.xlu0 %897
        %900 = vset.pattern.permute.xlu0 1
        %901 = vperm.xlu0 %900, %v364
        %v902 = vpop.permute.xlu0 %901
        %904 = vset.pattern.permute.xlu0 1
        %905 = vperm.xlu0 %904, %v365
        %v906 = vpop.permute.xlu0 %905
        %908 = vset.pattern.permute.xlu0 1
        %909 = vperm.xlu0 %908, %v366
        %v910 = vpop.permute.xlu0 %909
        %912 = vset.pattern.permute.xlu0 1
        %913 = vperm.xlu0 %912, %v367
        %v914 = vpop.permute.xlu0 %913
        %916 = vset.pattern.permute.xlu0 1
        %917 = vperm.xlu0 %916, %v368
        %v918 = vpop.permute.xlu0 %917
        %920 = vset.pattern.permute.xlu0 1
        %921 = vperm.xlu0 %920, %v369
        %v922 = vpop.permute.xlu0 %921
        %924 = vset.pattern.permute.xlu0 1
        %925 = vperm.xlu0 %924, %v370
        %v926 = vpop.permute.xlu0 %925
        %928 = vset.pattern.permute.xlu0 1
        %929 = vperm.xlu0 %928, %v371
        %v930 = vpop.permute.xlu0 %929
        %v932 = vlaneseq
        %v933 = vshrl.u32 %v932, 7
        %v934 = vsub.s32 1, %v933
        %v935 = vrot.slane %v372, %v934
        %v936 = vlaneseq
        %v937 = vshrl.u32 %v936, 7
        %v938 = vsub.s32 5, %v937
        %v939 = vrot.slane %v372, %v938
        %v940 = vlaneseq
        %v941 = vshrl.u32 %v940, 7
        %v942 = vsub.s32 1, %v941
        %v943 = vrot.slane %v373, %v942
        %v944 = vlaneseq
        %v945 = vshrl.u32 %v944, 7
        %v946 = vsub.s32 5, %v945
        %v947 = vrot.slane %v373, %v946
        %v948 = vlaneseq
        %v949 = vshrl.u32 %v948, 7
        %v950 = vsub.s32 1, %v949
        %v951 = vrot.slane %v374, %v950
        %v952 = vlaneseq
        %v953 = vshrl.u32 %v952, 7
        %v954 = vsub.s32 5, %v953
        %v955 = vrot.slane %v374, %v954
        %v956 = vlaneseq
        %v957 = vshrl.u32 %v956, 7
        %v958 = vsub.s32 1, %v957
        %v959 = vrot.slane %v375, %v958
        %v960 = vlaneseq
        %v961 = vshrl.u32 %v960, 7
        %v962 = vsub.s32 5, %v961
        %v963 = vrot.slane %v375, %v962
        %v964 = vlaneseq
        %v965 = vshrl.u32 %v964, 7
        %v966 = vsub.s32 1, %v965
        %v967 = vrot.slane %v376, %v966
        %v968 = vlaneseq
        %v969 = vshrl.u32 %v968, 7
        %v970 = vsub.s32 5, %v969
        %v971 = vrot.slane %v376, %v970
        %v972 = vlaneseq
        %v973 = vshrl.u32 %v972, 7
        %v974 = vsub.s32 1, %v973
        %v975 = vrot.slane %v377, %v974
        %v976 = vlaneseq
        %v977 = vshrl.u32 %v976, 7
        %v978 = vsub.s32 5, %v977
        %v979 = vrot.slane %v377, %v978
        %v980 = vlaneseq
        %v981 = vshrl.u32 %v980, 7
        %v982 = vsub.s32 1, %v981
        %v983 = vrot.slane %v378, %v982
        %v984 = vlaneseq
        %v985 = vshrl.u32 %v984, 7
        %v986 = vsub.s32 5, %v985
        %v987 = vrot.slane %v378, %v986
        %v988 = vlaneseq
        %v989 = vshrl.u32 %v988, 7
        %v990 = vsub.s32 1, %v989
        %v991 = vrot.slane %v379, %v990
        %v992 = vlaneseq
        %v993 = vshrl.u32 %v992, 7
        %v994 = vsub.s32 5, %v993
        %v995 = vrot.slane %v379, %v994
        %v1012 = vlaneseq
        %v1013 = vshrl.u32 %v1012, 7
        %v1014 = vsub.s32 1, %v1013
        %v1015 = vrot.slane %v935, %v1014
        %v1016 = vlaneseq
        %v1017 = vshrl.u32 %v1016, 7
        %v1018 = vsub.s32 1, %v1017
        %v1019 = vrot.slane %v939, %v1018
        %v1020 = vlaneseq
        %v1021 = vshrl.u32 %v1020, 7
        %v1022 = vsub.s32 1, %v1021
        %v1023 = vrot.slane %v943, %v1022
        %v1024 = vlaneseq
        %v1025 = vshrl.u32 %v1024, 7
        %v1026 = vsub.s32 1, %v1025
        %v1027 = vrot.slane %v947, %v1026
        %v1028 = vlaneseq
        %v1029 = vshrl.u32 %v1028, 7
        %v1030 = vsub.s32 1, %v1029
        %v1031 = vrot.slane %v951, %v1030
        %v1032 = vlaneseq
        %v1033 = vshrl.u32 %v1032, 7
        %v1034 = vsub.s32 1, %v1033
        %v1035 = vrot.slane %v955, %v1034
        %v1036 = vlaneseq
        %v1037 = vshrl.u32 %v1036, 7
        %v1038 = vsub.s32 1, %v1037
        %v1039 = vrot.slane %v959, %v1038
        %v1040 = vlaneseq
        %v1041 = vshrl.u32 %v1040, 7
        %v1042 = vsub.s32 1, %v1041
        %v1043 = vrot.slane %v963, %v1042
        %v1044 = vlaneseq
        %v1045 = vshrl.u32 %v1044, 7
        %v1046 = vsub.s32 1, %v1045
        %v1047 = vrot.slane %v967, %v1046
        %v1048 = vlaneseq
        %v1049 = vshrl.u32 %v1048, 7
        %v1050 = vsub.s32 1, %v1049
        %v1051 = vrot.slane %v971, %v1050
        %v1052 = vlaneseq
        %v1053 = vshrl.u32 %v1052, 7
        %v1054 = vsub.s32 1, %v1053
        %v1055 = vrot.slane %v975, %v1054
        %v1056 = vlaneseq
        %v1057 = vshrl.u32 %v1056, 7
        %v1058 = vsub.s32 1, %v1057
        %v1059 = vrot.slane %v979, %v1058
        %v1060 = vlaneseq
        %v1061 = vshrl.u32 %v1060, 7
        %v1062 = vsub.s32 1, %v1061
        %v1063 = vrot.slane %v983, %v1062
        %v1064 = vlaneseq
        %v1065 = vshrl.u32 %v1064, 7
        %v1066 = vsub.s32 1, %v1065
        %v1067 = vrot.slane %v987, %v1066
        %v1068 = vlaneseq
        %v1069 = vshrl.u32 %v1068, 7
        %v1070 = vsub.s32 1, %v1069
        %v1071 = vrot.slane %v991, %v1070
        %v1072 = vlaneseq
        %v1073 = vshrl.u32 %v1072, 7
        %v1074 = vsub.s32 1, %v1073
        %v1075 = vrot.slane %v995, %v1074
        %v1076 = vmul.f32 %v870, %v1015
        %v1077 = vmul.f32 %v870, %v1019
        %v1078 = vmul.f32 %v870, %v1023
        %v1079 = vmul.f32 %v870, %v1027
        %v1080 = vmul.f32 %v870, %v1031
        %v1081 = vmul.f32 %v870, %v1035
        %v1082 = vmul.f32 %v870, %v1039
        %v1083 = vmul.f32 %v870, %v1043
        %v1084 = vmul.f32 %v870, %v1047
        %v1085 = vmul.f32 %v870, %v1051
        %v1086 = vmul.f32 %v870, %v1055
        %v1087 = vmul.f32 %v870, %v1059
        %v1088 = vmul.f32 %v870, %v1063
        %v1089 = vmul.f32 %v870, %v1067
        %v1090 = vmul.f32 %v870, %v1071
        %v1091 = vmul.f32 %v870, %v1075
        %v1092 = vmul.f32 %v874, %v1015
        %v1093 = vmul.f32 %v874, %v1019
        %v1094 = vmul.f32 %v874, %v1023
        %v1095 = vmul.f32 %v874, %v1027
        %v1096 = vmul.f32 %v874, %v1031
        %v1097 = vmul.f32 %v874, %v1035
        %v1098 = vmul.f32 %v874, %v1039
        %v1099 = vmul.f32 %v874, %v1043
        %v1100 = vmul.f32 %v874, %v1047
        %v1101 = vmul.f32 %v874, %v1051
        %v1102 = vmul.f32 %v874, %v1055
        %v1103 = vmul.f32 %v874, %v1059
        %v1104 = vmul.f32 %v874, %v1063
        %v1105 = vmul.f32 %v874, %v1067
        %v1106 = vmul.f32 %v874, %v1071
        %v1107 = vmul.f32 %v874, %v1075
        %v1108 = vmul.f32 %v878, %v1015
        %v1109 = vmul.f32 %v878, %v1019
        %v1110 = vmul.f32 %v878, %v1023
        %v1111 = vmul.f32 %v878, %v1027
        %v1112 = vmul.f32 %v878, %v1031
        %v1113 = vmul.f32 %v878, %v1035
        %v1114 = vmul.f32 %v878, %v1039
        %v1115 = vmul.f32 %v878, %v1043
        %v1116 = vmul.f32 %v878, %v1047
        %v1117 = vmul.f32 %v878, %v1051
        %v1118 = vmul.f32 %v878, %v1055
        %v1119 = vmul.f32 %v878, %v1059
        %v1120 = vmul.f32 %v878, %v1063
        %v1121 = vmul.f32 %v878, %v1067
        %v1122 = vmul.f32 %v878, %v1071
        %v1123 = vmul.f32 %v878, %v1075
        %v1124 = vmul.f32 %v882, %v1015
        %v1125 = vmul.f32 %v882, %v1019
        %v1126 = vmul.f32 %v882, %v1023
        %v1127 = vmul.f32 %v882, %v1027
        %v1128 = vmul.f32 %v882, %v1031
        %v1129 = vmul.f32 %v882, %v1035
        %v1130 = vmul.f32 %v882, %v1039
        %v1131 = vmul.f32 %v882, %v1043
        %v1132 = vmul.f32 %v882, %v1047
        %v1133 = vmul.f32 %v882, %v1051
        %v1134 = vmul.f32 %v882, %v1055
        %v1135 = vmul.f32 %v882, %v1059
        %v1136 = vmul.f32 %v882, %v1063
        %v1137 = vmul.f32 %v882, %v1067
        %v1138 = vmul.f32 %v882, %v1071
        %v1139 = vmul.f32 %v882, %v1075
        %v1140 = vmul.f32 %v886, %v1015
        %v1141 = vmul.f32 %v886, %v1019
        %v1142 = vmul.f32 %v886, %v1023
        %v1143 = vmul.f32 %v886, %v1027
        %v1144 = vmul.f32 %v886, %v1031
        %v1145 = vmul.f32 %v886, %v1035
        %v1146 = vmul.f32 %v886, %v1039
        %v1147 = vmul.f32 %v886, %v1043
        %v1148 = vmul.f32 %v886, %v1047
        %v1149 = vmul.f32 %v886, %v1051
        %v1150 = vmul.f32 %v886, %v1055
        %v1151 = vmul.f32 %v886, %v1059
        %v1152 = vmul.f32 %v886, %v1063
        %v1153 = vmul.f32 %v886, %v1067
        %v1154 = vmul.f32 %v886, %v1071
        %v1155 = vmul.f32 %v886, %v1075
        %v1156 = vmul.f32 %v890, %v1015
        %v1157 = vmul.f32 %v890, %v1019
        %v1158 = vmul.f32 %v890, %v1023
        %v1159 = vmul.f32 %v890, %v1027
        %v1160 = vmul.f32 %v890, %v1031
        %v1161 = vmul.f32 %v890, %v1035
        %v1162 = vmul.f32 %v890, %v1039
        %v1163 = vmul.f32 %v890, %v1043
        %v1164 = vmul.f32 %v890, %v1047
        %v1165 = vmul.f32 %v890, %v1051
        %v1166 = vmul.f32 %v890, %v1055
        %v1167 = vmul.f32 %v890, %v1059
        %v1168 = vmul.f32 %v890, %v1063
        %v1169 = vmul.f32 %v890, %v1067
        %v1170 = vmul.f32 %v890, %v1071
        %v1171 = vmul.f32 %v890, %v1075
        %v1172 = vmul.f32 %v894, %v1015
        %v1173 = vmul.f32 %v894, %v1019
        %v1174 = vmul.f32 %v894, %v1023
        %v1175 = vmul.f32 %v894, %v1027
        %v1176 = vmul.f32 %v894, %v1031
        %v1177 = vmul.f32 %v894, %v1035
        %v1178 = vmul.f32 %v894, %v1039
        %v1179 = vmul.f32 %v894, %v1043
        %v1180 = vmul.f32 %v894, %v1047
        %v1181 = vmul.f32 %v894, %v1051
        %v1182 = vmul.f32 %v894, %v1055
        %v1183 = vmul.f32 %v894, %v1059
        %v1184 = vmul.f32 %v894, %v1063
        %v1185 = vmul.f32 %v894, %v1067
        %v1186 = vmul.f32 %v894, %v1071
        %v1187 = vmul.f32 %v894, %v1075
        %v1188 = vmul.f32 %v898, %v1015
        %v1189 = vmul.f32 %v898, %v1019
        %v1190 = vmul.f32 %v898, %v1023
        %v1191 = vmul.f32 %v898, %v1027
        %v1192 = vmul.f32 %v898, %v1031
        %v1193 = vmul.f32 %v898, %v1035
        %v1194 = vmul.f32 %v898, %v1039
        %v1195 = vmul.f32 %v898, %v1043
        %v1196 = vmul.f32 %v898, %v1047
        %v1197 = vmul.f32 %v898, %v1051
        %v1198 = vmul.f32 %v898, %v1055
        %v1199 = vmul.f32 %v898, %v1059
        %v1200 = vmul.f32 %v898, %v1063
        %v1201 = vmul.f32 %v898, %v1067
        %v1202 = vmul.f32 %v898, %v1071
        %v1203 = vmul.f32 %v898, %v1075
        %v1204 = vmul.f32 %v902, %v1015
        %v1205 = vmul.f32 %v902, %v1019
        %v1206 = vmul.f32 %v902, %v1023
        %v1207 = vmul.f32 %v902, %v1027
        %v1208 = vmul.f32 %v902, %v1031
        %v1209 = vmul.f32 %v902, %v1035
        %v1210 = vmul.f32 %v902, %v1039
        %v1211 = vmul.f32 %v902, %v1043
        %v1212 = vmul.f32 %v902, %v1047
        %v1213 = vmul.f32 %v902, %v1051
        %v1214 = vmul.f32 %v902, %v1055
        %v1215 = vmul.f32 %v902, %v1059
        %v1216 = vmul.f32 %v902, %v1063
        %v1217 = vmul.f32 %v902, %v1067
        %v1218 = vmul.f32 %v902, %v1071
        %v1219 = vmul.f32 %v902, %v1075
        %v1220 = vmul.f32 %v906, %v1015
        %v1221 = vmul.f32 %v906, %v1019
        %v1222 = vmul.f32 %v906, %v1023
        %v1223 = vmul.f32 %v906, %v1027
        %v1224 = vmul.f32 %v906, %v1031
        %v1225 = vmul.f32 %v906, %v1035
        %v1226 = vmul.f32 %v906, %v1039
        %v1227 = vmul.f32 %v906, %v1043
        %v1228 = vmul.f32 %v906, %v1047
        %v1229 = vmul.f32 %v906, %v1051
        %v1230 = vmul.f32 %v906, %v1055
        %v1231 = vmul.f32 %v906, %v1059
        %v1232 = vmul.f32 %v906, %v1063
        %v1233 = vmul.f32 %v906, %v1067
        %v1234 = vmul.f32 %v906, %v1071
        %v1235 = vmul.f32 %v906, %v1075
        %v1236 = vmul.f32 %v910, %v1015
        %v1237 = vmul.f32 %v910, %v1019
        %v1238 = vmul.f32 %v910, %v1023
        %v1239 = vmul.f32 %v910, %v1027
        %v1240 = vmul.f32 %v910, %v1031
        %v1241 = vmul.f32 %v910, %v1035
        %v1242 = vmul.f32 %v910, %v1039
        %v1243 = vmul.f32 %v910, %v1043
        %v1244 = vmul.f32 %v910, %v1047
        %v1245 = vmul.f32 %v910, %v1051
        %v1246 = vmul.f32 %v910, %v1055
        %v1247 = vmul.f32 %v910, %v1059
        %v1248 = vmul.f32 %v910, %v1063
        %v1249 = vmul.f32 %v910, %v1067
        %v1250 = vmul.f32 %v910, %v1071
        %v1251 = vmul.f32 %v910, %v1075
        %v1252 = vmul.f32 %v914, %v1015
        %v1253 = vmul.f32 %v914, %v1019
        %v1254 = vmul.f32 %v914, %v1023
        %v1255 = vmul.f32 %v914, %v1027
        %v1256 = vmul.f32 %v914, %v1031
        %v1257 = vmul.f32 %v914, %v1035
        %v1258 = vmul.f32 %v914, %v1039
        %v1259 = vmul.f32 %v914, %v1043
        %v1260 = vmul.f32 %v914, %v1047
        %v1261 = vmul.f32 %v914, %v1051
        %v1262 = vmul.f32 %v914, %v1055
        %v1263 = vmul.f32 %v914, %v1059
        %v1264 = vmul.f32 %v914, %v1063
        %v1265 = vmul.f32 %v914, %v1067
        %v1266 = vmul.f32 %v914, %v1071
        %v1267 = vmul.f32 %v914, %v1075
        %v1268 = vmul.f32 %v918, %v1015
        %v1269 = vmul.f32 %v918, %v1019
        %v1270 = vmul.f32 %v918, %v1023
        %v1271 = vmul.f32 %v918, %v1027
        %v1272 = vmul.f32 %v918, %v1031
        %v1273 = vmul.f32 %v918, %v1035
        %v1274 = vmul.f32 %v918, %v1039
        %v1275 = vmul.f32 %v918, %v1043
        %v1276 = vmul.f32 %v918, %v1047
        %v1277 = vmul.f32 %v918, %v1051
        %v1278 = vmul.f32 %v918, %v1055
        %v1279 = vmul.f32 %v918, %v1059
        %v1280 = vmul.f32 %v918, %v1063
        %v1281 = vmul.f32 %v918, %v1067
        %v1282 = vmul.f32 %v918, %v1071
        %v1283 = vmul.f32 %v918, %v1075
        %v1284 = vmul.f32 %v922, %v1015
        %v1285 = vmul.f32 %v922, %v1019
        %v1286 = vmul.f32 %v922, %v1023
        %v1287 = vmul.f32 %v922, %v1027
        %v1288 = vmul.f32 %v922, %v1031
        %v1289 = vmul.f32 %v922, %v1035
        %v1290 = vmul.f32 %v922, %v1039
        %v1291 = vmul.f32 %v922, %v1043
        %v1292 = vmul.f32 %v922, %v1047
        %v1293 = vmul.f32 %v922, %v1051
        %v1294 = vmul.f32 %v922, %v1055
        %v1295 = vmul.f32 %v922, %v1059
        %v1296 = vmul.f32 %v922, %v1063
        %v1297 = vmul.f32 %v922, %v1067
        %v1298 = vmul.f32 %v922, %v1071
        %v1299 = vmul.f32 %v922, %v1075
        %v1300 = vmul.f32 %v926, %v1015
        %v1301 = vmul.f32 %v926, %v1019
        %v1302 = vmul.f32 %v926, %v1023
        %v1303 = vmul.f32 %v926, %v1027
        %v1304 = vmul.f32 %v926, %v1031
        %v1305 = vmul.f32 %v926, %v1035
        %v1306 = vmul.f32 %v926, %v1039
        %v1307 = vmul.f32 %v926, %v1043
        %v1308 = vmul.f32 %v926, %v1047
        %v1309 = vmul.f32 %v926, %v1051
        %v1310 = vmul.f32 %v926, %v1055
        %v1311 = vmul.f32 %v926, %v1059
        %v1312 = vmul.f32 %v926, %v1063
        %v1313 = vmul.f32 %v926, %v1067
        %v1314 = vmul.f32 %v926, %v1071
        %v1315 = vmul.f32 %v926, %v1075
        %v1316 = vmul.f32 %v930, %v1015
        %v1317 = vmul.f32 %v930, %v1019
        %v1318 = vmul.f32 %v930, %v1023
        %v1319 = vmul.f32 %v930, %v1027
        %v1320 = vmul.f32 %v930, %v1031
        %v1321 = vmul.f32 %v930, %v1035
        %v1322 = vmul.f32 %v930, %v1039
        %v1323 = vmul.f32 %v930, %v1043
        %v1324 = vmul.f32 %v930, %v1047
        %v1325 = vmul.f32 %v930, %v1051
        %v1326 = vmul.f32 %v930, %v1055
        %v1327 = vmul.f32 %v930, %v1059
        %v1328 = vmul.f32 %v930, %v1063
        %v1329 = vmul.f32 %v930, %v1067
        %v1330 = vmul.f32 %v930, %v1071
        %v1331 = vmul.f32 %v930, %v1075
        %v1332 = vadd.f32 %v612, %v1076
        %v1333 = vadd.f32 %v613, %v1077
        %v1334 = vadd.f32 %v614, %v1078
        %v1335 = vadd.f32 %v615, %v1079
        %v1336 = vadd.f32 %v616, %v1080
        %v1337 = vadd.f32 %v617, %v1081
        %v1338 = vadd.f32 %v618, %v1082
        %v1339 = vadd.f32 %v619, %v1083
        %v1340 = vadd.f32 %v620, %v1084
        %v1341 = vadd.f32 %v621, %v1085
        %v1342 = vadd.f32 %v622, %v1086
        %v1343 = vadd.f32 %v623, %v1087
        %v1344 = vadd.f32 %v624, %v1088
        %v1345 = vadd.f32 %v625, %v1089
        %v1346 = vadd.f32 %v626, %v1090
        %v1347 = vadd.f32 %v627, %v1091
        %v1348 = vadd.f32 %v628, %v1092
        %v1349 = vadd.f32 %v629, %v1093
        %v1350 = vadd.f32 %v630, %v1094
        %v1351 = vadd.f32 %v631, %v1095
        %v1352 = vadd.f32 %v632, %v1096
        %v1353 = vadd.f32 %v633, %v1097
        %v1354 = vadd.f32 %v634, %v1098
        %v1355 = vadd.f32 %v635, %v1099
        %v1356 = vadd.f32 %v636, %v1100
        %v1357 = vadd.f32 %v637, %v1101
        %v1358 = vadd.f32 %v638, %v1102
        %v1359 = vadd.f32 %v639, %v1103
        %v1360 = vadd.f32 %v640, %v1104
        %v1361 = vadd.f32 %v641, %v1105
        %v1362 = vadd.f32 %v642, %v1106
        %v1363 = vadd.f32 %v643, %v1107
        %v1364 = vadd.f32 %v644, %v1108
        %v1365 = vadd.f32 %v645, %v1109
        %v1366 = vadd.f32 %v646, %v1110
        %v1367 = vadd.f32 %v647, %v1111
        %v1368 = vadd.f32 %v648, %v1112
        %v1369 = vadd.f32 %v649, %v1113
        %v1370 = vadd.f32 %v650, %v1114
        %v1371 = vadd.f32 %v651, %v1115
        %v1372 = vadd.f32 %v652, %v1116
        %v1373 = vadd.f32 %v653, %v1117
        %v1374 = vadd.f32 %v654, %v1118
        %v1375 = vadd.f32 %v655, %v1119
        %v1376 = vadd.f32 %v656, %v1120
        %v1377 = vadd.f32 %v657, %v1121
        %v1378 = vadd.f32 %v658, %v1122
        %v1379 = vadd.f32 %v659, %v1123
        %v1380 = vadd.f32 %v660, %v1124
        %v1381 = vadd.f32 %v661, %v1125
        %v1382 = vadd.f32 %v662, %v1126
        %v1383 = vadd.f32 %v663, %v1127
        %v1384 = vadd.f32 %v664, %v1128
        %v1385 = vadd.f32 %v665, %v1129
        %v1386 = vadd.f32 %v666, %v1130
        %v1387 = vadd.f32 %v667, %v1131
        %v1388 = vadd.f32 %v668, %v1132
        %v1389 = vadd.f32 %v669, %v1133
        %v1390 = vadd.f32 %v670, %v1134
        %v1391 = vadd.f32 %v671, %v1135
        %v1392 = vadd.f32 %v672, %v1136
        %v1393 = vadd.f32 %v673, %v1137
        %v1394 = vadd.f32 %v674, %v1138
        %v1395 = vadd.f32 %v675, %v1139
        %v1396 = vadd.f32 %v676, %v1140
        %v1397 = vadd.f32 %v677, %v1141
        %v1398 = vadd.f32 %v678, %v1142
        %v1399 = vadd.f32 %v679, %v1143
        %v1400 = vadd.f32 %v680, %v1144
        %v1401 = vadd.f32 %v681, %v1145
        %v1402 = vadd.f32 %v682, %v1146
        %v1403 = vadd.f32 %v683, %v1147
        %v1404 = vadd.f32 %v684, %v1148
        %v1405 = vadd.f32 %v685, %v1149
        %v1406 = vadd.f32 %v686, %v1150
        %v1407 = vadd.f32 %v687, %v1151
        %v1408 = vadd.f32 %v688, %v1152
        %v1409 = vadd.f32 %v689, %v1153
        %v1410 = vadd.f32 %v690, %v1154
        %v1411 = vadd.f32 %v691, %v1155
        %v1412 = vadd.f32 %v692, %v1156
        %v1413 = vadd.f32 %v693, %v1157
        %v1414 = vadd.f32 %v694, %v1158
        %v1415 = vadd.f32 %v695, %v1159
        %v1416 = vadd.f32 %v696, %v1160
        %v1417 = vadd.f32 %v697, %v1161
        %v1418 = vadd.f32 %v698, %v1162
        %v1419 = vadd.f32 %v699, %v1163
        %v1420 = vadd.f32 %v700, %v1164
        %v1421 = vadd.f32 %v701, %v1165
        %v1422 = vadd.f32 %v702, %v1166
        %v1423 = vadd.f32 %v703, %v1167
        %v1424 = vadd.f32 %v704, %v1168
        %v1425 = vadd.f32 %v705, %v1169
        %v1426 = vadd.f32 %v706, %v1170
        %v1427 = vadd.f32 %v707, %v1171
        %v1428 = vadd.f32 %v708, %v1172
        %v1429 = vadd.f32 %v709, %v1173
        %v1430 = vadd.f32 %v710, %v1174
        %v1431 = vadd.f32 %v711, %v1175
        %v1432 = vadd.f32 %v712, %v1176
        %v1433 = vadd.f32 %v713, %v1177
        %v1434 = vadd.f32 %v714, %v1178
        %v1435 = vadd.f32 %v715, %v1179
        %v1436 = vadd.f32 %v716, %v1180
        %v1437 = vadd.f32 %v717, %v1181
        %v1438 = vadd.f32 %v718, %v1182
        %v1439 = vadd.f32 %v719, %v1183
        %v1440 = vadd.f32 %v720, %v1184
        %v1441 = vadd.f32 %v721, %v1185
        %v1442 = vadd.f32 %v722, %v1186
        %v1443 = vadd.f32 %v723, %v1187
        %v1444 = vadd.f32 %v724, %v1188
        %v1445 = vadd.f32 %v725, %v1189
        %v1446 = vadd.f32 %v726, %v1190
        %v1447 = vadd.f32 %v727, %v1191
        %v1448 = vadd.f32 %v728, %v1192
        %v1449 = vadd.f32 %v729, %v1193
        %v1450 = vadd.f32 %v730, %v1194
        %v1451 = vadd.f32 %v731, %v1195
        %v1452 = vadd.f32 %v732, %v1196
        %v1453 = vadd.f32 %v733, %v1197
        %v1454 = vadd.f32 %v734, %v1198
        %v1455 = vadd.f32 %v735, %v1199
        %v1456 = vadd.f32 %v736, %v1200
        %v1457 = vadd.f32 %v737, %v1201
        %v1458 = vadd.f32 %v738, %v1202
        %v1459 = vadd.f32 %v739, %v1203
        %v1460 = vadd.f32 %v740, %v1204
        %v1461 = vadd.f32 %v741, %v1205
        %v1462 = vadd.f32 %v742, %v1206
        %v1463 = vadd.f32 %v743, %v1207
        %v1464 = vadd.f32 %v744, %v1208
        %v1465 = vadd.f32 %v745, %v1209
        %v1466 = vadd.f32 %v746, %v1210
        %v1467 = vadd.f32 %v747, %v1211
        %v1468 = vadd.f32 %v748, %v1212
        %v1469 = vadd.f32 %v749, %v1213
        %v1470 = vadd.f32 %v750, %v1214
        %v1471 = vadd.f32 %v751, %v1215
        %v1472 = vadd.f32 %v752, %v1216
        %v1473 = vadd.f32 %v753, %v1217
        %v1474 = vadd.f32 %v754, %v1218
        %v1475 = vadd.f32 %v755, %v1219
        %v1476 = vadd.f32 %v756, %v1220
        %v1477 = vadd.f32 %v757, %v1221
        %v1478 = vadd.f32 %v758, %v1222
        %v1479 = vadd.f32 %v759, %v1223
        %v1480 = vadd.f32 %v760, %v1224
        %v1481 = vadd.f32 %v761, %v1225
        %v1482 = vadd.f32 %v762, %v1226
        %v1483 = vadd.f32 %v763, %v1227
        %v1484 = vadd.f32 %v764, %v1228
        %v1485 = vadd.f32 %v765, %v1229
        %v1486 = vadd.f32 %v766, %v1230
        %v1487 = vadd.f32 %v767, %v1231
        %v1488 = vadd.f32 %v768, %v1232
        %v1489 = vadd.f32 %v769, %v1233
        %v1490 = vadd.f32 %v770, %v1234
        %v1491 = vadd.f32 %v771, %v1235
        %v1492 = vadd.f32 %v772, %v1236
        %v1493 = vadd.f32 %v773, %v1237
        %v1494 = vadd.f32 %v774, %v1238
        %v1495 = vadd.f32 %v775, %v1239
        %v1496 = vadd.f32 %v776, %v1240
        %v1497 = vadd.f32 %v777, %v1241
        %v1498 = vadd.f32 %v778, %v1242
        %v1499 = vadd.f32 %v779, %v1243
        %v1500 = vadd.f32 %v780, %v1244
        %v1501 = vadd.f32 %v781, %v1245
        %v1502 = vadd.f32 %v782, %v1246
        %v1503 = vadd.f32 %v783, %v1247
        %v1504 = vadd.f32 %v784, %v1248
        %v1505 = vadd.f32 %v785, %v1249
        %v1506 = vadd.f32 %v786, %v1250
        %v1507 = vadd.f32 %v787, %v1251
        %v1508 = vadd.f32 %v788, %v1252
        %v1509 = vadd.f32 %v789, %v1253
        %v1510 = vadd.f32 %v790, %v1254
        %v1511 = vadd.f32 %v791, %v1255
        %v1512 = vadd.f32 %v792, %v1256
        %v1513 = vadd.f32 %v793, %v1257
        %v1514 = vadd.f32 %v794, %v1258
        %v1515 = vadd.f32 %v795, %v1259
        %v1516 = vadd.f32 %v796, %v1260
        %v1517 = vadd.f32 %v797, %v1261
        %v1518 = vadd.f32 %v798, %v1262
        %v1519 = vadd.f32 %v799, %v1263
        %v1520 = vadd.f32 %v800, %v1264
        %v1521 = vadd.f32 %v801, %v1265
        %v1522 = vadd.f32 %v802, %v1266
        %v1523 = vadd.f32 %v803, %v1267
        %v1524 = vadd.f32 %v804, %v1268
        %v1525 = vadd.f32 %v805, %v1269
        %v1526 = vadd.f32 %v806, %v1270
        %v1527 = vadd.f32 %v807, %v1271
        %v1528 = vadd.f32 %v808, %v1272
        %v1529 = vadd.f32 %v809, %v1273
        %v1530 = vadd.f32 %v810, %v1274
        %v1531 = vadd.f32 %v811, %v1275
        %v1532 = vadd.f32 %v812, %v1276
        %v1533 = vadd.f32 %v813, %v1277
        %v1534 = vadd.f32 %v814, %v1278
        %v1535 = vadd.f32 %v815, %v1279
        %v1536 = vadd.f32 %v816, %v1280
        %v1537 = vadd.f32 %v817, %v1281
        %v1538 = vadd.f32 %v818, %v1282
        %v1539 = vadd.f32 %v819, %v1283
        %v1540 = vadd.f32 %v820, %v1284
        %v1541 = vadd.f32 %v821, %v1285
        %v1542 = vadd.f32 %v822, %v1286
        %v1543 = vadd.f32 %v823, %v1287
        %v1544 = vadd.f32 %v824, %v1288
        %v1545 = vadd.f32 %v825, %v1289
        %v1546 = vadd.f32 %v826, %v1290
        %v1547 = vadd.f32 %v827, %v1291
        %v1548 = vadd.f32 %v828, %v1292
        %v1549 = vadd.f32 %v829, %v1293
        %v1550 = vadd.f32 %v830, %v1294
        %v1551 = vadd.f32 %v831, %v1295
        %v1552 = vadd.f32 %v832, %v1296
        %v1553 = vadd.f32 %v833, %v1297
        %v1554 = vadd.f32 %v834, %v1298
        %v1555 = vadd.f32 %v835, %v1299
        %v1556 = vadd.f32 %v836, %v1300
        %v1557 = vadd.f32 %v837, %v1301
        %v1558 = vadd.f32 %v838, %v1302
        %v1559 = vadd.f32 %v839, %v1303
        %v1560 = vadd.f32 %v840, %v1304
        %v1561 = vadd.f32 %v841, %v1305
        %v1562 = vadd.f32 %v842, %v1306
        %v1563 = vadd.f32 %v843, %v1307
        %v1564 = vadd.f32 %v844, %v1308
        %v1565 = vadd.f32 %v845, %v1309
        %v1566 = vadd.f32 %v846, %v1310
        %v1567 = vadd.f32 %v847, %v1311
        %v1568 = vadd.f32 %v848, %v1312
        %v1569 = vadd.f32 %v849, %v1313
        %v1570 = vadd.f32 %v850, %v1314
        %v1571 = vadd.f32 %v851, %v1315
        %v1572 = vadd.f32 %v852, %v1316
        %v1573 = vadd.f32 %v853, %v1317
        %v1574 = vadd.f32 %v854, %v1318
        %v1575 = vadd.f32 %v855, %v1319
        %v1576 = vadd.f32 %v856, %v1320
        %v1577 = vadd.f32 %v857, %v1321
        %v1578 = vadd.f32 %v858, %v1322
        %v1579 = vadd.f32 %v859, %v1323
        %v1580 = vadd.f32 %v860, %v1324
        %v1581 = vadd.f32 %v861, %v1325
        %v1582 = vadd.f32 %v862, %v1326
        %v1583 = vadd.f32 %v863, %v1327
        %v1584 = vadd.f32 %v864, %v1328
        %v1585 = vadd.f32 %v865, %v1329
        %v1586 = vadd.f32 %v866, %v1330
        %v1587 = vadd.f32 %v867, %v1331
        %1588 = vset.pattern.permute.xlu0 2
        %1589 = vperm.xlu0 %1588, %v356
        %v1590 = vpop.permute.xlu0 %1589
        %1592 = vset.pattern.permute.xlu0 2
        %1593 = vperm.xlu0 %1592, %v357
        %v1594 = vpop.permute.xlu0 %1593
        %1596 = vset.pattern.permute.xlu0 2
        %1597 = vperm.xlu0 %1596, %v358
        %v1598 = vpop.permute.xlu0 %1597
        %1600 = vset.pattern.permute.xlu0 2
        %1601 = vperm.xlu0 %1600, %v359
        %v1602 = vpop.permute.xlu0 %1601
        %1604 = vset.pattern.permute.xlu0 2
        %1605 = vperm.xlu0 %1604, %v360
        %v1606 = vpop.permute.xlu0 %1605
        %1608 = vset.pattern.permute.xlu0 2
        %1609 = vperm.xlu0 %1608, %v361
        %v1610 = vpop.permute.xlu0 %1609
        %1612 = vset.pattern.permute.xlu0 2
        %1613 = vperm.xlu0 %1612, %v362
        %v1614 = vpop.permute.xlu0 %1613
        %1616 = vset.pattern.permute.xlu0 2
        %1617 = vperm.xlu0 %1616, %v363
        %v1618 = vpop.permute.xlu0 %1617
        %1620 = vset.pattern.permute.xlu0 2
        %1621 = vperm.xlu0 %1620, %v364
        %v1622 = vpop.permute.xlu0 %1621
        %1624 = vset.pattern.permute.xlu0 2
        %1625 = vperm.xlu0 %1624, %v365
        %v1626 = vpop.permute.xlu0 %1625
        %1628 = vset.pattern.permute.xlu0 2
        %1629 = vperm.xlu0 %1628, %v366
        %v1630 = vpop.permute.xlu0 %1629
        %1632 = vset.pattern.permute.xlu0 2
        %1633 = vperm.xlu0 %1632, %v367
        %v1634 = vpop.permute.xlu0 %1633
        %1636 = vset.pattern.permute.xlu0 2
        %1637 = vperm.xlu0 %1636, %v368
        %v1638 = vpop.permute.xlu0 %1637
        %1640 = vset.pattern.permute.xlu0 2
        %1641 = vperm.xlu0 %1640, %v369
        %v1642 = vpop.permute.xlu0 %1641
        %1644 = vset.pattern.permute.xlu0 2
        %1645 = vperm.xlu0 %1644, %v370
        %v1646 = vpop.permute.xlu0 %1645
        %1648 = vset.pattern.permute.xlu0 2
        %1649 = vperm.xlu0 %1648, %v371
        %v1650 = vpop.permute.xlu0 %1649
        %v1652 = vlaneseq
        %v1653 = vshrl.u32 %v1652, 7
        %v1654 = vsub.s32 2, %v1653
        %v1655 = vrot.slane %v372, %v1654
        %v1656 = vlaneseq
        %v1657 = vshrl.u32 %v1656, 7
        %v1658 = vsub.s32 6, %v1657
        %v1659 = vrot.slane %v372, %v1658
        %v1660 = vlaneseq
        %v1661 = vshrl.u32 %v1660, 7
        %v1662 = vsub.s32 2, %v1661
        %v1663 = vrot.slane %v373, %v1662
        %v1664 = vlaneseq
        %v1665 = vshrl.u32 %v1664, 7
        %v1666 = vsub.s32 6, %v1665
        %v1667 = vrot.slane %v373, %v1666
        %v1668 = vlaneseq
        %v1669 = vshrl.u32 %v1668, 7
        %v1670 = vsub.s32 2, %v1669
        %v1671 = vrot.slane %v374, %v1670
        %v1672 = vlaneseq
        %v1673 = vshrl.u32 %v1672, 7
        %v1674 = vsub.s32 6, %v1673
        %v1675 = vrot.slane %v374, %v1674
        %v1676 = vlaneseq
        %v1677 = vshrl.u32 %v1676, 7
        %v1678 = vsub.s32 2, %v1677
        %v1679 = vrot.slane %v375, %v1678
        %v1680 = vlaneseq
        %v1681 = vshrl.u32 %v1680, 7
        %v1682 = vsub.s32 6, %v1681
        %v1683 = vrot.slane %v375, %v1682
        %v1684 = vlaneseq
        %v1685 = vshrl.u32 %v1684, 7
        %v1686 = vsub.s32 2, %v1685
        %v1687 = vrot.slane %v376, %v1686
        %v1688 = vlaneseq
        %v1689 = vshrl.u32 %v1688, 7
        %v1690 = vsub.s32 6, %v1689
        %v1691 = vrot.slane %v376, %v1690
        %v1692 = vlaneseq
        %v1693 = vshrl.u32 %v1692, 7
        %v1694 = vsub.s32 2, %v1693
        %v1695 = vrot.slane %v377, %v1694
        %v1696 = vlaneseq
        %v1697 = vshrl.u32 %v1696, 7
        %v1698 = vsub.s32 6, %v1697
        %v1699 = vrot.slane %v377, %v1698
        %v1700 = vlaneseq
        %v1701 = vshrl.u32 %v1700, 7
        %v1702 = vsub.s32 2, %v1701
        %v1703 = vrot.slane %v378, %v1702
        %v1704 = vlaneseq
        %v1705 = vshrl.u32 %v1704, 7
        %v1706 = vsub.s32 6, %v1705
        %v1707 = vrot.slane %v378, %v1706
        %v1708 = vlaneseq
        %v1709 = vshrl.u32 %v1708, 7
        %v1710 = vsub.s32 2, %v1709
        %v1711 = vrot.slane %v379, %v1710
        %v1712 = vlaneseq
        %v1713 = vshrl.u32 %v1712, 7
        %v1714 = vsub.s32 6, %v1713
        %v1715 = vrot.slane %v379, %v1714
        %v1732 = vlaneseq
        %v1733 = vshrl.u32 %v1732, 7
        %v1734 = vsub.s32 2, %v1733
        %v1735 = vrot.slane %v1655, %v1734
        %v1736 = vlaneseq
        %v1737 = vshrl.u32 %v1736, 7
        %v1738 = vsub.s32 2, %v1737
        %v1739 = vrot.slane %v1659, %v1738
        %v1740 = vlaneseq
        %v1741 = vshrl.u32 %v1740, 7
        %v1742 = vsub.s32 2, %v1741
        %v1743 = vrot.slane %v1663, %v1742
        %v1744 = vlaneseq
        %v1745 = vshrl.u32 %v1744, 7
        %v1746 = vsub.s32 2, %v1745
        %v1747 = vrot.slane %v1667, %v1746
        %v1748 = vlaneseq
        %v1749 = vshrl.u32 %v1748, 7
        %v1750 = vsub.s32 2, %v1749
        %v1751 = vrot.slane %v1671, %v1750
        %v1752 = vlaneseq
        %v1753 = vshrl.u32 %v1752, 7
        %v1754 = vsub.s32 2, %v1753
        %v1755 = vrot.slane %v1675, %v1754
        %v1756 = vlaneseq
        %v1757 = vshrl.u32 %v1756, 7
        %v1758 = vsub.s32 2, %v1757
        %v1759 = vrot.slane %v1679, %v1758
        %v1760 = vlaneseq
        %v1761 = vshrl.u32 %v1760, 7
        %v1762 = vsub.s32 2, %v1761
        %v1763 = vrot.slane %v1683, %v1762
        %v1764 = vlaneseq
        %v1765 = vshrl.u32 %v1764, 7
        %v1766 = vsub.s32 2, %v1765
        %v1767 = vrot.slane %v1687, %v1766
        %v1768 = vlaneseq
        %v1769 = vshrl.u32 %v1768, 7
        %v1770 = vsub.s32 2, %v1769
        %v1771 = vrot.slane %v1691, %v1770
        %v1772 = vlaneseq
        %v1773 = vshrl.u32 %v1772, 7
        %v1774 = vsub.s32 2, %v1773
        %v1775 = vrot.slane %v1695, %v1774
        %v1776 = vlaneseq
        %v1777 = vshrl.u32 %v1776, 7
        %v1778 = vsub.s32 2, %v1777
        %v1779 = vrot.slane %v1699, %v1778
        %v1780 = vlaneseq
        %v1781 = vshrl.u32 %v1780, 7
        %v1782 = vsub.s32 2, %v1781
        %v1783 = vrot.slane %v1703, %v1782
        %v1784 = vlaneseq
        %v1785 = vshrl.u32 %v1784, 7
        %v1786 = vsub.s32 2, %v1785
        %v1787 = vrot.slane %v1707, %v1786
        %v1788 = vlaneseq
        %v1789 = vshrl.u32 %v1788, 7
        %v1790 = vsub.s32 2, %v1789
        %v1791 = vrot.slane %v1711, %v1790
        %v1792 = vlaneseq
        %v1793 = vshrl.u32 %v1792, 7
        %v1794 = vsub.s32 2, %v1793
        %v1795 = vrot.slane %v1715, %v1794
        %v1796 = vmul.f32 %v1590, %v1735
        %v1797 = vmul.f32 %v1590, %v1739
        %v1798 = vmul.f32 %v1590, %v1743
        %v1799 = vmul.f32 %v1590, %v1747
        %v1800 = vmul.f32 %v1590, %v1751
        %v1801 = vmul.f32 %v1590, %v1755
        %v1802 = vmul.f32 %v1590, %v1759
        %v1803 = vmul.f32 %v1590, %v1763
        %v1804 = vmul.f32 %v1590, %v1767
        %v1805 = vmul.f32 %v1590, %v1771
        %v1806 = vmul.f32 %v1590, %v1775
        %v1807 = vmul.f32 %v1590, %v1779
        %v1808 = vmul.f32 %v1590, %v1783
        %v1809 = vmul.f32 %v1590, %v1787
        %v1810 = vmul.f32 %v1590, %v1791
        %v1811 = vmul.f32 %v1590, %v1795
        %v1812 = vmul.f32 %v1594, %v1735
        %v1813 = vmul.f32 %v1594, %v1739
        %v1814 = vmul.f32 %v1594, %v1743
        %v1815 = vmul.f32 %v1594, %v1747
        %v1816 = vmul.f32 %v1594, %v1751
        %v1817 = vmul.f32 %v1594, %v1755
        %v1818 = vmul.f32 %v1594, %v1759
        %v1819 = vmul.f32 %v1594, %v1763
        %v1820 = vmul.f32 %v1594, %v1767
        %v1821 = vmul.f32 %v1594, %v1771
        %v1822 = vmul.f32 %v1594, %v1775
        %v1823 = vmul.f32 %v1594, %v1779
        %v1824 = vmul.f32 %v1594, %v1783
        %v1825 = vmul.f32 %v1594, %v1787
        %v1826 = vmul.f32 %v1594, %v1791
        %v1827 = vmul.f32 %v1594, %v1795
        %v1828 = vmul.f32 %v1598, %v1735
        %v1829 = vmul.f32 %v1598, %v1739
        %v1830 = vmul.f32 %v1598, %v1743
        %v1831 = vmul.f32 %v1598, %v1747
        %v1832 = vmul.f32 %v1598, %v1751
        %v1833 = vmul.f32 %v1598, %v1755
        %v1834 = vmul.f32 %v1598, %v1759
        %v1835 = vmul.f32 %v1598, %v1763
        %v1836 = vmul.f32 %v1598, %v1767
        %v1837 = vmul.f32 %v1598, %v1771
        %v1838 = vmul.f32 %v1598, %v1775
        %v1839 = vmul.f32 %v1598, %v1779
        %v1840 = vmul.f32 %v1598, %v1783
        %v1841 = vmul.f32 %v1598, %v1787
        %v1842 = vmul.f32 %v1598, %v1791
        %v1843 = vmul.f32 %v1598, %v1795
        %v1844 = vmul.f32 %v1602, %v1735
        %v1845 = vmul.f32 %v1602, %v1739
        %v1846 = vmul.f32 %v1602, %v1743
        %v1847 = vmul.f32 %v1602, %v1747
        %v1848 = vmul.f32 %v1602, %v1751
        %v1849 = vmul.f32 %v1602, %v1755
        %v1850 = vmul.f32 %v1602, %v1759
        %v1851 = vmul.f32 %v1602, %v1763
        %v1852 = vmul.f32 %v1602, %v1767
        %v1853 = vmul.f32 %v1602, %v1771
        %v1854 = vmul.f32 %v1602, %v1775
        %v1855 = vmul.f32 %v1602, %v1779
        %v1856 = vmul.f32 %v1602, %v1783
        %v1857 = vmul.f32 %v1602, %v1787
        %v1858 = vmul.f32 %v1602, %v1791
        %v1859 = vmul.f32 %v1602, %v1795
        %v1860 = vmul.f32 %v1606, %v1735
        %v1861 = vmul.f32 %v1606, %v1739
        %v1862 = vmul.f32 %v1606, %v1743
        %v1863 = vmul.f32 %v1606, %v1747
        %v1864 = vmul.f32 %v1606, %v1751
        %v1865 = vmul.f32 %v1606, %v1755
        %v1866 = vmul.f32 %v1606, %v1759
        %v1867 = vmul.f32 %v1606, %v1763
        %v1868 = vmul.f32 %v1606, %v1767
        %v1869 = vmul.f32 %v1606, %v1771
        %v1870 = vmul.f32 %v1606, %v1775
        %v1871 = vmul.f32 %v1606, %v1779
        %v1872 = vmul.f32 %v1606, %v1783
        %v1873 = vmul.f32 %v1606, %v1787
        %v1874 = vmul.f32 %v1606, %v1791
        %v1875 = vmul.f32 %v1606, %v1795
        %v1876 = vmul.f32 %v1610, %v1735
        %v1877 = vmul.f32 %v1610, %v1739
        %v1878 = vmul.f32 %v1610, %v1743
        %v1879 = vmul.f32 %v1610, %v1747
        %v1880 = vmul.f32 %v1610, %v1751
        %v1881 = vmul.f32 %v1610, %v1755
        %v1882 = vmul.f32 %v1610, %v1759
        %v1883 = vmul.f32 %v1610, %v1763
        %v1884 = vmul.f32 %v1610, %v1767
        %v1885 = vmul.f32 %v1610, %v1771
        %v1886 = vmul.f32 %v1610, %v1775
        %v1887 = vmul.f32 %v1610, %v1779
        %v1888 = vmul.f32 %v1610, %v1783
        %v1889 = vmul.f32 %v1610, %v1787
        %v1890 = vmul.f32 %v1610, %v1791
        %v1891 = vmul.f32 %v1610, %v1795
        %v1892 = vmul.f32 %v1614, %v1735
        %v1893 = vmul.f32 %v1614, %v1739
        %v1894 = vmul.f32 %v1614, %v1743
        %v1895 = vmul.f32 %v1614, %v1747
        %v1896 = vmul.f32 %v1614, %v1751
        %v1897 = vmul.f32 %v1614, %v1755
        %v1898 = vmul.f32 %v1614, %v1759
        %v1899 = vmul.f32 %v1614, %v1763
        %v1900 = vmul.f32 %v1614, %v1767
        %v1901 = vmul.f32 %v1614, %v1771
        %v1902 = vmul.f32 %v1614, %v1775
        %v1903 = vmul.f32 %v1614, %v1779
        %v1904 = vmul.f32 %v1614, %v1783
        %v1905 = vmul.f32 %v1614, %v1787
        %v1906 = vmul.f32 %v1614, %v1791
        %v1907 = vmul.f32 %v1614, %v1795
        %v1908 = vmul.f32 %v1618, %v1735
        %v1909 = vmul.f32 %v1618, %v1739
        %v1910 = vmul.f32 %v1618, %v1743
        %v1911 = vmul.f32 %v1618, %v1747
        %v1912 = vmul.f32 %v1618, %v1751
        %v1913 = vmul.f32 %v1618, %v1755
        %v1914 = vmul.f32 %v1618, %v1759
        %v1915 = vmul.f32 %v1618, %v1763
        %v1916 = vmul.f32 %v1618, %v1767
        %v1917 = vmul.f32 %v1618, %v1771
        %v1918 = vmul.f32 %v1618, %v1775
        %v1919 = vmul.f32 %v1618, %v1779
        %v1920 = vmul.f32 %v1618, %v1783
        %v1921 = vmul.f32 %v1618, %v1787
        %v1922 = vmul.f32 %v1618, %v1791
        %v1923 = vmul.f32 %v1618, %v1795
        %v1924 = vmul.f32 %v1622, %v1735
        %v1925 = vmul.f32 %v1622, %v1739
        %v1926 = vmul.f32 %v1622, %v1743
        %v1927 = vmul.f32 %v1622, %v1747
        %v1928 = vmul.f32 %v1622, %v1751
        %v1929 = vmul.f32 %v1622, %v1755
        %v1930 = vmul.f32 %v1622, %v1759
        %v1931 = vmul.f32 %v1622, %v1763
        %v1932 = vmul.f32 %v1622, %v1767
        %v1933 = vmul.f32 %v1622, %v1771
        %v1934 = vmul.f32 %v1622, %v1775
        %v1935 = vmul.f32 %v1622, %v1779
        %v1936 = vmul.f32 %v1622, %v1783
        %v1937 = vmul.f32 %v1622, %v1787
        %v1938 = vmul.f32 %v1622, %v1791
        %v1939 = vmul.f32 %v1622, %v1795
        %v1940 = vmul.f32 %v1626, %v1735
        %v1941 = vmul.f32 %v1626, %v1739
        %v1942 = vmul.f32 %v1626, %v1743
        %v1943 = vmul.f32 %v1626, %v1747
        %v1944 = vmul.f32 %v1626, %v1751
        %v1945 = vmul.f32 %v1626, %v1755
        %v1946 = vmul.f32 %v1626, %v1759
        %v1947 = vmul.f32 %v1626, %v1763
        %v1948 = vmul.f32 %v1626, %v1767
        %v1949 = vmul.f32 %v1626, %v1771
        %v1950 = vmul.f32 %v1626, %v1775
        %v1951 = vmul.f32 %v1626, %v1779
        %v1952 = vmul.f32 %v1626, %v1783
        %v1953 = vmul.f32 %v1626, %v1787
        %v1954 = vmul.f32 %v1626, %v1791
        %v1955 = vmul.f32 %v1626, %v1795
        %v1956 = vmul.f32 %v1630, %v1735
        %v1957 = vmul.f32 %v1630, %v1739
        %v1958 = vmul.f32 %v1630, %v1743
        %v1959 = vmul.f32 %v1630, %v1747
        %v1960 = vmul.f32 %v1630, %v1751
        %v1961 = vmul.f32 %v1630, %v1755
        %v1962 = vmul.f32 %v1630, %v1759
        %v1963 = vmul.f32 %v1630, %v1763
        %v1964 = vmul.f32 %v1630, %v1767
        %v1965 = vmul.f32 %v1630, %v1771
        %v1966 = vmul.f32 %v1630, %v1775
        %v1967 = vmul.f32 %v1630, %v1779
        %v1968 = vmul.f32 %v1630, %v1783
        %v1969 = vmul.f32 %v1630, %v1787
        %v1970 = vmul.f32 %v1630, %v1791
        %v1971 = vmul.f32 %v1630, %v1795
        %v1972 = vmul.f32 %v1634, %v1735
        %v1973 = vmul.f32 %v1634, %v1739
        %v1974 = vmul.f32 %v1634, %v1743
        %v1975 = vmul.f32 %v1634, %v1747
        %v1976 = vmul.f32 %v1634, %v1751
        %v1977 = vmul.f32 %v1634, %v1755
        %v1978 = vmul.f32 %v1634, %v1759
        %v1979 = vmul.f32 %v1634, %v1763
        %v1980 = vmul.f32 %v1634, %v1767
        %v1981 = vmul.f32 %v1634, %v1771
        %v1982 = vmul.f32 %v1634, %v1775
        %v1983 = vmul.f32 %v1634, %v1779
        %v1984 = vmul.f32 %v1634, %v1783
        %v1985 = vmul.f32 %v1634, %v1787
        %v1986 = vmul.f32 %v1634, %v1791
        %v1987 = vmul.f32 %v1634, %v1795
        %v1988 = vmul.f32 %v1638, %v1735
        %v1989 = vmul.f32 %v1638, %v1739
        %v1990 = vmul.f32 %v1638, %v1743
        %v1991 = vmul.f32 %v1638, %v1747
        %v1992 = vmul.f32 %v1638, %v1751
        %v1993 = vmul.f32 %v1638, %v1755
        %v1994 = vmul.f32 %v1638, %v1759
        %v1995 = vmul.f32 %v1638, %v1763
        %v1996 = vmul.f32 %v1638, %v1767
        %v1997 = vmul.f32 %v1638, %v1771
        %v1998 = vmul.f32 %v1638, %v1775
        %v1999 = vmul.f32 %v1638, %v1779
        %v2000 = vmul.f32 %v1638, %v1783
        %v2001 = vmul.f32 %v1638, %v1787
        %v2002 = vmul.f32 %v1638, %v1791
        %v2003 = vmul.f32 %v1638, %v1795
        %v2004 = vmul.f32 %v1642, %v1735
        %v2005 = vmul.f32 %v1642, %v1739
        %v2006 = vmul.f32 %v1642, %v1743
        %v2007 = vmul.f32 %v1642, %v1747
        %v2008 = vmul.f32 %v1642, %v1751
        %v2009 = vmul.f32 %v1642, %v1755
        %v2010 = vmul.f32 %v1642, %v1759
        %v2011 = vmul.f32 %v1642, %v1763
        %v2012 = vmul.f32 %v1642, %v1767
        %v2013 = vmul.f32 %v1642, %v1771
        %v2014 = vmul.f32 %v1642, %v1775
        %v2015 = vmul.f32 %v1642, %v1779
        %v2016 = vmul.f32 %v1642, %v1783
        %v2017 = vmul.f32 %v1642, %v1787
        %v2018 = vmul.f32 %v1642, %v1791
        %v2019 = vmul.f32 %v1642, %v1795
        %v2020 = vmul.f32 %v1646, %v1735
        %v2021 = vmul.f32 %v1646, %v1739
        %v2022 = vmul.f32 %v1646, %v1743
        %v2023 = vmul.f32 %v1646, %v1747
        %v2024 = vmul.f32 %v1646, %v1751
        %v2025 = vmul.f32 %v1646, %v1755
        %v2026 = vmul.f32 %v1646, %v1759
        %v2027 = vmul.f32 %v1646, %v1763
        %v2028 = vmul.f32 %v1646, %v1767
        %v2029 = vmul.f32 %v1646, %v1771
        %v2030 = vmul.f32 %v1646, %v1775
        %v2031 = vmul.f32 %v1646, %v1779
        %v2032 = vmul.f32 %v1646, %v1783
        %v2033 = vmul.f32 %v1646, %v1787
        %v2034 = vmul.f32 %v1646, %v1791
        %v2035 = vmul.f32 %v1646, %v1795
        %v2036 = vmul.f32 %v1650, %v1735
        %v2037 = vmul.f32 %v1650, %v1739
        %v2038 = vmul.f32 %v1650, %v1743
        %v2039 = vmul.f32 %v1650, %v1747
        %v2040 = vmul.f32 %v1650, %v1751
        %v2041 = vmul.f32 %v1650, %v1755
        %v2042 = vmul.f32 %v1650, %v1759
        %v2043 = vmul.f32 %v1650, %v1763
        %v2044 = vmul.f32 %v1650, %v1767
        %v2045 = vmul.f32 %v1650, %v1771
        %v2046 = vmul.f32 %v1650, %v1775
        %v2047 = vmul.f32 %v1650, %v1779
        %v2048 = vmul.f32 %v1650, %v1783
        %v2049 = vmul.f32 %v1650, %v1787
        %v2050 = vmul.f32 %v1650, %v1791
        %v2051 = vmul.f32 %v1650, %v1795
        %v2052 = vadd.f32 %v1332, %v1796
        %v2053 = vadd.f32 %v1333, %v1797
        %v2054 = vadd.f32 %v1334, %v1798
        %v2055 = vadd.f32 %v1335, %v1799
        %v2056 = vadd.f32 %v1336, %v1800
        %v2057 = vadd.f32 %v1337, %v1801
        %v2058 = vadd.f32 %v1338, %v1802
        %v2059 = vadd.f32 %v1339, %v1803
        %v2060 = vadd.f32 %v1340, %v1804
        %v2061 = vadd.f32 %v1341, %v1805
        %v2062 = vadd.f32 %v1342, %v1806
        %v2063 = vadd.f32 %v1343, %v1807
        %v2064 = vadd.f32 %v1344, %v1808
        %v2065 = vadd.f32 %v1345, %v1809
        %v2066 = vadd.f32 %v1346, %v1810
        %v2067 = vadd.f32 %v1347, %v1811
        %v2068 = vadd.f32 %v1348, %v1812
        %v2069 = vadd.f32 %v1349, %v1813
        %v2070 = vadd.f32 %v1350, %v1814
        %v2071 = vadd.f32 %v1351, %v1815
        %v2072 = vadd.f32 %v1352, %v1816
        %v2073 = vadd.f32 %v1353, %v1817
        %v2074 = vadd.f32 %v1354, %v1818
        %v2075 = vadd.f32 %v1355, %v1819
        %v2076 = vadd.f32 %v1356, %v1820
        %v2077 = vadd.f32 %v1357, %v1821
        %v2078 = vadd.f32 %v1358, %v1822
        %v2079 = vadd.f32 %v1359, %v1823
        %v2080 = vadd.f32 %v1360, %v1824
        %v2081 = vadd.f32 %v1361, %v1825
        %v2082 = vadd.f32 %v1362, %v1826
        %v2083 = vadd.f32 %v1363, %v1827
        %v2084 = vadd.f32 %v1364, %v1828
        %v2085 = vadd.f32 %v1365, %v1829
        %v2086 = vadd.f32 %v1366, %v1830
        %v2087 = vadd.f32 %v1367, %v1831
        %v2088 = vadd.f32 %v1368, %v1832
        %v2089 = vadd.f32 %v1369, %v1833
        %v2090 = vadd.f32 %v1370, %v1834
        %v2091 = vadd.f32 %v1371, %v1835
        %v2092 = vadd.f32 %v1372, %v1836
        %v2093 = vadd.f32 %v1373, %v1837
        %v2094 = vadd.f32 %v1374, %v1838
        %v2095 = vadd.f32 %v1375, %v1839
        %v2096 = vadd.f32 %v1376, %v1840
        %v2097 = vadd.f32 %v1377, %v1841
        %v2098 = vadd.f32 %v1378, %v1842
        %v2099 = vadd.f32 %v1379, %v1843
        %v2100 = vadd.f32 %v1380, %v1844
        %v2101 = vadd.f32 %v1381, %v1845
        %v2102 = vadd.f32 %v1382, %v1846
        %v2103 = vadd.f32 %v1383, %v1847
        %v2104 = vadd.f32 %v1384, %v1848
        %v2105 = vadd.f32 %v1385, %v1849
        %v2106 = vadd.f32 %v1386, %v1850
        %v2107 = vadd.f32 %v1387, %v1851
        %v2108 = vadd.f32 %v1388, %v1852
        %v2109 = vadd.f32 %v1389, %v1853
        %v2110 = vadd.f32 %v1390, %v1854
        %v2111 = vadd.f32 %v1391, %v1855
        %v2112 = vadd.f32 %v1392, %v1856
        %v2113 = vadd.f32 %v1393, %v1857
        %v2114 = vadd.f32 %v1394, %v1858
        %v2115 = vadd.f32 %v1395, %v1859
        %v2116 = vadd.f32 %v1396, %v1860
        %v2117 = vadd.f32 %v1397, %v1861
        %v2118 = vadd.f32 %v1398, %v1862
        %v2119 = vadd.f32 %v1399, %v1863
        %v2120 = vadd.f32 %v1400, %v1864
        %v2121 = vadd.f32 %v1401, %v1865
        %v2122 = vadd.f32 %v1402, %v1866
        %v2123 = vadd.f32 %v1403, %v1867
        %v2124 = vadd.f32 %v1404, %v1868
        %v2125 = vadd.f32 %v1405, %v1869
        %v2126 = vadd.f32 %v1406, %v1870
        %v2127 = vadd.f32 %v1407, %v1871
        %v2128 = vadd.f32 %v1408, %v1872
        %v2129 = vadd.f32 %v1409, %v1873
        %v2130 = vadd.f32 %v1410, %v1874
        %v2131 = vadd.f32 %v1411, %v1875
        %v2132 = vadd.f32 %v1412, %v1876
        %v2133 = vadd.f32 %v1413, %v1877
        %v2134 = vadd.f32 %v1414, %v1878
        %v2135 = vadd.f32 %v1415, %v1879
        %v2136 = vadd.f32 %v1416, %v1880
        %v2137 = vadd.f32 %v1417, %v1881
        %v2138 = vadd.f32 %v1418, %v1882
        %v2139 = vadd.f32 %v1419, %v1883
        %v2140 = vadd.f32 %v1420, %v1884
        %v2141 = vadd.f32 %v1421, %v1885
        %v2142 = vadd.f32 %v1422, %v1886
        %v2143 = vadd.f32 %v1423, %v1887
        %v2144 = vadd.f32 %v1424, %v1888
        %v2145 = vadd.f32 %v1425, %v1889
        %v2146 = vadd.f32 %v1426, %v1890
        %v2147 = vadd.f32 %v1427, %v1891
        %v2148 = vadd.f32 %v1428, %v1892
        %v2149 = vadd.f32 %v1429, %v1893
        %v2150 = vadd.f32 %v1430, %v1894
        %v2151 = vadd.f32 %v1431, %v1895
        %v2152 = vadd.f32 %v1432, %v1896
        %v2153 = vadd.f32 %v1433, %v1897
        %v2154 = vadd.f32 %v1434, %v1898
        %v2155 = vadd.f32 %v1435, %v1899
        %v2156 = vadd.f32 %v1436, %v1900
        %v2157 = vadd.f32 %v1437, %v1901
        %v2158 = vadd.f32 %v1438, %v1902
        %v2159 = vadd.f32 %v1439, %v1903
        %v2160 = vadd.f32 %v1440, %v1904
        %v2161 = vadd.f32 %v1441, %v1905
        %v2162 = vadd.f32 %v1442, %v1906
        %v2163 = vadd.f32 %v1443, %v1907
        %v2164 = vadd.f32 %v1444, %v1908
        %v2165 = vadd.f32 %v1445, %v1909
        %v2166 = vadd.f32 %v1446, %v1910
        %v2167 = vadd.f32 %v1447, %v1911
        %v2168 = vadd.f32 %v1448, %v1912
        %v2169 = vadd.f32 %v1449, %v1913
        %v2170 = vadd.f32 %v1450, %v1914
        %v2171 = vadd.f32 %v1451, %v1915
        %v2172 = vadd.f32 %v1452, %v1916
        %v2173 = vadd.f32 %v1453, %v1917
        %v2174 = vadd.f32 %v1454, %v1918
        %v2175 = vadd.f32 %v1455, %v1919
        %v2176 = vadd.f32 %v1456, %v1920
        %v2177 = vadd.f32 %v1457, %v1921
        %v2178 = vadd.f32 %v1458, %v1922
        %v2179 = vadd.f32 %v1459, %v1923
        %v2180 = vadd.f32 %v1460, %v1924
        %v2181 = vadd.f32 %v1461, %v1925
        %v2182 = vadd.f32 %v1462, %v1926
        %v2183 = vadd.f32 %v1463, %v1927
        %v2184 = vadd.f32 %v1464, %v1928
        %v2185 = vadd.f32 %v1465, %v1929
        %v2186 = vadd.f32 %v1466, %v1930
        %v2187 = vadd.f32 %v1467, %v1931
        %v2188 = vadd.f32 %v1468, %v1932
        %v2189 = vadd.f32 %v1469, %v1933
        %v2190 = vadd.f32 %v1470, %v1934
        %v2191 = vadd.f32 %v1471, %v1935
        %v2192 = vadd.f32 %v1472, %v1936
        %v2193 = vadd.f32 %v1473, %v1937
        %v2194 = vadd.f32 %v1474, %v1938
        %v2195 = vadd.f32 %v1475, %v1939
        %v2196 = vadd.f32 %v1476, %v1940
        %v2197 = vadd.f32 %v1477, %v1941
        %v2198 = vadd.f32 %v1478, %v1942
        %v2199 = vadd.f32 %v1479, %v1943
        %v2200 = vadd.f32 %v1480, %v1944
        %v2201 = vadd.f32 %v1481, %v1945
        %v2202 = vadd.f32 %v1482, %v1946
        %v2203 = vadd.f32 %v1483, %v1947
        %v2204 = vadd.f32 %v1484, %v1948
        %v2205 = vadd.f32 %v1485, %v1949
        %v2206 = vadd.f32 %v1486, %v1950
        %v2207 = vadd.f32 %v1487, %v1951
        %v2208 = vadd.f32 %v1488, %v1952
        %v2209 = vadd.f32 %v1489, %v1953
        %v2210 = vadd.f32 %v1490, %v1954
        %v2211 = vadd.f32 %v1491, %v1955
        %v2212 = vadd.f32 %v1492, %v1956
        %v2213 = vadd.f32 %v1493, %v1957
        %v2214 = vadd.f32 %v1494, %v1958
        %v2215 = vadd.f32 %v1495, %v1959
        %v2216 = vadd.f32 %v1496, %v1960
        %v2217 = vadd.f32 %v1497, %v1961
        %v2218 = vadd.f32 %v1498, %v1962
        %v2219 = vadd.f32 %v1499, %v1963
        %v2220 = vadd.f32 %v1500, %v1964
        %v2221 = vadd.f32 %v1501, %v1965
        %v2222 = vadd.f32 %v1502, %v1966
        %v2223 = vadd.f32 %v1503, %v1967
        %v2224 = vadd.f32 %v1504, %v1968
        %v2225 = vadd.f32 %v1505, %v1969
        %v2226 = vadd.f32 %v1506, %v1970
        %v2227 = vadd.f32 %v1507, %v1971
        %v2228 = vadd.f32 %v1508, %v1972
        %v2229 = vadd.f32 %v1509, %v1973
        %v2230 = vadd.f32 %v1510, %v1974
        %v2231 = vadd.f32 %v1511, %v1975
        %v2232 = vadd.f32 %v1512, %v1976
        %v2233 = vadd.f32 %v1513, %v1977
        %v2234 = vadd.f32 %v1514, %v1978
        %v2235 = vadd.f32 %v1515, %v1979
        %v2236 = vadd.f32 %v1516, %v1980
        %v2237 = vadd.f32 %v1517, %v1981
        %v2238 = vadd.f32 %v1518, %v1982
        %v2239 = vadd.f32 %v1519, %v1983
        %v2240 = vadd.f32 %v1520, %v1984
        %v2241 = vadd.f32 %v1521, %v1985
        %v2242 = vadd.f32 %v1522, %v1986
        %v2243 = vadd.f32 %v1523, %v1987
        %v2244 = vadd.f32 %v1524, %v1988
        %v2245 = vadd.f32 %v1525, %v1989
        %v2246 = vadd.f32 %v1526, %v1990
        %v2247 = vadd.f32 %v1527, %v1991
        %v2248 = vadd.f32 %v1528, %v1992
        %v2249 = vadd.f32 %v1529, %v1993
        %v2250 = vadd.f32 %v1530, %v1994
        %v2251 = vadd.f32 %v1531, %v1995
        %v2252 = vadd.f32 %v1532, %v1996
        %v2253 = vadd.f32 %v1533, %v1997
        %v2254 = vadd.f32 %v1534, %v1998
        %v2255 = vadd.f32 %v1535, %v1999
        %v2256 = vadd.f32 %v1536, %v2000
        %v2257 = vadd.f32 %v1537, %v2001
        %v2258 = vadd.f32 %v1538, %v2002
        %v2259 = vadd.f32 %v1539, %v2003
        %v2260 = vadd.f32 %v1540, %v2004
        %v2261 = vadd.f32 %v1541, %v2005
        %v2262 = vadd.f32 %v1542, %v2006
        %v2263 = vadd.f32 %v1543, %v2007
        %v2264 = vadd.f32 %v1544, %v2008
        %v2265 = vadd.f32 %v1545, %v2009
        %v2266 = vadd.f32 %v1546, %v2010
        %v2267 = vadd.f32 %v1547, %v2011
        %v2268 = vadd.f32 %v1548, %v2012
        %v2269 = vadd.f32 %v1549, %v2013
        %v2270 = vadd.f32 %v1550, %v2014
        %v2271 = vadd.f32 %v1551, %v2015
        %v2272 = vadd.f32 %v1552, %v2016
        %v2273 = vadd.f32 %v1553, %v2017
        %v2274 = vadd.f32 %v1554, %v2018
        %v2275 = vadd.f32 %v1555, %v2019
        %v2276 = vadd.f32 %v1556, %v2020
        %v2277 = vadd.f32 %v1557, %v2021
        %v2278 = vadd.f32 %v1558, %v2022
        %v2279 = vadd.f32 %v1559, %v2023
        %v2280 = vadd.f32 %v1560, %v2024
        %v2281 = vadd.f32 %v1561, %v2025
        %v2282 = vadd.f32 %v1562, %v2026
        %v2283 = vadd.f32 %v1563, %v2027
        %v2284 = vadd.f32 %v1564, %v2028
        %v2285 = vadd.f32 %v1565, %v2029
        %v2286 = vadd.f32 %v1566, %v2030
        %v2287 = vadd.f32 %v1567, %v2031
        %v2288 = vadd.f32 %v1568, %v2032
        %v2289 = vadd.f32 %v1569, %v2033
        %v2290 = vadd.f32 %v1570, %v2034
        %v2291 = vadd.f32 %v1571, %v2035
        %v2292 = vadd.f32 %v1572, %v2036
        %v2293 = vadd.f32 %v1573, %v2037
        %v2294 = vadd.f32 %v1574, %v2038
        %v2295 = vadd.f32 %v1575, %v2039
        %v2296 = vadd.f32 %v1576, %v2040
        %v2297 = vadd.f32 %v1577, %v2041
        %v2298 = vadd.f32 %v1578, %v2042
        %v2299 = vadd.f32 %v1579, %v2043
        %v2300 = vadd.f32 %v1580, %v2044
        %v2301 = vadd.f32 %v1581, %v2045
        %v2302 = vadd.f32 %v1582, %v2046
        %v2303 = vadd.f32 %v1583, %v2047
        %v2304 = vadd.f32 %v1584, %v2048
        %v2305 = vadd.f32 %v1585, %v2049
        %v2306 = vadd.f32 %v1586, %v2050
        %v2307 = vadd.f32 %v1587, %v2051
        %v2308 = vld [vmem:[%s281] sm:$0xff]
        %v2309 = vld [vmem:[%s281 + $0x8] sm:$0xff]
        %v2312 = vlaneseq
        %v2313 = vshrl.u32 %v2312, 7
        %v2314 = vsub.s32 0, %v2313
        %v2315 = vrot.slane %v2308, %v2314
        %v2316 = vlaneseq
        %v2317 = vshrl.u32 %v2316, 7
        %v2318 = vsub.s32 1, %v2317
        %v2319 = vrot.slane %v2308, %v2318
        %v2320 = vlaneseq
        %v2321 = vshrl.u32 %v2320, 7
        %v2322 = vsub.s32 2, %v2321
        %v2323 = vrot.slane %v2308, %v2322
        %v2324 = vlaneseq
        %v2325 = vshrl.u32 %v2324, 7
        %v2326 = vsub.s32 3, %v2325
        %v2327 = vrot.slane %v2308, %v2326
        %v2328 = vlaneseq
        %v2329 = vshrl.u32 %v2328, 7
        %v2330 = vsub.s32 4, %v2329
        %v2331 = vrot.slane %v2308, %v2330
        %v2332 = vlaneseq
        %v2333 = vshrl.u32 %v2332, 7
        %v2334 = vsub.s32 5, %v2333
        %v2335 = vrot.slane %v2308, %v2334
        %v2336 = vlaneseq
        %v2337 = vshrl.u32 %v2336, 7
        %v2338 = vsub.s32 6, %v2337
        %v2339 = vrot.slane %v2308, %v2338
        %v2340 = vlaneseq
        %v2341 = vshrl.u32 %v2340, 7
        %v2342 = vsub.s32 7, %v2341
        %v2343 = vrot.slane %v2308, %v2342
        %v2344 = vlaneseq
        %v2345 = vshrl.u32 %v2344, 7
        %v2346 = vsub.s32 0, %v2345
        %v2347 = vrot.slane %v2309, %v2346
        %v2348 = vlaneseq
        %v2349 = vshrl.u32 %v2348, 7
        %v2350 = vsub.s32 1, %v2349
        %v2351 = vrot.slane %v2309, %v2350
        %v2352 = vlaneseq
        %v2353 = vshrl.u32 %v2352, 7
        %v2354 = vsub.s32 2, %v2353
        %v2355 = vrot.slane %v2309, %v2354
        %v2356 = vlaneseq
        %v2357 = vshrl.u32 %v2356, 7
        %v2358 = vsub.s32 3, %v2357
        %v2359 = vrot.slane %v2309, %v2358
        %v2360 = vlaneseq
        %v2361 = vshrl.u32 %v2360, 7
        %v2362 = vsub.s32 4, %v2361
        %v2363 = vrot.slane %v2309, %v2362
        %v2364 = vlaneseq
        %v2365 = vshrl.u32 %v2364, 7
        %v2366 = vsub.s32 5, %v2365
        %v2367 = vrot.slane %v2309, %v2366
        %v2368 = vlaneseq
        %v2369 = vshrl.u32 %v2368, 7
        %v2370 = vsub.s32 6, %v2369
        %v2371 = vrot.slane %v2309, %v2370
        %v2372 = vlaneseq
        %v2373 = vshrl.u32 %v2372, 7
        %v2374 = vsub.s32 7, %v2373
        %v2375 = vrot.slane %v2309, %v2374
        %v2392 = vadd.f32 %v2052, %v2315
        %v2393 = vadd.f32 %v2053, %v2319
        %v2394 = vadd.f32 %v2054, %v2323
        %v2395 = vadd.f32 %v2055, %v2327
        %v2396 = vadd.f32 %v2056, %v2331
        %v2397 = vadd.f32 %v2057, %v2335
        %v2398 = vadd.f32 %v2058, %v2339
        %v2399 = vadd.f32 %v2059, %v2343
        %v2400 = vadd.f32 %v2060, %v2347
        %v2401 = vadd.f32 %v2061, %v2351
        %v2402 = vadd.f32 %v2062, %v2355
        %v2403 = vadd.f32 %v2063, %v2359
        %v2404 = vadd.f32 %v2064, %v2363
        %v2405 = vadd.f32 %v2065, %v2367
        %v2406 = vadd.f32 %v2066, %v2371
        %v2407 = vadd.f32 %v2067, %v2375
        %v2408 = vadd.f32 %v2068, %v2315
        %v2409 = vadd.f32 %v2069, %v2319
        %v2410 = vadd.f32 %v2070, %v2323
        %v2411 = vadd.f32 %v2071, %v2327
        %v2412 = vadd.f32 %v2072, %v2331
        %v2413 = vadd.f32 %v2073, %v2335
        %v2414 = vadd.f32 %v2074, %v2339
        %v2415 = vadd.f32 %v2075, %v2343
        %v2416 = vadd.f32 %v2076, %v2347
        %v2417 = vadd.f32 %v2077, %v2351
        %v2418 = vadd.f32 %v2078, %v2355
        %v2419 = vadd.f32 %v2079, %v2359
        %v2420 = vadd.f32 %v2080, %v2363
        %v2421 = vadd.f32 %v2081, %v2367
        %v2422 = vadd.f32 %v2082, %v2371
        %v2423 = vadd.f32 %v2083, %v2375
        %v2424 = vadd.f32 %v2084, %v2315
        %v2425 = vadd.f32 %v2085, %v2319
        %v2426 = vadd.f32 %v2086, %v2323
        %v2427 = vadd.f32 %v2087, %v2327
        %v2428 = vadd.f32 %v2088, %v2331
        %v2429 = vadd.f32 %v2089, %v2335
        %v2430 = vadd.f32 %v2090, %v2339
        %v2431 = vadd.f32 %v2091, %v2343
        %v2432 = vadd.f32 %v2092, %v2347
        %v2433 = vadd.f32 %v2093, %v2351
        %v2434 = vadd.f32 %v2094, %v2355
        %v2435 = vadd.f32 %v2095, %v2359
        %v2436 = vadd.f32 %v2096, %v2363
        %v2437 = vadd.f32 %v2097, %v2367
        %v2438 = vadd.f32 %v2098, %v2371
        %v2439 = vadd.f32 %v2099, %v2375
        %v2440 = vadd.f32 %v2100, %v2315
        %v2441 = vadd.f32 %v2101, %v2319
        %v2442 = vadd.f32 %v2102, %v2323
        %v2443 = vadd.f32 %v2103, %v2327
        %v2444 = vadd.f32 %v2104, %v2331
        %v2445 = vadd.f32 %v2105, %v2335
        %v2446 = vadd.f32 %v2106, %v2339
        %v2447 = vadd.f32 %v2107, %v2343
        %v2448 = vadd.f32 %v2108, %v2347
        %v2449 = vadd.f32 %v2109, %v2351
        %v2450 = vadd.f32 %v2110, %v2355
        %v2451 = vadd.f32 %v2111, %v2359
        %v2452 = vadd.f32 %v2112, %v2363
        %v2453 = vadd.f32 %v2113, %v2367
        %v2454 = vadd.f32 %v2114, %v2371
        %v2455 = vadd.f32 %v2115, %v2375
        %v2456 = vadd.f32 %v2116, %v2315
        %v2457 = vadd.f32 %v2117, %v2319
        %v2458 = vadd.f32 %v2118, %v2323
        %v2459 = vadd.f32 %v2119, %v2327
        %v2460 = vadd.f32 %v2120, %v2331
        %v2461 = vadd.f32 %v2121, %v2335
        %v2462 = vadd.f32 %v2122, %v2339
        %v2463 = vadd.f32 %v2123, %v2343
        %v2464 = vadd.f32 %v2124, %v2347
        %v2465 = vadd.f32 %v2125, %v2351
        %v2466 = vadd.f32 %v2126, %v2355
        %v2467 = vadd.f32 %v2127, %v2359
        %v2468 = vadd.f32 %v2128, %v2363
        %v2469 = vadd.f32 %v2129, %v2367
        %v2470 = vadd.f32 %v2130, %v2371
        %v2471 = vadd.f32 %v2131, %v2375
        %v2472 = vadd.f32 %v2132, %v2315
        %v2473 = vadd.f32 %v2133, %v2319
        %v2474 = vadd.f32 %v2134, %v2323
        %v2475 = vadd.f32 %v2135, %v2327
        %v2476 = vadd.f32 %v2136, %v2331
        %v2477 = vadd.f32 %v2137, %v2335
        %v2478 = vadd.f32 %v2138, %v2339
        %v2479 = vadd.f32 %v2139, %v2343
        %v2480 = vadd.f32 %v2140, %v2347
        %v2481 = vadd.f32 %v2141, %v2351
        %v2482 = vadd.f32 %v2142, %v2355
        %v2483 = vadd.f32 %v2143, %v2359
        %v2484 = vadd.f32 %v2144, %v2363
        %v2485 = vadd.f32 %v2145, %v2367
        %v2486 = vadd.f32 %v2146, %v2371
        %v2487 = vadd.f32 %v2147, %v2375
        %v2488 = vadd.f32 %v2148, %v2315
        %v2489 = vadd.f32 %v2149, %v2319
        %v2490 = vadd.f32 %v2150, %v2323
        %v2491 = vadd.f32 %v2151, %v2327
        %v2492 = vadd.f32 %v2152, %v2331
        %v2493 = vadd.f32 %v2153, %v2335
        %v2494 = vadd.f32 %v2154, %v2339
        %v2495 = vadd.f32 %v2155, %v2343
        %v2496 = vadd.f32 %v2156, %v2347
        %v2497 = vadd.f32 %v2157, %v2351
        %v2498 = vadd.f32 %v2158, %v2355
        %v2499 = vadd.f32 %v2159, %v2359
        %v2500 = vadd.f32 %v2160, %v2363
        %v2501 = vadd.f32 %v2161, %v2367
        %v2502 = vadd.f32 %v2162, %v2371
        %v2503 = vadd.f32 %v2163, %v2375
        %v2504 = vadd.f32 %v2164, %v2315
        %v2505 = vadd.f32 %v2165, %v2319
        %v2506 = vadd.f32 %v2166, %v2323
        %v2507 = vadd.f32 %v2167, %v2327
        %v2508 = vadd.f32 %v2168, %v2331
        %v2509 = vadd.f32 %v2169, %v2335
        %v2510 = vadd.f32 %v2170, %v2339
        %v2511 = vadd.f32 %v2171, %v2343
        %v2512 = vadd.f32 %v2172, %v2347
        %v2513 = vadd.f32 %v2173, %v2351
        %v2514 = vadd.f32 %v2174, %v2355
        %v2515 = vadd.f32 %v2175, %v2359
        %v2516 = vadd.f32 %v2176, %v2363
        %v2517 = vadd.f32 %v2177, %v2367
        %v2518 = vadd.f32 %v2178, %v2371
        %v2519 = vadd.f32 %v2179, %v2375
        %v2520 = vadd.f32 %v2180, %v2315
        %v2521 = vadd.f32 %v2181, %v2319
        %v2522 = vadd.f32 %v2182, %v2323
        %v2523 = vadd.f32 %v2183, %v2327
        %v2524 = vadd.f32 %v2184, %v2331
        %v2525 = vadd.f32 %v2185, %v2335
        %v2526 = vadd.f32 %v2186, %v2339
        %v2527 = vadd.f32 %v2187, %v2343
        %v2528 = vadd.f32 %v2188, %v2347
        %v2529 = vadd.f32 %v2189, %v2351
        %v2530 = vadd.f32 %v2190, %v2355
        %v2531 = vadd.f32 %v2191, %v2359
        %v2532 = vadd.f32 %v2192, %v2363
        %v2533 = vadd.f32 %v2193, %v2367
        %v2534 = vadd.f32 %v2194, %v2371
        %v2535 = vadd.f32 %v2195, %v2375
        %v2536 = vadd.f32 %v2196, %v2315
        %v2537 = vadd.f32 %v2197, %v2319
        %v2538 = vadd.f32 %v2198, %v2323
        %v2539 = vadd.f32 %v2199, %v2327
        %v2540 = vadd.f32 %v2200, %v2331
        %v2541 = vadd.f32 %v2201, %v2335
        %v2542 = vadd.f32 %v2202, %v2339
        %v2543 = vadd.f32 %v2203, %v2343
        %v2544 = vadd.f32 %v2204, %v2347
        %v2545 = vadd.f32 %v2205, %v2351
        %v2546 = vadd.f32 %v2206, %v2355
        %v2547 = vadd.f32 %v2207, %v2359
        %v2548 = vadd.f32 %v2208, %v2363
        %v2549 = vadd.f32 %v2209, %v2367
        %v2550 = vadd.f32 %v2210, %v2371
        %v2551 = vadd.f32 %v2211, %v2375
        %v2552 = vadd.f32 %v2212, %v2315
        %v2553 = vadd.f32 %v2213, %v2319
        %v2554 = vadd.f32 %v2214, %v2323
        %v2555 = vadd.f32 %v2215, %v2327
        %v2556 = vadd.f32 %v2216, %v2331
        %v2557 = vadd.f32 %v2217, %v2335
        %v2558 = vadd.f32 %v2218, %v2339
        %v2559 = vadd.f32 %v2219, %v2343
        %v2560 = vadd.f32 %v2220, %v2347
        %v2561 = vadd.f32 %v2221, %v2351
        %v2562 = vadd.f32 %v2222, %v2355
        %v2563 = vadd.f32 %v2223, %v2359
        %v2564 = vadd.f32 %v2224, %v2363
        %v2565 = vadd.f32 %v2225, %v2367
        %v2566 = vadd.f32 %v2226, %v2371
        %v2567 = vadd.f32 %v2227, %v2375
        %v2568 = vadd.f32 %v2228, %v2315
        %v2569 = vadd.f32 %v2229, %v2319
        %v2570 = vadd.f32 %v2230, %v2323
        %v2571 = vadd.f32 %v2231, %v2327
        %v2572 = vadd.f32 %v2232, %v2331
        %v2573 = vadd.f32 %v2233, %v2335
        %v2574 = vadd.f32 %v2234, %v2339
        %v2575 = vadd.f32 %v2235, %v2343
        %v2576 = vadd.f32 %v2236, %v2347
        %v2577 = vadd.f32 %v2237, %v2351
        %v2578 = vadd.f32 %v2238, %v2355
        %v2579 = vadd.f32 %v2239, %v2359
        %v2580 = vadd.f32 %v2240, %v2363
        %v2581 = vadd.f32 %v2241, %v2367
        %v2582 = vadd.f32 %v2242, %v2371
        %v2583 = vadd.f32 %v2243, %v2375
        %v2584 = vadd.f32 %v2244, %v2315
        %v2585 = vadd.f32 %v2245, %v2319
        %v2586 = vadd.f32 %v2246, %v2323
        %v2587 = vadd.f32 %v2247, %v2327
        %v2588 = vadd.f32 %v2248, %v2331
        %v2589 = vadd.f32 %v2249, %v2335
        %v2590 = vadd.f32 %v2250, %v2339
        %v2591 = vadd.f32 %v2251, %v2343
        %v2592 = vadd.f32 %v2252, %v2347
        %v2593 = vadd.f32 %v2253, %v2351
        %v2594 = vadd.f32 %v2254, %v2355
        %v2595 = vadd.f32 %v2255, %v2359
        %v2596 = vadd.f32 %v2256, %v2363
        %v2597 = vadd.f32 %v2257, %v2367
        %v2598 = vadd.f32 %v2258, %v2371
        %v2599 = vadd.f32 %v2259, %v2375
        %v2600 = vadd.f32 %v2260, %v2315
        %v2601 = vadd.f32 %v2261, %v2319
        %v2602 = vadd.f32 %v2262, %v2323
        %v2603 = vadd.f32 %v2263, %v2327
        %v2604 = vadd.f32 %v2264, %v2331
        %v2605 = vadd.f32 %v2265, %v2335
        %v2606 = vadd.f32 %v2266, %v2339
        %v2607 = vadd.f32 %v2267, %v2343
        %v2608 = vadd.f32 %v2268, %v2347
        %v2609 = vadd.f32 %v2269, %v2351
        %v2610 = vadd.f32 %v2270, %v2355
        %v2611 = vadd.f32 %v2271, %v2359
        %v2612 = vadd.f32 %v2272, %v2363
        %v2613 = vadd.f32 %v2273, %v2367
        %v2614 = vadd.f32 %v2274, %v2371
        %v2615 = vadd.f32 %v2275, %v2375
        %v2616 = vadd.f32 %v2276, %v2315
        %v2617 = vadd.f32 %v2277, %v2319
        %v2618 = vadd.f32 %v2278, %v2323
        %v2619 = vadd.f32 %v2279, %v2327
        %v2620 = vadd.f32 %v2280, %v2331
        %v2621 = vadd.f32 %v2281, %v2335
        %v2622 = vadd.f32 %v2282, %v2339
        %v2623 = vadd.f32 %v2283, %v2343
        %v2624 = vadd.f32 %v2284, %v2347
        %v2625 = vadd.f32 %v2285, %v2351
        %v2626 = vadd.f32 %v2286, %v2355
        %v2627 = vadd.f32 %v2287, %v2359
        %v2628 = vadd.f32 %v2288, %v2363
        %v2629 = vadd.f32 %v2289, %v2367
        %v2630 = vadd.f32 %v2290, %v2371
        %v2631 = vadd.f32 %v2291, %v2375
        %v2632 = vadd.f32 %v2292, %v2315
        %v2633 = vadd.f32 %v2293, %v2319
        %v2634 = vadd.f32 %v2294, %v2323
        %v2635 = vadd.f32 %v2295, %v2327
        %v2636 = vadd.f32 %v2296, %v2331
        %v2637 = vadd.f32 %v2297, %v2335
        %v2638 = vadd.f32 %v2298, %v2339
        %v2639 = vadd.f32 %v2299, %v2343
        %v2640 = vadd.f32 %v2300, %v2347
        %v2641 = vadd.f32 %v2301, %v2351
        %v2642 = vadd.f32 %v2302, %v2355
        %v2643 = vadd.f32 %v2303, %v2359
        %v2644 = vadd.f32 %v2304, %v2363
        %v2645 = vadd.f32 %v2305, %v2367
        %v2646 = vadd.f32 %v2306, %v2371
        %v2647 = vadd.f32 %v2307, %v2375
        %v2648 = vmax.f32 %v2392, 0.0
        %v2649 = vmax.f32 %v2393, 0.0
        %v2650 = vmax.f32 %v2394, 0.0
        %v2651 = vmax.f32 %v2395, 0.0
        %v2652 = vmax.f32 %v2396, 0.0
        %v2653 = vmax.f32 %v2397, 0.0
        %v2654 = vmax.f32 %v2398, 0.0
        %v2655 = vmax.f32 %v2399, 0.0
        %v2656 = vmax.f32 %v2400, 0.0
        %v2657 = vmax.f32 %v2401, 0.0
        %v2658 = vmax.f32 %v2402, 0.0
        %v2659 = vmax.f32 %v2403, 0.0
        %v2660 = vmax.f32 %v2404, 0.0
        %v2661 = vmax.f32 %v2405, 0.0
        %v2662 = vmax.f32 %v2406, 0.0
        %v2663 = vmax.f32 %v2407, 0.0
        %v2664 = vmax.f32 %v2408, 0.0
        %v2665 = vmax.f32 %v2409, 0.0
        %v2666 = vmax.f32 %v2410, 0.0
        %v2667 = vmax.f32 %v2411, 0.0
        %v2668 = vmax.f32 %v2412, 0.0
        %v2669 = vmax.f32 %v2413, 0.0
        %v2670 = vmax.f32 %v2414, 0.0
        %v2671 = vmax.f32 %v2415, 0.0
        %v2672 = vmax.f32 %v2416, 0.0
        %v2673 = vmax.f32 %v2417, 0.0
        %v2674 = vmax.f32 %v2418, 0.0
        %v2675 = vmax.f32 %v2419, 0.0
        %v2676 = vmax.f32 %v2420, 0.0
        %v2677 = vmax.f32 %v2421, 0.0
        %v2678 = vmax.f32 %v2422, 0.0
        %v2679 = vmax.f32 %v2423, 0.0
        %v2680 = vmax.f32 %v2424, 0.0
        %v2681 = vmax.f32 %v2425, 0.0
        %v2682 = vmax.f32 %v2426, 0.0
        %v2683 = vmax.f32 %v2427, 0.0
        %v2684 = vmax.f32 %v2428, 0.0
        %v2685 = vmax.f32 %v2429, 0.0
        %v2686 = vmax.f32 %v2430, 0.0
        %v2687 = vmax.f32 %v2431, 0.0
        %v2688 = vmax.f32 %v2432, 0.0
        %v2689 = vmax.f32 %v2433, 0.0
        %v2690 = vmax.f32 %v2434, 0.0
        %v2691 = vmax.f32 %v2435, 0.0
        %v2692 = vmax.f32 %v2436, 0.0
        %v2693 = vmax.f32 %v2437, 0.0
        %v2694 = vmax.f32 %v2438, 0.0
        %v2695 = vmax.f32 %v2439, 0.0
        %v2696 = vmax.f32 %v2440, 0.0
        %v2697 = vmax.f32 %v2441, 0.0
        %v2698 = vmax.f32 %v2442, 0.0
        %v2699 = vmax.f32 %v2443, 0.0
        %v2700 = vmax.f32 %v2444, 0.0
        %v2701 = vmax.f32 %v2445, 0.0
        %v2702 = vmax.f32 %v2446, 0.0
        %v2703 = vmax.f32 %v2447, 0.0
        %v2704 = vmax.f32 %v2448, 0.0
        %v2705 = vmax.f32 %v2449, 0.0
        %v2706 = vmax.f32 %v2450, 0.0
        %v2707 = vmax.f32 %v2451, 0.0
        %v2708 = vmax.f32 %v2452, 0.0
        %v2709 = vmax.f32 %v2453, 0.0
        %v2710 = vmax.f32 %v2454, 0.0
        %v2711 = vmax.f32 %v2455, 0.0
        %v2712 = vmax.f32 %v2456, 0.0
        %v2713 = vmax.f32 %v2457, 0.0
        %v2714 = vmax.f32 %v2458, 0.0
        %v2715 = vmax.f32 %v2459, 0.0
        %v2716 = vmax.f32 %v2460, 0.0
        %v2717 = vmax.f32 %v2461, 0.0
        %v2718 = vmax.f32 %v2462, 0.0
        %v2719 = vmax.f32 %v2463, 0.0
        %v2720 = vmax.f32 %v2464, 0.0
        %v2721 = vmax.f32 %v2465, 0.0
        %v2722 = vmax.f32 %v2466, 0.0
        %v2723 = vmax.f32 %v2467, 0.0
        %v2724 = vmax.f32 %v2468, 0.0
        %v2725 = vmax.f32 %v2469, 0.0
        %v2726 = vmax.f32 %v2470, 0.0
        %v2727 = vmax.f32 %v2471, 0.0
        %v2728 = vmax.f32 %v2472, 0.0
        %v2729 = vmax.f32 %v2473, 0.0
        %v2730 = vmax.f32 %v2474, 0.0
        %v2731 = vmax.f32 %v2475, 0.0
        %v2732 = vmax.f32 %v2476, 0.0
        %v2733 = vmax.f32 %v2477, 0.0
        %v2734 = vmax.f32 %v2478, 0.0
        %v2735 = vmax.f32 %v2479, 0.0
        %v2736 = vmax.f32 %v2480, 0.0
        %v2737 = vmax.f32 %v2481, 0.0
        %v2738 = vmax.f32 %v2482, 0.0
        %v2739 = vmax.f32 %v2483, 0.0
        %v2740 = vmax.f32 %v2484, 0.0
        %v2741 = vmax.f32 %v2485, 0.0
        %v2742 = vmax.f32 %v2486, 0.0
        %v2743 = vmax.f32 %v2487, 0.0
        %v2744 = vmax.f32 %v2488, 0.0
        %v2745 = vmax.f32 %v2489, 0.0
        %v2746 = vmax.f32 %v2490, 0.0
        %v2747 = vmax.f32 %v2491, 0.0
        %v2748 = vmax.f32 %v2492, 0.0
        %v2749 = vmax.f32 %v2493, 0.0
        %v2750 = vmax.f32 %v2494, 0.0
        %v2751 = vmax.f32 %v2495, 0.0
        %v2752 = vmax.f32 %v2496, 0.0
        %v2753 = vmax.f32 %v2497, 0.0
        %v2754 = vmax.f32 %v2498, 0.0
        %v2755 = vmax.f32 %v2499, 0.0
        %v2756 = vmax.f32 %v2500, 0.0
        %v2757 = vmax.f32 %v2501, 0.0
        %v2758 = vmax.f32 %v2502, 0.0
        %v2759 = vmax.f32 %v2503, 0.0
        %v2760 = vmax.f32 %v2504, 0.0
        %v2761 = vmax.f32 %v2505, 0.0
        %v2762 = vmax.f32 %v2506, 0.0
        %v2763 = vmax.f32 %v2507, 0.0
        %v2764 = vmax.f32 %v2508, 0.0
        %v2765 = vmax.f32 %v2509, 0.0
        %v2766 = vmax.f32 %v2510, 0.0
        %v2767 = vmax.f32 %v2511, 0.0
        %v2768 = vmax.f32 %v2512, 0.0
        %v2769 = vmax.f32 %v2513, 0.0
        %v2770 = vmax.f32 %v2514, 0.0
        %v2771 = vmax.f32 %v2515, 0.0
        %v2772 = vmax.f32 %v2516, 0.0
        %v2773 = vmax.f32 %v2517, 0.0
        %v2774 = vmax.f32 %v2518, 0.0
        %v2775 = vmax.f32 %v2519, 0.0
        %v2776 = vmax.f32 %v2520, 0.0
        %v2777 = vmax.f32 %v2521, 0.0
        %v2778 = vmax.f32 %v2522, 0.0
        %v2779 = vmax.f32 %v2523, 0.0
        %v2780 = vmax.f32 %v2524, 0.0
        %v2781 = vmax.f32 %v2525, 0.0
        %v2782 = vmax.f32 %v2526, 0.0
        %v2783 = vmax.f32 %v2527, 0.0
        %v2784 = vmax.f32 %v2528, 0.0
        %v2785 = vmax.f32 %v2529, 0.0
        %v2786 = vmax.f32 %v2530, 0.0
        %v2787 = vmax.f32 %v2531, 0.0
        %v2788 = vmax.f32 %v2532, 0.0
        %v2789 = vmax.f32 %v2533, 0.0
        %v2790 = vmax.f32 %v2534, 0.0
        %v2791 = vmax.f32 %v2535, 0.0
        %v2792 = vmax.f32 %v2536, 0.0
        %v2793 = vmax.f32 %v2537, 0.0
        %v2794 = vmax.f32 %v2538, 0.0
        %v2795 = vmax.f32 %v2539, 0.0
        %v2796 = vmax.f32 %v2540, 0.0
        %v2797 = vmax.f32 %v2541, 0.0
        %v2798 = vmax.f32 %v2542, 0.0
        %v2799 = vmax.f32 %v2543, 0.0
        %v2800 = vmax.f32 %v2544, 0.0
        %v2801 = vmax.f32 %v2545, 0.0
        %v2802 = vmax.f32 %v2546, 0.0
        %v2803 = vmax.f32 %v2547, 0.0
        %v2804 = vmax.f32 %v2548, 0.0
        %v2805 = vmax.f32 %v2549, 0.0
        %v2806 = vmax.f32 %v2550, 0.0
        %v2807 = vmax.f32 %v2551, 0.0
        %v2808 = vmax.f32 %v2552, 0.0
        %v2809 = vmax.f32 %v2553, 0.0
        %v2810 = vmax.f32 %v2554, 0.0
        %v2811 = vmax.f32 %v2555, 0.0
        %v2812 = vmax.f32 %v2556, 0.0
        %v2813 = vmax.f32 %v2557, 0.0
        %v2814 = vmax.f32 %v2558, 0.0
        %v2815 = vmax.f32 %v2559, 0.0
        %v2816 = vmax.f32 %v2560, 0.0
        %v2817 = vmax.f32 %v2561, 0.0
        %v2818 = vmax.f32 %v2562, 0.0
        %v2819 = vmax.f32 %v2563, 0.0
        %v2820 = vmax.f32 %v2564, 0.0
        %v2821 = vmax.f32 %v2565, 0.0
        %v2822 = vmax.f32 %v2566, 0.0
        %v2823 = vmax.f32 %v2567, 0.0
        %v2824 = vmax.f32 %v2568, 0.0
        %v2825 = vmax.f32 %v2569, 0.0
        %v2826 = vmax.f32 %v2570, 0.0
        %v2827 = vmax.f32 %v2571, 0.0
        %v2828 = vmax.f32 %v2572, 0.0
        %v2829 = vmax.f32 %v2573, 0.0
        %v2830 = vmax.f32 %v2574, 0.0
        %v2831 = vmax.f32 %v2575, 0.0
        %v2832 = vmax.f32 %v2576, 0.0
        %v2833 = vmax.f32 %v2577, 0.0
        %v2834 = vmax.f32 %v2578, 0.0
        %v2835 = vmax.f32 %v2579, 0.0
        %v2836 = vmax.f32 %v2580, 0.0
        %v2837 = vmax.f32 %v2581, 0.0
        %v2838 = vmax.f32 %v2582, 0.0
        %v2839 = vmax.f32 %v2583, 0.0
        %v2840 = vmax.f32 %v2584, 0.0
        %v2841 = vmax.f32 %v2585, 0.0
        %v2842 = vmax.f32 %v2586, 0.0
        %v2843 = vmax.f32 %v2587, 0.0
        %v2844 = vmax.f32 %v2588, 0.0
        %v2845 = vmax.f32 %v2589, 0.0
        %v2846 = vmax.f32 %v2590, 0.0
        %v2847 = vmax.f32 %v2591, 0.0
        %v2848 = vmax.f32 %v2592, 0.0
        %v2849 = vmax.f32 %v2593, 0.0
        %v2850 = vmax.f32 %v2594, 0.0
        %v2851 = vmax.f32 %v2595, 0.0
        %v2852 = vmax.f32 %v2596, 0.0
        %v2853 = vmax.f32 %v2597, 0.0
        %v2854 = vmax.f32 %v2598, 0.0
        %v2855 = vmax.f32 %v2599, 0.0
        %v2856 = vmax.f32 %v2600, 0.0
        %v2857 = vmax.f32 %v2601, 0.0
        %v2858 = vmax.f32 %v2602, 0.0
        %v2859 = vmax.f32 %v2603, 0.0
        %v2860 = vmax.f32 %v2604, 0.0
        %v2861 = vmax.f32 %v2605, 0.0
        %v2862 = vmax.f32 %v2606, 0.0
        %v2863 = vmax.f32 %v2607, 0.0
        %v2864 = vmax.f32 %v2608, 0.0
        %v2865 = vmax.f32 %v2609, 0.0
        %v2866 = vmax.f32 %v2610, 0.0
        %v2867 = vmax.f32 %v2611, 0.0
        %v2868 = vmax.f32 %v2612, 0.0
        %v2869 = vmax.f32 %v2613, 0.0
        %v2870 = vmax.f32 %v2614, 0.0
        %v2871 = vmax.f32 %v2615, 0.0
        %v2872 = vmax.f32 %v2616, 0.0
        %v2873 = vmax.f32 %v2617, 0.0
        %v2874 = vmax.f32 %v2618, 0.0
        %v2875 = vmax.f32 %v2619, 0.0
        %v2876 = vmax.f32 %v2620, 0.0
        %v2877 = vmax.f32 %v2621, 0.0
        %v2878 = vmax.f32 %v2622, 0.0
        %v2879 = vmax.f32 %v2623, 0.0
        %v2880 = vmax.f32 %v2624, 0.0
        %v2881 = vmax.f32 %v2625, 0.0
        %v2882 = vmax.f32 %v2626, 0.0
        %v2883 = vmax.f32 %v2627, 0.0
        %v2884 = vmax.f32 %v2628, 0.0
        %v2885 = vmax.f32 %v2629, 0.0
        %v2886 = vmax.f32 %v2630, 0.0
        %v2887 = vmax.f32 %v2631, 0.0
        %v2888 = vmax.f32 %v2632, 0.0
        %v2889 = vmax.f32 %v2633, 0.0
        %v2890 = vmax.f32 %v2634, 0.0
        %v2891 = vmax.f32 %v2635, 0.0
        %v2892 = vmax.f32 %v2636, 0.0
        %v2893 = vmax.f32 %v2637, 0.0
        %v2894 = vmax.f32 %v2638, 0.0
        %v2895 = vmax.f32 %v2639, 0.0
        %v2896 = vmax.f32 %v2640, 0.0
        %v2897 = vmax.f32 %v2641, 0.0
        %v2898 = vmax.f32 %v2642, 0.0
        %v2899 = vmax.f32 %v2643, 0.0
        %v2900 = vmax.f32 %v2644, 0.0
        %v2901 = vmax.f32 %v2645, 0.0
        %v2902 = vmax.f32 %v2646, 0.0
        %v2903 = vmax.f32 %v2647, 0.0
        %v2904 = vadd.f32 %v2648, %v2664
        %v2905 = vadd.f32 %v2904, %v2680
        %v2906 = vadd.f32 %v2905, %v2696
        %v2907 = vadd.f32 %v2906, %v2712
        %v2908 = vadd.f32 %v2907, %v2728
        %v2909 = vadd.f32 %v2908, %v2744
        %v2910 = vadd.f32 %v2909, %v2760
        %v2911 = vrot.slane %v2910, 4
        %v2912 = vadd.f32 %v2910, %v2911
        %v2913 = vrot.slane %v2912, 2
        %v2914 = vadd.f32 %v2912, %v2913
        %v2915 = vrot.slane %v2914, 1
        %v2916 = vadd.f32 %v2914, %v2915
        %v2917 = vadd.f32 %v2649, %v2665
        %v2918 = vadd.f32 %v2917, %v2681
        %v2919 = vadd.f32 %v2918, %v2697
        %v2920 = vadd.f32 %v2919, %v2713
        %v2921 = vadd.f32 %v2920, %v2729
        %v2922 = vadd.f32 %v2921, %v2745
        %v2923 = vadd.f32 %v2922, %v2761
        %v2924 = vrot.slane %v2923, 4
        %v2925 = vadd.f32 %v2923, %v2924
        %v2926 = vrot.slane %v2925, 2
        %v2927 = vadd.f32 %v2925, %v2926
        %v2928 = vrot.slane %v2927, 1
        %v2929 = vadd.f32 %v2927, %v2928
        %v2930 = vadd.f32 %v2650, %v2666
        %v2931 = vadd.f32 %v2930, %v2682
        %v2932 = vadd.f32 %v2931, %v2698
        %v2933 = vadd.f32 %v2932, %v2714
        %v2934 = vadd.f32 %v2933, %v2730
        %v2935 = vadd.f32 %v2934, %v2746
        %v2936 = vadd.f32 %v2935, %v2762
        %v2937 = vrot.slane %v2936, 4
        %v2938 = vadd.f32 %v2936, %v2937
        %v2939 = vrot.slane %v2938, 2
        %v2940 = vadd.f32 %v2938, %v2939
        %v2941 = vrot.slane %v2940, 1
        %v2942 = vadd.f32 %v2940, %v2941
        %v2943 = vadd.f32 %v2651, %v2667
        %v2944 = vadd.f32 %v2943, %v2683
        %v2945 = vadd.f32 %v2944, %v2699
        %v2946 = vadd.f32 %v2945, %v2715
        %v2947 = vadd.f32 %v2946, %v2731
        %v2948 = vadd.f32 %v2947, %v2747
        %v2949 = vadd.f32 %v2948, %v2763
        %v2950 = vrot.slane %v2949, 4
        %v2951 = vadd.f32 %v2949, %v2950
        %v2952 = vrot.slane %v2951, 2
        %v2953 = vadd.f32 %v2951, %v2952
        %v2954 = vrot.slane %v2953, 1
        %v2955 = vadd.f32 %v2953, %v2954
        %v2956 = vadd.f32 %v2652, %v2668
        %v2957 = vadd.f32 %v2956, %v2684
        %v2958 = vadd.f32 %v2957, %v2700
        %v2959 = vadd.f32 %v2958, %v2716
        %v2960 = vadd.f32 %v2959, %v2732
        %v2961 = vadd.f32 %v2960, %v2748
        %v2962 = vadd.f32 %v2961, %v2764
        %v2963 = vrot.slane %v2962, 4
        %v2964 = vadd.f32 %v2962, %v2963
        %v2965 = vrot.slane %v2964, 2
        %v2966 = vadd.f32 %v2964, %v2965
        %v2967 = vrot.slane %v2966, 1
        %v2968 = vadd.f32 %v2966, %v2967
        %v2969 = vadd.f32 %v2653, %v2669
        %v2970 = vadd.f32 %v2969, %v2685
        %v2971 = vadd.f32 %v2970, %v2701
        %v2972 = vadd.f32 %v2971, %v2717
        %v2973 = vadd.f32 %v2972, %v2733
        %v2974 = vadd.f32 %v2973, %v2749
        %v2975 = vadd.f32 %v2974, %v2765
        %v2976 = vrot.slane %v2975, 4
        %v2977 = vadd.f32 %v2975, %v2976
        %v2978 = vrot.slane %v2977, 2
        %v2979 = vadd.f32 %v2977, %v2978
        %v2980 = vrot.slane %v2979, 1
        %v2981 = vadd.f32 %v2979, %v2980
        %v2982 = vadd.f32 %v2654, %v2670
        %v2983 = vadd.f32 %v2982, %v2686
        %v2984 = vadd.f32 %v2983, %v2702
        %v2985 = vadd.f32 %v2984, %v2718
        %v2986 = vadd.f32 %v2985, %v2734
        %v2987 = vadd.f32 %v2986, %v2750
        %v2988 = vadd.f32 %v2987, %v2766
        %v2989 = vrot.slane %v2988, 4
        %v2990 = vadd.f32 %v2988, %v2989
        %v2991 = vrot.slane %v2990, 2
        %v2992 = vadd.f32 %v2990, %v2991
        %v2993 = vrot.slane %v2992, 1
        %v2994 = vadd.f32 %v2992, %v2993
        %v2995 = vadd.f32 %v2655, %v2671
        %v2996 = vadd.f32 %v2995, %v2687
        %v2997 = vadd.f32 %v2996, %v2703
        %v2998 = vadd.f32 %v2997, %v2719
        %v2999 = vadd.f32 %v2998, %v2735
        %v3000 = vadd.f32 %v2999, %v2751
        %v3001 = vadd.f32 %v3000, %v2767
        %v3002 = vrot.slane %v3001, 4
        %v3003 = vadd.f32 %v3001, %v3002
        %v3004 = vrot.slane %v3003, 2
        %v3005 = vadd.f32 %v3003, %v3004
        %v3006 = vrot.slane %v3005, 1
        %v3007 = vadd.f32 %v3005, %v3006
        %v3008 = vadd.f32 %v2656, %v2672
        %v3009 = vadd.f32 %v3008, %v2688
        %v3010 = vadd.f32 %v3009, %v2704
        %v3011 = vadd.f32 %v3010, %v2720
        %v3012 = vadd.f32 %v3011, %v2736
        %v3013 = vadd.f32 %v3012, %v2752
        %v3014 = vadd.f32 %v3013, %v2768
        %v3015 = vrot.slane %v3014, 4
        %v3016 = vadd.f32 %v3014, %v3015
        %v3017 = vrot.slane %v3016, 2
        %v3018 = vadd.f32 %v3016, %v3017
        %v3019 = vrot.slane %v3018, 1
        %v3020 = vadd.f32 %v3018, %v3019
        %v3021 = vadd.f32 %v2657, %v2673
        %v3022 = vadd.f32 %v3021, %v2689
        %v3023 = vadd.f32 %v3022, %v2705
        %v3024 = vadd.f32 %v3023, %v2721
        %v3025 = vadd.f32 %v3024, %v2737
        %v3026 = vadd.f32 %v3025, %v2753
        %v3027 = vadd.f32 %v3026, %v2769
        %v3028 = vrot.slane %v3027, 4
        %v3029 = vadd.f32 %v3027, %v3028
        %v3030 = vrot.slane %v3029, 2
        %v3031 = vadd.f32 %v3029, %v3030
        %v3032 = vrot.slane %v3031, 1
        %v3033 = vadd.f32 %v3031, %v3032
        %v3034 = vadd.f32 %v2658, %v2674
        %v3035 = vadd.f32 %v3034, %v2690
        %v3036 = vadd.f32 %v3035, %v2706
        %v3037 = vadd.f32 %v3036, %v2722
        %v3038 = vadd.f32 %v3037, %v2738
        %v3039 = vadd.f32 %v3038, %v2754
        %v3040 = vadd.f32 %v3039, %v2770
        %v3041 = vrot.slane %v3040, 4
        %v3042 = vadd.f32 %v3040, %v3041
        %v3043 = vrot.slane %v3042, 2
        %v3044 = vadd.f32 %v3042, %v3043
        %v3045 = vrot.slane %v3044, 1
        %v3046 = vadd.f32 %v3044, %v3045
        %v3047 = vadd.f32 %v2659, %v2675
        %v3048 = vadd.f32 %v3047, %v2691
        %v3049 = vadd.f32 %v3048, %v2707
        %v3050 = vadd.f32 %v3049, %v2723
        %v3051 = vadd.f32 %v3050, %v2739
        %v3052 = vadd.f32 %v3051, %v2755
        %v3053 = vadd.f32 %v3052, %v2771
        %v3054 = vrot.slane %v3053, 4
        %v3055 = vadd.f32 %v3053, %v3054
        %v3056 = vrot.slane %v3055, 2
        %v3057 = vadd.f32 %v3055, %v3056
        %v3058 = vrot.slane %v3057, 1
        %v3059 = vadd.f32 %v3057, %v3058
        %v3060 = vadd.f32 %v2660, %v2676
        %v3061 = vadd.f32 %v3060, %v2692
        %v3062 = vadd.f32 %v3061, %v2708
        %v3063 = vadd.f32 %v3062, %v2724
        %v3064 = vadd.f32 %v3063, %v2740
        %v3065 = vadd.f32 %v3064, %v2756
        %v3066 = vadd.f32 %v3065, %v2772
        %v3067 = vrot.slane %v3066, 4
        %v3068 = vadd.f32 %v3066, %v3067
        %v3069 = vrot.slane %v3068, 2
        %v3070 = vadd.f32 %v3068, %v3069
        %v3071 = vrot.slane %v3070, 1
        %v3072 = vadd.f32 %v3070, %v3071
        %v3073 = vadd.f32 %v2661, %v2677
        %v3074 = vadd.f32 %v3073, %v2693
        %v3075 = vadd.f32 %v3074, %v2709
        %v3076 = vadd.f32 %v3075, %v2725
        %v3077 = vadd.f32 %v3076, %v2741
        %v3078 = vadd.f32 %v3077, %v2757
        %v3079 = vadd.f32 %v3078, %v2773
        %v3080 = vrot.slane %v3079, 4
        %v3081 = vadd.f32 %v3079, %v3080
        %v3082 = vrot.slane %v3081, 2
        %v3083 = vadd.f32 %v3081, %v3082
        %v3084 = vrot.slane %v3083, 1
        %v3085 = vadd.f32 %v3083, %v3084
        %v3086 = vadd.f32 %v2662, %v2678
        %v3087 = vadd.f32 %v3086, %v2694
        %v3088 = vadd.f32 %v3087, %v2710
        %v3089 = vadd.f32 %v3088, %v2726
        %v3090 = vadd.f32 %v3089, %v2742
        %v3091 = vadd.f32 %v3090, %v2758
        %v3092 = vadd.f32 %v3091, %v2774
        %v3093 = vrot.slane %v3092, 4
        %v3094 = vadd.f32 %v3092, %v3093
        %v3095 = vrot.slane %v3094, 2
        %v3096 = vadd.f32 %v3094, %v3095
        %v3097 = vrot.slane %v3096, 1
        %v3098 = vadd.f32 %v3096, %v3097
        %v3099 = vadd.f32 %v2663, %v2679
        %v3100 = vadd.f32 %v3099, %v2695
        %v3101 = vadd.f32 %v3100, %v2711
        %v3102 = vadd.f32 %v3101, %v2727
        %v3103 = vadd.f32 %v3102, %v2743
        %v3104 = vadd.f32 %v3103, %v2759
        %v3105 = vadd.f32 %v3104, %v2775
        %v3106 = vrot.slane %v3105, 4
        %v3107 = vadd.f32 %v3105, %v3106
        %v3108 = vrot.slane %v3107, 2
        %v3109 = vadd.f32 %v3107, %v3108
        %v3110 = vrot.slane %v3109, 1
        %v3111 = vadd.f32 %v3109, %v3110
        %v3112 = vadd.f32 %v2776, %v2792
        %v3113 = vadd.f32 %v3112, %v2808
        %v3114 = vadd.f32 %v3113, %v2824
        %v3115 = vadd.f32 %v3114, %v2840
        %v3116 = vadd.f32 %v3115, %v2856
        %v3117 = vadd.f32 %v3116, %v2872
        %v3118 = vadd.f32 %v3117, %v2888
        %v3119 = vrot.slane %v3118, 4
        %v3120 = vadd.f32 %v3118, %v3119
        %v3121 = vrot.slane %v3120, 2
        %v3122 = vadd.f32 %v3120, %v3121
        %v3123 = vrot.slane %v3122, 1
        %v3124 = vadd.f32 %v3122, %v3123
        %v3125 = vadd.f32 %v2777, %v2793
        %v3126 = vadd.f32 %v3125, %v2809
        %v3127 = vadd.f32 %v3126, %v2825
        %v3128 = vadd.f32 %v3127, %v2841
        %v3129 = vadd.f32 %v3128, %v2857
        %v3130 = vadd.f32 %v3129, %v2873
        %v3131 = vadd.f32 %v3130, %v2889
        %v3132 = vrot.slane %v3131, 4
        %v3133 = vadd.f32 %v3131, %v3132
        %v3134 = vrot.slane %v3133, 2
        %v3135 = vadd.f32 %v3133, %v3134
        %v3136 = vrot.slane %v3135, 1
        %v3137 = vadd.f32 %v3135, %v3136
        %v3138 = vadd.f32 %v2778, %v2794
        %v3139 = vadd.f32 %v3138, %v2810
        %v3140 = vadd.f32 %v3139, %v2826
        %v3141 = vadd.f32 %v3140, %v2842
        %v3142 = vadd.f32 %v3141, %v2858
        %v3143 = vadd.f32 %v3142, %v2874
        %v3144 = vadd.f32 %v3143, %v2890
        %v3145 = vrot.slane %v3144, 4
        %v3146 = vadd.f32 %v3144, %v3145
        %v3147 = vrot.slane %v3146, 2
        %v3148 = vadd.f32 %v3146, %v3147
        %v3149 = vrot.slane %v3148, 1
        %v3150 = vadd.f32 %v3148, %v3149
        %v3151 = vadd.f32 %v2779, %v2795
        %v3152 = vadd.f32 %v3151, %v2811
        %v3153 = vadd.f32 %v3152, %v2827
        %v3154 = vadd.f32 %v3153, %v2843
        %v3155 = vadd.f32 %v3154, %v2859
        %v3156 = vadd.f32 %v3155, %v2875
        %v3157 = vadd.f32 %v3156, %v2891
        %v3158 = vrot.slane %v3157, 4
        %v3159 = vadd.f32 %v3157, %v3158
        %v3160 = vrot.slane %v3159, 2
        %v3161 = vadd.f32 %v3159, %v3160
        %v3162 = vrot.slane %v3161, 1
        %v3163 = vadd.f32 %v3161, %v3162
        %v3164 = vadd.f32 %v2780, %v2796
        %v3165 = vadd.f32 %v3164, %v2812
        %v3166 = vadd.f32 %v3165, %v2828
        %v3167 = vadd.f32 %v3166, %v2844
        %v3168 = vadd.f32 %v3167, %v2860
        %v3169 = vadd.f32 %v3168, %v2876
        %v3170 = vadd.f32 %v3169, %v2892
        %v3171 = vrot.slane %v3170, 4
        %v3172 = vadd.f32 %v3170, %v3171
        %v3173 = vrot.slane %v3172, 2
        %v3174 = vadd.f32 %v3172, %v3173
        %v3175 = vrot.slane %v3174, 1
        %v3176 = vadd.f32 %v3174, %v3175
        %v3177 = vadd.f32 %v2781, %v2797
        %v3178 = vadd.f32 %v3177, %v2813
        %v3179 = vadd.f32 %v3178, %v2829
        %v3180 = vadd.f32 %v3179, %v2845
        %v3181 = vadd.f32 %v3180, %v2861
        %v3182 = vadd.f32 %v3181, %v2877
        %v3183 = vadd.f32 %v3182, %v2893
        %v3184 = vrot.slane %v3183, 4
        %v3185 = vadd.f32 %v3183, %v3184
        %v3186 = vrot.slane %v3185, 2
        %v3187 = vadd.f32 %v3185, %v3186
        %v3188 = vrot.slane %v3187, 1
        %v3189 = vadd.f32 %v3187, %v3188
        %v3190 = vadd.f32 %v2782, %v2798
        %v3191 = vadd.f32 %v3190, %v2814
        %v3192 = vadd.f32 %v3191, %v2830
        %v3193 = vadd.f32 %v3192, %v2846
        %v3194 = vadd.f32 %v3193, %v2862
        %v3195 = vadd.f32 %v3194, %v2878
        %v3196 = vadd.f32 %v3195, %v2894
        %v3197 = vrot.slane %v3196, 4
        %v3198 = vadd.f32 %v3196, %v3197
        %v3199 = vrot.slane %v3198, 2
        %v3200 = vadd.f32 %v3198, %v3199
        %v3201 = vrot.slane %v3200, 1
        %v3202 = vadd.f32 %v3200, %v3201
        %v3203 = vadd.f32 %v2783, %v2799
        %v3204 = vadd.f32 %v3203, %v2815
        %v3205 = vadd.f32 %v3204, %v2831
        %v3206 = vadd.f32 %v3205, %v2847
        %v3207 = vadd.f32 %v3206, %v2863
        %v3208 = vadd.f32 %v3207, %v2879
        %v3209 = vadd.f32 %v3208, %v2895
        %v3210 = vrot.slane %v3209, 4
        %v3211 = vadd.f32 %v3209, %v3210
        %v3212 = vrot.slane %v3211, 2
        %v3213 = vadd.f32 %v3211, %v3212
        %v3214 = vrot.slane %v3213, 1
        %v3215 = vadd.f32 %v3213, %v3214
        %v3216 = vadd.f32 %v2784, %v2800
        %v3217 = vadd.f32 %v3216, %v2816
        %v3218 = vadd.f32 %v3217, %v2832
        %v3219 = vadd.f32 %v3218, %v2848
        %v3220 = vadd.f32 %v3219, %v2864
        %v3221 = vadd.f32 %v3220, %v2880
        %v3222 = vadd.f32 %v3221, %v2896
        %v3223 = vrot.slane %v3222, 4
        %v3224 = vadd.f32 %v3222, %v3223
        %v3225 = vrot.slane %v3224, 2
        %v3226 = vadd.f32 %v3224, %v3225
        %v3227 = vrot.slane %v3226, 1
        %v3228 = vadd.f32 %v3226, %v3227
        %v3229 = vadd.f32 %v2785, %v2801
        %v3230 = vadd.f32 %v3229, %v2817
        %v3231 = vadd.f32 %v3230, %v2833
        %v3232 = vadd.f32 %v3231, %v2849
        %v3233 = vadd.f32 %v3232, %v2865
        %v3234 = vadd.f32 %v3233, %v2881
        %v3235 = vadd.f32 %v3234, %v2897
        %v3236 = vrot.slane %v3235, 4
        %v3237 = vadd.f32 %v3235, %v3236
        %v3238 = vrot.slane %v3237, 2
        %v3239 = vadd.f32 %v3237, %v3238
        %v3240 = vrot.slane %v3239, 1
        %v3241 = vadd.f32 %v3239, %v3240
        %v3242 = vadd.f32 %v2786, %v2802
        %v3243 = vadd.f32 %v3242, %v2818
        %v3244 = vadd.f32 %v3243, %v2834
        %v3245 = vadd.f32 %v3244, %v2850
        %v3246 = vadd.f32 %v3245, %v2866
        %v3247 = vadd.f32 %v3246, %v2882
        %v3248 = vadd.f32 %v3247, %v2898
        %v3249 = vrot.slane %v3248, 4
        %v3250 = vadd.f32 %v3248, %v3249
        %v3251 = vrot.slane %v3250, 2
        %v3252 = vadd.f32 %v3250, %v3251
        %v3253 = vrot.slane %v3252, 1
        %v3254 = vadd.f32 %v3252, %v3253
        %v3255 = vadd.f32 %v2787, %v2803
        %v3256 = vadd.f32 %v3255, %v2819
        %v3257 = vadd.f32 %v3256, %v2835
        %v3258 = vadd.f32 %v3257, %v2851
        %v3259 = vadd.f32 %v3258, %v2867
        %v3260 = vadd.f32 %v3259, %v2883
        %v3261 = vadd.f32 %v3260, %v2899
        %v3262 = vrot.slane %v3261, 4
        %v3263 = vadd.f32 %v3261, %v3262
        %v3264 = vrot.slane %v3263, 2
        %v3265 = vadd.f32 %v3263, %v3264
        %v3266 = vrot.slane %v3265, 1
        %v3267 = vadd.f32 %v3265, %v3266
        %v3268 = vadd.f32 %v2788, %v2804
        %v3269 = vadd.f32 %v3268, %v2820
        %v3270 = vadd.f32 %v3269, %v2836
        %v3271 = vadd.f32 %v3270, %v2852
        %v3272 = vadd.f32 %v3271, %v2868
        %v3273 = vadd.f32 %v3272, %v2884
        %v3274 = vadd.f32 %v3273, %v2900
        %v3275 = vrot.slane %v3274, 4
        %v3276 = vadd.f32 %v3274, %v3275
        %v3277 = vrot.slane %v3276, 2
        %v3278 = vadd.f32 %v3276, %v3277
        %v3279 = vrot.slane %v3278, 1
        %v3280 = vadd.f32 %v3278, %v3279
        %v3281 = vadd.f32 %v2789, %v2805
        %v3282 = vadd.f32 %v3281, %v2821
        %v3283 = vadd.f32 %v3282, %v2837
        %v3284 = vadd.f32 %v3283, %v2853
        %v3285 = vadd.f32 %v3284, %v2869
        %v3286 = vadd.f32 %v3285, %v2885
        %v3287 = vadd.f32 %v3286, %v2901
        %v3288 = vrot.slane %v3287, 4
        %v3289 = vadd.f32 %v3287, %v3288
        %v3290 = vrot.slane %v3289, 2
        %v3291 = vadd.f32 %v3289, %v3290
        %v3292 = vrot.slane %v3291, 1
        %v3293 = vadd.f32 %v3291, %v3292
        %v3294 = vadd.f32 %v2790, %v2806
        %v3295 = vadd.f32 %v3294, %v2822
        %v3296 = vadd.f32 %v3295, %v2838
        %v3297 = vadd.f32 %v3296, %v2854
        %v3298 = vadd.f32 %v3297, %v2870
        %v3299 = vadd.f32 %v3298, %v2886
        %v3300 = vadd.f32 %v3299, %v2902
        %v3301 = vrot.slane %v3300, 4
        %v3302 = vadd.f32 %v3300, %v3301
        %v3303 = vrot.slane %v3302, 2
        %v3304 = vadd.f32 %v3302, %v3303
        %v3305 = vrot.slane %v3304, 1
        %v3306 = vadd.f32 %v3304, %v3305
        %v3307 = vadd.f32 %v2791, %v2807
        %v3308 = vadd.f32 %v3307, %v2823
        %v3309 = vadd.f32 %v3308, %v2839
        %v3310 = vadd.f32 %v3309, %v2855
        %v3311 = vadd.f32 %v3310, %v2871
        %v3312 = vadd.f32 %v3311, %v2887
        %v3313 = vadd.f32 %v3312, %v2903
        %v3314 = vrot.slane %v3313, 4
        %v3315 = vadd.f32 %v3313, %v3314
        %v3316 = vrot.slane %v3315, 2
        %v3317 = vadd.f32 %v3315, %v3316
        %v3318 = vrot.slane %v3317, 1
        %v3319 = vadd.f32 %v3317, %v3318
        %v3320 = vmul.f32 %v2916, 0.015625
        %v3321 = vmul.f32 %v2929, 0.015625
        %v3322 = vmul.f32 %v2942, 0.015625
        %v3323 = vmul.f32 %v2955, 0.015625
        %v3324 = vmul.f32 %v2968, 0.015625
        %v3325 = vmul.f32 %v2981, 0.015625
        %v3326 = vmul.f32 %v2994, 0.015625
        %v3327 = vmul.f32 %v3007, 0.015625
        %v3328 = vmul.f32 %v3020, 0.015625
        %v3329 = vmul.f32 %v3033, 0.015625
        %v3330 = vmul.f32 %v3046, 0.015625
        %v3331 = vmul.f32 %v3059, 0.015625
        %v3332 = vmul.f32 %v3072, 0.015625
        %v3333 = vmul.f32 %v3085, 0.015625
        %v3334 = vmul.f32 %v3098, 0.015625
        %v3335 = vmul.f32 %v3111, 0.015625
        %v3336 = vmul.f32 %v3124, 0.015625
        %v3337 = vmul.f32 %v3137, 0.015625
        %v3338 = vmul.f32 %v3150, 0.015625
        %v3339 = vmul.f32 %v3163, 0.015625
        %v3340 = vmul.f32 %v3176, 0.015625
        %v3341 = vmul.f32 %v3189, 0.015625
        %v3342 = vmul.f32 %v3202, 0.015625
        %v3343 = vmul.f32 %v3215, 0.015625
        %v3344 = vmul.f32 %v3228, 0.015625
        %v3345 = vmul.f32 %v3241, 0.015625
        %v3346 = vmul.f32 %v3254, 0.015625
        %v3347 = vmul.f32 %v3267, 0.015625
        %v3348 = vmul.f32 %v3280, 0.015625
        %v3349 = vmul.f32 %v3293, 0.015625
        %v3350 = vmul.f32 %v3306, 0.015625
        %v3351 = vmul.f32 %v3319, 0.015625
        %v3352 = vld [vmem:[%s290] sm:$0xff]
        %v3353 = vld [vmem:[%s290 + $0x8] sm:$0xff]
        %v3354 = vld [vmem:[%s290 + $0x10] sm:$0xff]
        %v3355 = vld [vmem:[%s290 + $0x18] sm:$0xff]
        %v3356 = vld [vmem:[%s290 + $0x20] sm:$0xff]
        %v3357 = vld [vmem:[%s290 + $0x28] sm:$0xff]
        %v3358 = vld [vmem:[%s290 + $0x30] sm:$0xff]
        %v3359 = vld [vmem:[%s290 + $0x38] sm:$0xff]
        %v3360 = vld [vmem:[%s290 + $0x40] sm:$0xff]
        %v3361 = vld [vmem:[%s290 + $0x48] sm:$0xff]
        %v3362 = vld [vmem:[%s290 + $0x50] sm:$0xff]
        %v3363 = vld [vmem:[%s290 + $0x58] sm:$0xff]
        %v3364 = vld [vmem:[%s290 + $0x60] sm:$0xff]
        %v3365 = vld [vmem:[%s290 + $0x68] sm:$0xff]
        %v3366 = vld [vmem:[%s290 + $0x70] sm:$0xff]
        %v3367 = vld [vmem:[%s290 + $0x78] sm:$0xff]
        %v3368 = vld [vmem:[%s290 + $0x80] sm:$0xff]
        %v3369 = vld [vmem:[%s290 + $0x88] sm:$0xff]
        %v3370 = vld [vmem:[%s290 + $0x90] sm:$0xff]
        %v3371 = vld [vmem:[%s290 + $0x98] sm:$0xff]
        %v3372 = vld [vmem:[%s290 + $0xa0] sm:$0xff]
        %v3373 = vld [vmem:[%s290 + $0xa8] sm:$0xff]
        %v3374 = vld [vmem:[%s290 + $0xb0] sm:$0xff]
        %v3375 = vld [vmem:[%s290 + $0xb8] sm:$0xff]
        %v3376 = vld [vmem:[%s290 + $0xc0] sm:$0xff]
        %v3377 = vld [vmem:[%s290 + $0xc8] sm:$0xff]
        %v3378 = vld [vmem:[%s290 + $0xd0] sm:$0xff]
        %v3379 = vld [vmem:[%s290 + $0xd8] sm:$0xff]
        %v3380 = vld [vmem:[%s290 + $0xe0] sm:$0xff]
        %v3381 = vld [vmem:[%s290 + $0xe8] sm:$0xff]
        %v3382 = vld [vmem:[%s290 + $0xf0] sm:$0xff]
        %v3383 = vld [vmem:[%s290 + $0xf8] sm:$0xff]
        %v3384 = vld [vmem:[%s290 + $0x100] sm:$0xff]
        %v3385 = vld [vmem:[%s290 + $0x108] sm:$0xff]
        %v3386 = vld [vmem:[%s290 + $0x110] sm:$0xff]
        %v3387 = vld [vmem:[%s290 + $0x118] sm:$0xff]
        %v3388 = vld [vmem:[%s290 + $0x120] sm:$0xff]
        %v3389 = vld [vmem:[%s290 + $0x128] sm:$0xff]
        %v3390 = vld [vmem:[%s290 + $0x130] sm:$0xff]
        %v3391 = vld [vmem:[%s290 + $0x138] sm:$0xff]
        %v3392 = vld [vmem:[%s290 + $0x140] sm:$0xff]
        %v3393 = vld [vmem:[%s290 + $0x148] sm:$0xff]
        %v3394 = vld [vmem:[%s290 + $0x150] sm:$0xff]
        %v3395 = vld [vmem:[%s290 + $0x158] sm:$0xff]
        %v3396 = vld [vmem:[%s290 + $0x160] sm:$0xff]
        %v3397 = vld [vmem:[%s290 + $0x168] sm:$0xff]
        %v3398 = vld [vmem:[%s290 + $0x170] sm:$0xff]
        %v3399 = vld [vmem:[%s290 + $0x178] sm:$0xff]
        %v3400 = vld [vmem:[%s290 + $0x180] sm:$0xff]
        %v3401 = vld [vmem:[%s290 + $0x188] sm:$0xff]
        %v3402 = vld [vmem:[%s290 + $0x190] sm:$0xff]
        %v3403 = vld [vmem:[%s290 + $0x198] sm:$0xff]
        %v3404 = vld [vmem:[%s290 + $0x1a0] sm:$0xff]
        %v3405 = vld [vmem:[%s290 + $0x1a8] sm:$0xff]
        %v3406 = vld [vmem:[%s290 + $0x1b0] sm:$0xff]
        %v3407 = vld [vmem:[%s290 + $0x1b8] sm:$0xff]
        %v3408 = vld [vmem:[%s290 + $0x1c0] sm:$0xff]
        %v3409 = vld [vmem:[%s290 + $0x1c8] sm:$0xff]
        %v3410 = vld [vmem:[%s290 + $0x1d0] sm:$0xff]
        %v3411 = vld [vmem:[%s290 + $0x1d8] sm:$0xff]
        %v3412 = vld [vmem:[%s290 + $0x1e0] sm:$0xff]
        %v3413 = vld [vmem:[%s290 + $0x1e8] sm:$0xff]
        %v3414 = vld [vmem:[%s290 + $0x1f0] sm:$0xff]
        %v3415 = vld [vmem:[%s290 + $0x1f8] sm:$0xff]
        %v3416 = vld [vmem:[%s290 + $0x200] sm:$0xff]
        %v3417 = vld [vmem:[%s290 + $0x208] sm:$0xff]
        %v3418 = vld [vmem:[%s290 + $0x210] sm:$0xff]
        %v3419 = vld [vmem:[%s290 + $0x218] sm:$0xff]
        %v3420 = vld [vmem:[%s290 + $0x220] sm:$0xff]
        %v3421 = vld [vmem:[%s290 + $0x228] sm:$0xff]
        %v3422 = vld [vmem:[%s290 + $0x230] sm:$0xff]
        %v3423 = vld [vmem:[%s290 + $0x238] sm:$0xff]
        %v3424 = vld [vmem:[%s290 + $0x240] sm:$0xff]
        %v3425 = vld [vmem:[%s290 + $0x248] sm:$0xff]
        %v3426 = vld [vmem:[%s290 + $0x250] sm:$0xff]
        %v3427 = vld [vmem:[%s290 + $0x258] sm:$0xff]
        %v3428 = vld [vmem:[%s290 + $0x260] sm:$0xff]
        %v3429 = vld [vmem:[%s290 + $0x268] sm:$0xff]
        %v3430 = vld [vmem:[%s290 + $0x270] sm:$0xff]
        %v3431 = vld [vmem:[%s290 + $0x278] sm:$0xff]
        %v3432 = vld [vmem:[%s290 + $0x280] sm:$0xff]
        %v3433 = vld [vmem:[%s290 + $0x288] sm:$0xff]
        %v3434 = vld [vmem:[%s290 + $0x290] sm:$0xff]
        %v3435 = vld [vmem:[%s290 + $0x298] sm:$0xff]
        %v3436 = vld [vmem:[%s290 + $0x2a0] sm:$0xff]
        %v3437 = vld [vmem:[%s290 + $0x2a8] sm:$0xff]
        %v3438 = vld [vmem:[%s290 + $0x2b0] sm:$0xff]
        %v3439 = vld [vmem:[%s290 + $0x2b8] sm:$0xff]
        %v3440 = vld [vmem:[%s290 + $0x2c0] sm:$0xff]
        %v3441 = vld [vmem:[%s290 + $0x2c8] sm:$0xff]
        %v3442 = vld [vmem:[%s290 + $0x2d0] sm:$0xff]
        %v3443 = vld [vmem:[%s290 + $0x2d8] sm:$0xff]
        %v3444 = vld [vmem:[%s290 + $0x2e0] sm:$0xff]
        %v3445 = vld [vmem:[%s290 + $0x2e8] sm:$0xff]
        %v3446 = vld [vmem:[%s290 + $0x2f0] sm:$0xff]
        %v3447 = vld [vmem:[%s290 + $0x2f8] sm:$0xff]
        %v3448 = vld [vmem:[%s290 + $0x300] sm:$0xff]
        %v3449 = vld [vmem:[%s290 + $0x308] sm:$0xff]
        %v3450 = vld [vmem:[%s290 + $0x310] sm:$0xff]
        %v3451 = vld [vmem:[%s290 + $0x318] sm:$0xff]
        %v3452 = vld [vmem:[%s290 + $0x320] sm:$0xff]
        %v3453 = vld [vmem:[%s290 + $0x328] sm:$0xff]
        %v3454 = vld [vmem:[%s290 + $0x330] sm:$0xff]
        %v3455 = vld [vmem:[%s290 + $0x338] sm:$0xff]
        %v3456 = vld [vmem:[%s290 + $0x340] sm:$0xff]
        %v3457 = vld [vmem:[%s290 + $0x348] sm:$0xff]
        %v3458 = vld [vmem:[%s290 + $0x350] sm:$0xff]
        %v3459 = vld [vmem:[%s290 + $0x358] sm:$0xff]
        %v3460 = vld [vmem:[%s290 + $0x360] sm:$0xff]
        %v3461 = vld [vmem:[%s290 + $0x368] sm:$0xff]
        %v3462 = vld [vmem:[%s290 + $0x370] sm:$0xff]
        %v3463 = vld [vmem:[%s290 + $0x378] sm:$0xff]
        %v3464 = vld [vmem:[%s290 + $0x380] sm:$0xff]
        %v3465 = vld [vmem:[%s290 + $0x388] sm:$0xff]
        %v3466 = vld [vmem:[%s290 + $0x390] sm:$0xff]
        %v3467 = vld [vmem:[%s290 + $0x398] sm:$0xff]
        %v3468 = vld [vmem:[%s290 + $0x3a0] sm:$0xff]
        %v3469 = vld [vmem:[%s290 + $0x3a8] sm:$0xff]
        %v3470 = vld [vmem:[%s290 + $0x3b0] sm:$0xff]
        %v3471 = vld [vmem:[%s290 + $0x3b8] sm:$0xff]
        %v3472 = vld [vmem:[%s290 + $0x3c0] sm:$0xff]
        %v3473 = vld [vmem:[%s290 + $0x3c8] sm:$0xff]
        %v3474 = vld [vmem:[%s290 + $0x3d0] sm:$0xff]
        %v3475 = vld [vmem:[%s290 + $0x3d8] sm:$0xff]
        %v3476 = vld [vmem:[%s290 + $0x3e0] sm:$0xff]
        %v3477 = vld [vmem:[%s290 + $0x3e8] sm:$0xff]
        %v3478 = vld [vmem:[%s290 + $0x3f0] sm:$0xff]
        %v3479 = vld [vmem:[%s290 + $0x3f8] sm:$0xff]
        %v3480 = vld [vmem:[%s290 + $0x400] sm:$0xff]
        %v3481 = vld [vmem:[%s290 + $0x408] sm:$0xff]
        %v3482 = vld [vmem:[%s290 + $0x410] sm:$0xff]
        %v3483 = vld [vmem:[%s290 + $0x418] sm:$0xff]
        %v3484 = vld [vmem:[%s290 + $0x420] sm:$0xff]
        %v3485 = vld [vmem:[%s290 + $0x428] sm:$0xff]
        %v3486 = vld [vmem:[%s290 + $0x430] sm:$0xff]
        %v3487 = vld [vmem:[%s290 + $0x438] sm:$0xff]
        %v3488 = vld [vmem:[%s290 + $0x440] sm:$0xff]
        %v3489 = vld [vmem:[%s290 + $0x448] sm:$0xff]
        %v3490 = vld [vmem:[%s290 + $0x450] sm:$0xff]
        %v3491 = vld [vmem:[%s290 + $0x458] sm:$0xff]
        %v3492 = vld [vmem:[%s290 + $0x460] sm:$0xff]
        %v3493 = vld [vmem:[%s290 + $0x468] sm:$0xff]
        %v3494 = vld [vmem:[%s290 + $0x470] sm:$0xff]
        %v3495 = vld [vmem:[%s290 + $0x478] sm:$0xff]
        %v3496 = vld [vmem:[%s290 + $0x480] sm:$0xff]
        %v3497 = vld [vmem:[%s290 + $0x488] sm:$0xff]
        %v3498 = vld [vmem:[%s290 + $0x490] sm:$0xff]
        %v3499 = vld [vmem:[%s290 + $0x498] sm:$0xff]
        %v3500 = vld [vmem:[%s290 + $0x4a0] sm:$0xff]
        %v3501 = vld [vmem:[%s290 + $0x4a8] sm:$0xff]
        %v3502 = vld [vmem:[%s290 + $0x4b0] sm:$0xff]
        %v3503 = vld [vmem:[%s290 + $0x4b8] sm:$0xff]
        %v3504 = vld [vmem:[%s290 + $0x4c0] sm:$0xff]
        %v3505 = vld [vmem:[%s290 + $0x4c8] sm:$0xff]
        %v3506 = vld [vmem:[%s290 + $0x4d0] sm:$0xff]
        %v3507 = vld [vmem:[%s290 + $0x4d8] sm:$0xff]
        %v3508 = vld [vmem:[%s290 + $0x4e0] sm:$0xff]
        %v3509 = vld [vmem:[%s290 + $0x4e8] sm:$0xff]
        %v3510 = vld [vmem:[%s290 + $0x4f0] sm:$0xff]
        %v3511 = vld [vmem:[%s290 + $0x4f8] sm:$0xff]
        %v3512 = vld [vmem:[%s290 + $0x500] sm:$0xff]
        %v3513 = vld [vmem:[%s290 + $0x508] sm:$0xff]
        %v3514 = vld [vmem:[%s290 + $0x510] sm:$0xff]
        %v3515 = vld [vmem:[%s290 + $0x518] sm:$0xff]
        %v3516 = vld [vmem:[%s290 + $0x520] sm:$0xff]
        %v3517 = vld [vmem:[%s290 + $0x528] sm:$0xff]
        %v3518 = vld [vmem:[%s290 + $0x530] sm:$0xff]
        %v3519 = vld [vmem:[%s290 + $0x538] sm:$0xff]
        %v3520 = vld [vmem:[%s290 + $0x540] sm:$0xff]
        %v3521 = vld [vmem:[%s290 + $0x548] sm:$0xff]
        %v3522 = vld [vmem:[%s290 + $0x550] sm:$0xff]
        %v3523 = vld [vmem:[%s290 + $0x558] sm:$0xff]
        %v3524 = vld [vmem:[%s290 + $0x560] sm:$0xff]
        %v3525 = vld [vmem:[%s290 + $0x568] sm:$0xff]
        %v3526 = vld [vmem:[%s290 + $0x570] sm:$0xff]
        %v3527 = vld [vmem:[%s290 + $0x578] sm:$0xff]
        %v3528 = vld [vmem:[%s290 + $0x580] sm:$0xff]
        %v3529 = vld [vmem:[%s290 + $0x588] sm:$0xff]
        %v3530 = vld [vmem:[%s290 + $0x590] sm:$0xff]
        %v3531 = vld [vmem:[%s290 + $0x598] sm:$0xff]
        %v3532 = vld [vmem:[%s290 + $0x5a0] sm:$0xff]
        %v3533 = vld [vmem:[%s290 + $0x5a8] sm:$0xff]
        %v3534 = vld [vmem:[%s290 + $0x5b0] sm:$0xff]
        %v3535 = vld [vmem:[%s290 + $0x5b8] sm:$0xff]
        %v3536 = vld [vmem:[%s290 + $0x5c0] sm:$0xff]
        %v3537 = vld [vmem:[%s290 + $0x5c8] sm:$0xff]
        %v3538 = vld [vmem:[%s290 + $0x5d0] sm:$0xff]
        %v3539 = vld [vmem:[%s290 + $0x5d8] sm:$0xff]
        %v3540 = vld [vmem:[%s290 + $0x5e0] sm:$0xff]
        %v3541 = vld [vmem:[%s290 + $0x5e8] sm:$0xff]
        %v3542 = vld [vmem:[%s290 + $0x5f0] sm:$0xff]
        %v3543 = vld [vmem:[%s290 + $0x5f8] sm:$0xff]
        %v3544 = vld [vmem:[%s290 + $0x600] sm:$0xff]
        %v3545 = vld [vmem:[%s290 + $0x608] sm:$0xff]
        %v3546 = vld [vmem:[%s290 + $0x610] sm:$0xff]
        %v3547 = vld [vmem:[%s290 + $0x618] sm:$0xff]
        %v3548 = vld [vmem:[%s290 + $0x620] sm:$0xff]
        %v3549 = vld [vmem:[%s290 + $0x628] sm:$0xff]
        %v3550 = vld [vmem:[%s290 + $0x630] sm:$0xff]
        %v3551 = vld [vmem:[%s290 + $0x638] sm:$0xff]
        %v3552 = vld [vmem:[%s290 + $0x640] sm:$0xff]
        %v3553 = vld [vmem:[%s290 + $0x648] sm:$0xff]
        %v3554 = vld [vmem:[%s290 + $0x650] sm:$0xff]
        %v3555 = vld [vmem:[%s290 + $0x658] sm:$0xff]
        %v3556 = vld [vmem:[%s290 + $0x660] sm:$0xff]
        %v3557 = vld [vmem:[%s290 + $0x668] sm:$0xff]
        %v3558 = vld [vmem:[%s290 + $0x670] sm:$0xff]
        %v3559 = vld [vmem:[%s290 + $0x678] sm:$0xff]
        %v3560 = vld [vmem:[%s290 + $0x680] sm:$0xff]
        %v3561 = vld [vmem:[%s290 + $0x688] sm:$0xff]
        %v3562 = vld [vmem:[%s290 + $0x690] sm:$0xff]
        %v3563 = vld [vmem:[%s290 + $0x698] sm:$0xff]
        %v3564 = vld [vmem:[%s290 + $0x6a0] sm:$0xff]
        %v3565 = vld [vmem:[%s290 + $0x6a8] sm:$0xff]
        %v3566 = vld [vmem:[%s290 + $0x6b0] sm:$0xff]
        %v3567 = vld [vmem:[%s290 + $0x6b8] sm:$0xff]
        %v3568 = vld [vmem:[%s290 + $0x6c0] sm:$0xff]
        %v3569 = vld [vmem:[%s290 + $0x6c8] sm:$0xff]
        %v3570 = vld [vmem:[%s290 + $0x6d0] sm:$0xff]
        %v3571 = vld [vmem:[%s290 + $0x6d8] sm:$0xff]
        %v3572 = vld [vmem:[%s290 + $0x6e0] sm:$0xff]
        %v3573 = vld [vmem:[%s290 + $0x6e8] sm:$0xff]
        %v3574 = vld [vmem:[%s290 + $0x6f0] sm:$0xff]
        %v3575 = vld [vmem:[%s290 + $0x6f8] sm:$0xff]
        %v3576 = vld [vmem:[%s290 + $0x700] sm:$0xff]
        %v3577 = vld [vmem:[%s290 + $0x708] sm:$0xff]
        %v3578 = vld [vmem:[%s290 + $0x710] sm:$0xff]
        %v3579 = vld [vmem:[%s290 + $0x718] sm:$0xff]
        %v3580 = vld [vmem:[%s290 + $0x720] sm:$0xff]
        %v3581 = vld [vmem:[%s290 + $0x728] sm:$0xff]
        %v3582 = vld [vmem:[%s290 + $0x730] sm:$0xff]
        %v3583 = vld [vmem:[%s290 + $0x738] sm:$0xff]
        %v3584 = vld [vmem:[%s290 + $0x740] sm:$0xff]
        %v3585 = vld [vmem:[%s290 + $0x748] sm:$0xff]
        %v3586 = vld [vmem:[%s290 + $0x750] sm:$0xff]
        %v3587 = vld [vmem:[%s290 + $0x758] sm:$0xff]
        %v3588 = vld [vmem:[%s290 + $0x760] sm:$0xff]
        %v3589 = vld [vmem:[%s290 + $0x768] sm:$0xff]
        %v3590 = vld [vmem:[%s290 + $0x770] sm:$0xff]
        %v3591 = vld [vmem:[%s290 + $0x778] sm:$0xff]
        %v3592 = vld [vmem:[%s290 + $0x780] sm:$0xff]
        %v3593 = vld [vmem:[%s290 + $0x788] sm:$0xff]
        %v3594 = vld [vmem:[%s290 + $0x790] sm:$0xff]
        %v3595 = vld [vmem:[%s290 + $0x798] sm:$0xff]
        %v3596 = vld [vmem:[%s290 + $0x7a0] sm:$0xff]
        %v3597 = vld [vmem:[%s290 + $0x7a8] sm:$0xff]
        %v3598 = vld [vmem:[%s290 + $0x7b0] sm:$0xff]
        %v3599 = vld [vmem:[%s290 + $0x7b8] sm:$0xff]
        %v3600 = vld [vmem:[%s290 + $0x7c0] sm:$0xff]
        %v3601 = vld [vmem:[%s290 + $0x7c8] sm:$0xff]
        %v3602 = vld [vmem:[%s290 + $0x7d0] sm:$0xff]
        %v3603 = vld [vmem:[%s290 + $0x7d8] sm:$0xff]
        %v3604 = vld [vmem:[%s290 + $0x7e0] sm:$0xff]
        %v3605 = vld [vmem:[%s290 + $0x7e8] sm:$0xff]
        %v3606 = vld [vmem:[%s290 + $0x7f0] sm:$0xff]
        %v3607 = vld [vmem:[%s290 + $0x7f8] sm:$0xff]
        %v3608 = vunpack.c.l.bf16 %v3352
        %v3609 = vunpack.c.h.bf16 %v3352
        %v3610 = vunpack.c.l.bf16 %v3353
        %v3611 = vunpack.c.h.bf16 %v3353
        %v3612 = vunpack.c.l.bf16 %v3354
        %v3613 = vunpack.c.h.bf16 %v3354
        %v3614 = vunpack.c.l.bf16 %v3355
        %v3615 = vunpack.c.h.bf16 %v3355
        %v3616 = vunpack.c.l.bf16 %v3356
        %v3617 = vunpack.c.h.bf16 %v3356
        %v3618 = vunpack.c.l.bf16 %v3357
        %v3619 = vunpack.c.h.bf16 %v3357
        %v3620 = vunpack.c.l.bf16 %v3358
        %v3621 = vunpack.c.h.bf16 %v3358
        %v3622 = vunpack.c.l.bf16 %v3359
        %v3623 = vunpack.c.h.bf16 %v3359
        %v3624 = vunpack.c.l.bf16 %v3360
        %v3625 = vunpack.c.h.bf16 %v3360
        %v3626 = vunpack.c.l.bf16 %v3361
        %v3627 = vunpack.c.h.bf16 %v3361
        %v3628 = vunpack.c.l.bf16 %v3362
        %v3629 = vunpack.c.h.bf16 %v3362
        %v3630 = vunpack.c.l.bf16 %v3363
        %v3631 = vunpack.c.h.bf16 %v3363
        %v3632 = vunpack.c.l.bf16 %v3364
        %v3633 = vunpack.c.h.bf16 %v3364
        %v3634 = vunpack.c.l.bf16 %v3365
        %v3635 = vunpack.c.h.bf16 %v3365
        %v3636 = vunpack.c.l.bf16 %v3366
        %v3637 = vunpack.c.h.bf16 %v3366
        %v3638 = vunpack.c.l.bf16 %v3367
        %v3639 = vunpack.c.h.bf16 %v3367
        %v3640 = vunpack.c.l.bf16 %v3368
        %v3641 = vunpack.c.h.bf16 %v3368
        %v3642 = vunpack.c.l.bf16 %v3369
        %v3643 = vunpack.c.h.bf16 %v3369
        %v3644 = vunpack.c.l.bf16 %v3370
        %v3645 = vunpack.c.h.bf16 %v3370
        %v3646 = vunpack.c.l.bf16 %v3371
        %v3647 = vunpack.c.h.bf16 %v3371
        %v3648 = vunpack.c.l.bf16 %v3372
        %v3649 = vunpack.c.h.bf16 %v3372
        %v3650 = vunpack.c.l.bf16 %v3373
        %v3651 = vunpack.c.h.bf16 %v3373
        %v3652 = vunpack.c.l.bf16 %v3374
        %v3653 = vunpack.c.h.bf16 %v3374
        %v3654 = vunpack.c.l.bf16 %v3375
        %v3655 = vunpack.c.h.bf16 %v3375
        %v3656 = vunpack.c.l.bf16 %v3376
        %v3657 = vunpack.c.h.bf16 %v3376
        %v3658 = vunpack.c.l.bf16 %v3377
        %v3659 = vunpack.c.h.bf16 %v3377
        %v3660 = vunpack.c.l.bf16 %v3378
        %v3661 = vunpack.c.h.bf16 %v3378
        %v3662 = vunpack.c.l.bf16 %v3379
        %v3663 = vunpack.c.h.bf16 %v3379
        %v3664 = vunpack.c.l.bf16 %v3380
        %v3665 = vunpack.c.h.bf16 %v3380
        %v3666 = vunpack.c.l.bf16 %v3381
        %v3667 = vunpack.c.h.bf16 %v3381
        %v3668 = vunpack.c.l.bf16 %v3382
        %v3669 = vunpack.c.h.bf16 %v3382
        %v3670 = vunpack.c.l.bf16 %v3383
        %v3671 = vunpack.c.h.bf16 %v3383
        %v3672 = vunpack.c.l.bf16 %v3384
        %v3673 = vunpack.c.h.bf16 %v3384
        %v3674 = vunpack.c.l.bf16 %v3385
        %v3675 = vunpack.c.h.bf16 %v3385
        %v3676 = vunpack.c.l.bf16 %v3386
        %v3677 = vunpack.c.h.bf16 %v3386
        %v3678 = vunpack.c.l.bf16 %v3387
        %v3679 = vunpack.c.h.bf16 %v3387
        %v3680 = vunpack.c.l.bf16 %v3388
        %v3681 = vunpack.c.h.bf16 %v3388
        %v3682 = vunpack.c.l.bf16 %v3389
        %v3683 = vunpack.c.h.bf16 %v3389
        %v3684 = vunpack.c.l.bf16 %v3390
        %v3685 = vunpack.c.h.bf16 %v3390
        %v3686 = vunpack.c.l.bf16 %v3391
        %v3687 = vunpack.c.h.bf16 %v3391
        %v3688 = vunpack.c.l.bf16 %v3392
        %v3689 = vunpack.c.h.bf16 %v3392
        %v3690 = vunpack.c.l.bf16 %v3393
        %v3691 = vunpack.c.h.bf16 %v3393
        %v3692 = vunpack.c.l.bf16 %v3394
        %v3693 = vunpack.c.h.bf16 %v3394
        %v3694 = vunpack.c.l.bf16 %v3395
        %v3695 = vunpack.c.h.bf16 %v3395
        %v3696 = vunpack.c.l.bf16 %v3396
        %v3697 = vunpack.c.h.bf16 %v3396
        %v3698 = vunpack.c.l.bf16 %v3397
        %v3699 = vunpack.c.h.bf16 %v3397
        %v3700 = vunpack.c.l.bf16 %v3398
        %v3701 = vunpack.c.h.bf16 %v3398
        %v3702 = vunpack.c.l.bf16 %v3399
        %v3703 = vunpack.c.h.bf16 %v3399
        %v3704 = vunpack.c.l.bf16 %v3400
        %v3705 = vunpack.c.h.bf16 %v3400
        %v3706 = vunpack.c.l.bf16 %v3401
        %v3707 = vunpack.c.h.bf16 %v3401
        %v3708 = vunpack.c.l.bf16 %v3402
        %v3709 = vunpack.c.h.bf16 %v3402
        %v3710 = vunpack.c.l.bf16 %v3403
        %v3711 = vunpack.c.h.bf16 %v3403
        %v3712 = vunpack.c.l.bf16 %v3404
        %v3713 = vunpack.c.h.bf16 %v3404
        %v3714 = vunpack.c.l.bf16 %v3405
        %v3715 = vunpack.c.h.bf16 %v3405
        %v3716 = vunpack.c.l.bf16 %v3406
        %v3717 = vunpack.c.h.bf16 %v3406
        %v3718 = vunpack.c.l.bf16 %v3407
        %v3719 = vunpack.c.h.bf16 %v3407
        %v3720 = vunpack.c.l.bf16 %v3408
        %v3721 = vunpack.c.h.bf16 %v3408
        %v3722 = vunpack.c.l.bf16 %v3409
        %v3723 = vunpack.c.h.bf16 %v3409
        %v3724 = vunpack.c.l.bf16 %v3410
        %v3725 = vunpack.c.h.bf16 %v3410
        %v3726 = vunpack.c.l.bf16 %v3411
        %v3727 = vunpack.c.h.bf16 %v3411
        %v3728 = vunpack.c.l.bf16 %v3412
        %v3729 = vunpack.c.h.bf16 %v3412
        %v3730 = vunpack.c.l.bf16 %v3413
        %v3731 = vunpack.c.h.bf16 %v3413
        %v3732 = vunpack.c.l.bf16 %v3414
        %v3733 = vunpack.c.h.bf16 %v3414
        %v3734 = vunpack.c.l.bf16 %v3415
        %v3735 = vunpack.c.h.bf16 %v3415
        %v3736 = vunpack.c.l.bf16 %v3416
        %v3737 = vunpack.c.h.bf16 %v3416
        %v3738 = vunpack.c.l.bf16 %v3417
        %v3739 = vunpack.c.h.bf16 %v3417
        %v3740 = vunpack.c.l.bf16 %v3418
        %v3741 = vunpack.c.h.bf16 %v3418
        %v3742 = vunpack.c.l.bf16 %v3419
        %v3743 = vunpack.c.h.bf16 %v3419
        %v3744 = vunpack.c.l.bf16 %v3420
        %v3745 = vunpack.c.h.bf16 %v3420
        %v3746 = vunpack.c.l.bf16 %v3421
        %v3747 = vunpack.c.h.bf16 %v3421
        %v3748 = vunpack.c.l.bf16 %v3422
        %v3749 = vunpack.c.h.bf16 %v3422
        %v3750 = vunpack.c.l.bf16 %v3423
        %v3751 = vunpack.c.h.bf16 %v3423
        %v3752 = vunpack.c.l.bf16 %v3424
        %v3753 = vunpack.c.h.bf16 %v3424
        %v3754 = vunpack.c.l.bf16 %v3425
        %v3755 = vunpack.c.h.bf16 %v3425
        %v3756 = vunpack.c.l.bf16 %v3426
        %v3757 = vunpack.c.h.bf16 %v3426
        %v3758 = vunpack.c.l.bf16 %v3427
        %v3759 = vunpack.c.h.bf16 %v3427
        %v3760 = vunpack.c.l.bf16 %v3428
        %v3761 = vunpack.c.h.bf16 %v3428
        %v3762 = vunpack.c.l.bf16 %v3429
        %v3763 = vunpack.c.h.bf16 %v3429
        %v3764 = vunpack.c.l.bf16 %v3430
        %v3765 = vunpack.c.h.bf16 %v3430
        %v3766 = vunpack.c.l.bf16 %v3431
        %v3767 = vunpack.c.h.bf16 %v3431
        %v3768 = vunpack.c.l.bf16 %v3432
        %v3769 = vunpack.c.h.bf16 %v3432
        %v3770 = vunpack.c.l.bf16 %v3433
        %v3771 = vunpack.c.h.bf16 %v3433
        %v3772 = vunpack.c.l.bf16 %v3434
        %v3773 = vunpack.c.h.bf16 %v3434
        %v3774 = vunpack.c.l.bf16 %v3435
        %v3775 = vunpack.c.h.bf16 %v3435
        %v3776 = vunpack.c.l.bf16 %v3436
        %v3777 = vunpack.c.h.bf16 %v3436
        %v3778 = vunpack.c.l.bf16 %v3437
        %v3779 = vunpack.c.h.bf16 %v3437
        %v3780 = vunpack.c.l.bf16 %v3438
        %v3781 = vunpack.c.h.bf16 %v3438
        %v3782 = vunpack.c.l.bf16 %v3439
        %v3783 = vunpack.c.h.bf16 %v3439
        %v3784 = vunpack.c.l.bf16 %v3440
        %v3785 = vunpack.c.h.bf16 %v3440
        %v3786 = vunpack.c.l.bf16 %v3441
        %v3787 = vunpack.c.h.bf16 %v3441
        %v3788 = vunpack.c.l.bf16 %v3442
        %v3789 = vunpack.c.h.bf16 %v3442
        %v3790 = vunpack.c.l.bf16 %v3443
        %v3791 = vunpack.c.h.bf16 %v3443
        %v3792 = vunpack.c.l.bf16 %v3444
        %v3793 = vunpack.c.h.bf16 %v3444
        %v3794 = vunpack.c.l.bf16 %v3445
        %v3795 = vunpack.c.h.bf16 %v3445
        %v3796 = vunpack.c.l.bf16 %v3446
        %v3797 = vunpack.c.h.bf16 %v3446
        %v3798 = vunpack.c.l.bf16 %v3447
        %v3799 = vunpack.c.h.bf16 %v3447
        %v3800 = vunpack.c.l.bf16 %v3448
        %v3801 = vunpack.c.h.bf16 %v3448
        %v3802 = vunpack.c.l.bf16 %v3449
        %v3803 = vunpack.c.h.bf16 %v3449
        %v3804 = vunpack.c.l.bf16 %v3450
        %v3805 = vunpack.c.h.bf16 %v3450
        %v3806 = vunpack.c.l.bf16 %v3451
        %v3807 = vunpack.c.h.bf16 %v3451
        %v3808 = vunpack.c.l.bf16 %v3452
        %v3809 = vunpack.c.h.bf16 %v3452
        %v3810 = vunpack.c.l.bf16 %v3453
        %v3811 = vunpack.c.h.bf16 %v3453
        %v3812 = vunpack.c.l.bf16 %v3454
        %v3813 = vunpack.c.h.bf16 %v3454
        %v3814 = vunpack.c.l.bf16 %v3455
        %v3815 = vunpack.c.h.bf16 %v3455
        %v3816 = vunpack.c.l.bf16 %v3456
        %v3817 = vunpack.c.h.bf16 %v3456
        %v3818 = vunpack.c.l.bf16 %v3457
        %v3819 = vunpack.c.h.bf16 %v3457
        %v3820 = vunpack.c.l.bf16 %v3458
        %v3821 = vunpack.c.h.bf16 %v3458
        %v3822 = vunpack.c.l.bf16 %v3459
        %v3823 = vunpack.c.h.bf16 %v3459
        %v3824 = vunpack.c.l.bf16 %v3460
        %v3825 = vunpack.c.h.bf16 %v3460
        %v3826 = vunpack.c.l.bf16 %v3461
        %v3827 = vunpack.c.h.bf16 %v3461
        %v3828 = vunpack.c.l.bf16 %v3462
        %v3829 = vunpack.c.h.bf16 %v3462
        %v3830 = vunpack.c.l.bf16 %v3463
        %v3831 = vunpack.c.h.bf16 %v3463
        %v3832 = vunpack.c.l.bf16 %v3464
        %v3833 = vunpack.c.h.bf16 %v3464
        %v3834 = vunpack.c.l.bf16 %v3465
        %v3835 = vunpack.c.h.bf16 %v3465
        %v3836 = vunpack.c.l.bf16 %v3466
        %v3837 = vunpack.c.h.bf16 %v3466
        %v3838 = vunpack.c.l.bf16 %v3467
        %v3839 = vunpack.c.h.bf16 %v3467
        %v3840 = vunpack.c.l.bf16 %v3468
        %v3841 = vunpack.c.h.bf16 %v3468
        %v3842 = vunpack.c.l.bf16 %v3469
        %v3843 = vunpack.c.h.bf16 %v3469
        %v3844 = vunpack.c.l.bf16 %v3470
        %v3845 = vunpack.c.h.bf16 %v3470
        %v3846 = vunpack.c.l.bf16 %v3471
        %v3847 = vunpack.c.h.bf16 %v3471
        %v3848 = vunpack.c.l.bf16 %v3472
        %v3849 = vunpack.c.h.bf16 %v3472
        %v3850 = vunpack.c.l.bf16 %v3473
        %v3851 = vunpack.c.h.bf16 %v3473
        %v3852 = vunpack.c.l.bf16 %v3474
        %v3853 = vunpack.c.h.bf16 %v3474
        %v3854 = vunpack.c.l.bf16 %v3475
        %v3855 = vunpack.c.h.bf16 %v3475
        %v3856 = vunpack.c.l.bf16 %v3476
        %v3857 = vunpack.c.h.bf16 %v3476
        %v3858 = vunpack.c.l.bf16 %v3477
        %v3859 = vunpack.c.h.bf16 %v3477
        %v3860 = vunpack.c.l.bf16 %v3478
        %v3861 = vunpack.c.h.bf16 %v3478
        %v3862 = vunpack.c.l.bf16 %v3479
        %v3863 = vunpack.c.h.bf16 %v3479
        %v3864 = vunpack.c.l.bf16 %v3480
        %v3865 = vunpack.c.h.bf16 %v3480
        %v3866 = vunpack.c.l.bf16 %v3481
        %v3867 = vunpack.c.h.bf16 %v3481
        %v3868 = vunpack.c.l.bf16 %v3482
        %v3869 = vunpack.c.h.bf16 %v3482
        %v3870 = vunpack.c.l.bf16 %v3483
        %v3871 = vunpack.c.h.bf16 %v3483
        %v3872 = vunpack.c.l.bf16 %v3484
        %v3873 = vunpack.c.h.bf16 %v3484
        %v3874 = vunpack.c.l.bf16 %v3485
        %v3875 = vunpack.c.h.bf16 %v3485
        %v3876 = vunpack.c.l.bf16 %v3486
        %v3877 = vunpack.c.h.bf16 %v3486
        %v3878 = vunpack.c.l.bf16 %v3487
        %v3879 = vunpack.c.h.bf16 %v3487
        %v3880 = vunpack.c.l.bf16 %v3488
        %v3881 = vunpack.c.h.bf16 %v3488
        %v3882 = vunpack.c.l.bf16 %v3489
        %v3883 = vunpack.c.h.bf16 %v3489
        %v3884 = vunpack.c.l.bf16 %v3490
        %v3885 = vunpack.c.h.bf16 %v3490
        %v3886 = vunpack.c.l.bf16 %v3491
        %v3887 = vunpack.c.h.bf16 %v3491
        %v3888 = vunpack.c.l.bf16 %v3492
        %v3889 = vunpack.c.h.bf16 %v3492
        %v3890 = vunpack.c.l.bf16 %v3493
        %v3891 = vunpack.c.h.bf16 %v3493
        %v3892 = vunpack.c.l.bf16 %v3494
        %v3893 = vunpack.c.h.bf16 %v3494
        %v3894 = vunpack.c.l.bf16 %v3495
        %v3895 = vunpack.c.h.bf16 %v3495
        %v3896 = vunpack.c.l.bf16 %v3496
        %v3897 = vunpack.c.h.bf16 %v3496
        %v3898 = vunpack.c.l.bf16 %v3497
        %v3899 = vunpack.c.h.bf16 %v3497
        %v3900 = vunpack.c.l.bf16 %v3498
        %v3901 = vunpack.c.h.bf16 %v3498
        %v3902 = vunpack.c.l.bf16 %v3499
        %v3903 = vunpack.c.h.bf16 %v3499
        %v3904 = vunpack.c.l.bf16 %v3500
        %v3905 = vunpack.c.h.bf16 %v3500
        %v3906 = vunpack.c.l.bf16 %v3501
        %v3907 = vunpack.c.h.bf16 %v3501
        %v3908 = vunpack.c.l.bf16 %v3502
        %v3909 = vunpack.c.h.bf16 %v3502
        %v3910 = vunpack.c.l.bf16 %v3503
        %v3911 = vunpack.c.h.bf16 %v3503
        %v3912 = vunpack.c.l.bf16 %v3504
        %v3913 = vunpack.c.h.bf16 %v3504
        %v3914 = vunpack.c.l.bf16 %v3505
        %v3915 = vunpack.c.h.bf16 %v3505
        %v3916 = vunpack.c.l.bf16 %v3506
        %v3917 = vunpack.c.h.bf16 %v3506
        %v3918 = vunpack.c.l.bf16 %v3507
        %v3919 = vunpack.c.h.bf16 %v3507
        %v3920 = vunpack.c.l.bf16 %v3508
        %v3921 = vunpack.c.h.bf16 %v3508
        %v3922 = vunpack.c.l.bf16 %v3509
        %v3923 = vunpack.c.h.bf16 %v3509
        %v3924 = vunpack.c.l.bf16 %v3510
        %v3925 = vunpack.c.h.bf16 %v3510
        %v3926 = vunpack.c.l.bf16 %v3511
        %v3927 = vunpack.c.h.bf16 %v3511
        %v3928 = vunpack.c.l.bf16 %v3512
        %v3929 = vunpack.c.h.bf16 %v3512
        %v3930 = vunpack.c.l.bf16 %v3513
        %v3931 = vunpack.c.h.bf16 %v3513
        %v3932 = vunpack.c.l.bf16 %v3514
        %v3933 = vunpack.c.h.bf16 %v3514
        %v3934 = vunpack.c.l.bf16 %v3515
        %v3935 = vunpack.c.h.bf16 %v3515
        %v3936 = vunpack.c.l.bf16 %v3516
        %v3937 = vunpack.c.h.bf16 %v3516
        %v3938 = vunpack.c.l.bf16 %v3517
        %v3939 = vunpack.c.h.bf16 %v3517
        %v3940 = vunpack.c.l.bf16 %v3518
        %v3941 = vunpack.c.h.bf16 %v3518
        %v3942 = vunpack.c.l.bf16 %v3519
        %v3943 = vunpack.c.h.bf16 %v3519
        %v3944 = vunpack.c.l.bf16 %v3520
        %v3945 = vunpack.c.h.bf16 %v3520
        %v3946 = vunpack.c.l.bf16 %v3521
        %v3947 = vunpack.c.h.bf16 %v3521
        %v3948 = vunpack.c.l.bf16 %v3522
        %v3949 = vunpack.c.h.bf16 %v3522
        %v3950 = vunpack.c.l.bf16 %v3523
        %v3951 = vunpack.c.h.bf16 %v3523
        %v3952 = vunpack.c.l.bf16 %v3524
        %v3953 = vunpack.c.h.bf16 %v3524
        %v3954 = vunpack.c.l.bf16 %v3525
        %v3955 = vunpack.c.h.bf16 %v3525
        %v3956 = vunpack.c.l.bf16 %v3526
        %v3957 = vunpack.c.h.bf16 %v3526
        %v3958 = vunpack.c.l.bf16 %v3527
        %v3959 = vunpack.c.h.bf16 %v3527
        %v3960 = vunpack.c.l.bf16 %v3528
        %v3961 = vunpack.c.h.bf16 %v3528
        %v3962 = vunpack.c.l.bf16 %v3529
        %v3963 = vunpack.c.h.bf16 %v3529
        %v3964 = vunpack.c.l.bf16 %v3530
        %v3965 = vunpack.c.h.bf16 %v3530
        %v3966 = vunpack.c.l.bf16 %v3531
        %v3967 = vunpack.c.h.bf16 %v3531
        %v3968 = vunpack.c.l.bf16 %v3532
        %v3969 = vunpack.c.h.bf16 %v3532
        %v3970 = vunpack.c.l.bf16 %v3533
        %v3971 = vunpack.c.h.bf16 %v3533
        %v3972 = vunpack.c.l.bf16 %v3534
        %v3973 = vunpack.c.h.bf16 %v3534
        %v3974 = vunpack.c.l.bf16 %v3535
        %v3975 = vunpack.c.h.bf16 %v3535
        %v3976 = vunpack.c.l.bf16 %v3536
        %v3977 = vunpack.c.h.bf16 %v3536
        %v3978 = vunpack.c.l.bf16 %v3537
        %v3979 = vunpack.c.h.bf16 %v3537
        %v3980 = vunpack.c.l.bf16 %v3538
        %v3981 = vunpack.c.h.bf16 %v3538
        %v3982 = vunpack.c.l.bf16 %v3539
        %v3983 = vunpack.c.h.bf16 %v3539
        %v3984 = vunpack.c.l.bf16 %v3540
        %v3985 = vunpack.c.h.bf16 %v3540
        %v3986 = vunpack.c.l.bf16 %v3541
        %v3987 = vunpack.c.h.bf16 %v3541
        %v3988 = vunpack.c.l.bf16 %v3542
        %v3989 = vunpack.c.h.bf16 %v3542
        %v3990 = vunpack.c.l.bf16 %v3543
        %v3991 = vunpack.c.h.bf16 %v3543
        %v3992 = vunpack.c.l.bf16 %v3544
        %v3993 = vunpack.c.h.bf16 %v3544
        %v3994 = vunpack.c.l.bf16 %v3545
        %v3995 = vunpack.c.h.bf16 %v3545
        %v3996 = vunpack.c.l.bf16 %v3546
        %v3997 = vunpack.c.h.bf16 %v3546
        %v3998 = vunpack.c.l.bf16 %v3547
        %v3999 = vunpack.c.h.bf16 %v3547
        %v4000 = vunpack.c.l.bf16 %v3548
        %v4001 = vunpack.c.h.bf16 %v3548
        %v4002 = vunpack.c.l.bf16 %v3549
        %v4003 = vunpack.c.h.bf16 %v3549
        %v4004 = vunpack.c.l.bf16 %v3550
        %v4005 = vunpack.c.h.bf16 %v3550
        %v4006 = vunpack.c.l.bf16 %v3551
        %v4007 = vunpack.c.h.bf16 %v3551
        %v4008 = vunpack.c.l.bf16 %v3552
        %v4009 = vunpack.c.h.bf16 %v3552
        %v4010 = vunpack.c.l.bf16 %v3553
        %v4011 = vunpack.c.h.bf16 %v3553
        %v4012 = vunpack.c.l.bf16 %v3554
        %v4013 = vunpack.c.h.bf16 %v3554
        %v4014 = vunpack.c.l.bf16 %v3555
        %v4015 = vunpack.c.h.bf16 %v3555
        %v4016 = vunpack.c.l.bf16 %v3556
        %v4017 = vunpack.c.h.bf16 %v3556
        %v4018 = vunpack.c.l.bf16 %v3557
        %v4019 = vunpack.c.h.bf16 %v3557
        %v4020 = vunpack.c.l.bf16 %v3558
        %v4021 = vunpack.c.h.bf16 %v3558
        %v4022 = vunpack.c.l.bf16 %v3559
        %v4023 = vunpack.c.h.bf16 %v3559
        %v4024 = vunpack.c.l.bf16 %v3560
        %v4025 = vunpack.c.h.bf16 %v3560
        %v4026 = vunpack.c.l.bf16 %v3561
        %v4027 = vunpack.c.h.bf16 %v3561
        %v4028 = vunpack.c.l.bf16 %v3562
        %v4029 = vunpack.c.h.bf16 %v3562
        %v4030 = vunpack.c.l.bf16 %v3563
        %v4031 = vunpack.c.h.bf16 %v3563
        %v4032 = vunpack.c.l.bf16 %v3564
        %v4033 = vunpack.c.h.bf16 %v3564
        %v4034 = vunpack.c.l.bf16 %v3565
        %v4035 = vunpack.c.h.bf16 %v3565
        %v4036 = vunpack.c.l.bf16 %v3566
        %v4037 = vunpack.c.h.bf16 %v3566
        %v4038 = vunpack.c.l.bf16 %v3567
        %v4039 = vunpack.c.h.bf16 %v3567
        %v4040 = vunpack.c.l.bf16 %v3568
        %v4041 = vunpack.c.h.bf16 %v3568
        %v4042 = vunpack.c.l.bf16 %v3569
        %v4043 = vunpack.c.h.bf16 %v3569
        %v4044 = vunpack.c.l.bf16 %v3570
        %v4045 = vunpack.c.h.bf16 %v3570
        %v4046 = vunpack.c.l.bf16 %v3571
        %v4047 = vunpack.c.h.bf16 %v3571
        %v4048 = vunpack.c.l.bf16 %v3572
        %v4049 = vunpack.c.h.bf16 %v3572
        %v4050 = vunpack.c.l.bf16 %v3573
        %v4051 = vunpack.c.h.bf16 %v3573
        %v4052 = vunpack.c.l.bf16 %v3574
        %v4053 = vunpack.c.h.bf16 %v3574
        %v4054 = vunpack.c.l.bf16 %v3575
        %v4055 = vunpack.c.h.bf16 %v3575
        %v4056 = vunpack.c.l.bf16 %v3576
        %v4057 = vunpack.c.h.bf16 %v3576
        %v4058 = vunpack.c.l.bf16 %v3577
        %v4059 = vunpack.c.h.bf16 %v3577
        %v4060 = vunpack.c.l.bf16 %v3578
        %v4061 = vunpack.c.h.bf16 %v3578
        %v4062 = vunpack.c.l.bf16 %v3579
        %v4063 = vunpack.c.h.bf16 %v3579
        %v4064 = vunpack.c.l.bf16 %v3580
        %v4065 = vunpack.c.h.bf16 %v3580
        %v4066 = vunpack.c.l.bf16 %v3581
        %v4067 = vunpack.c.h.bf16 %v3581
        %v4068 = vunpack.c.l.bf16 %v3582
        %v4069 = vunpack.c.h.bf16 %v3582
        %v4070 = vunpack.c.l.bf16 %v3583
        %v4071 = vunpack.c.h.bf16 %v3583
        %v4072 = vunpack.c.l.bf16 %v3584
        %v4073 = vunpack.c.h.bf16 %v3584
        %v4074 = vunpack.c.l.bf16 %v3585
        %v4075 = vunpack.c.h.bf16 %v3585
        %v4076 = vunpack.c.l.bf16 %v3586
        %v4077 = vunpack.c.h.bf16 %v3586
        %v4078 = vunpack.c.l.bf16 %v3587
        %v4079 = vunpack.c.h.bf16 %v3587
        %v4080 = vunpack.c.l.bf16 %v3588
        %v4081 = vunpack.c.h.bf16 %v3588
        %v4082 = vunpack.c.l.bf16 %v3589
        %v4083 = vunpack.c.h.bf16 %v3589
        %v4084 = vunpack.c.l.bf16 %v3590
        %v4085 = vunpack.c.h.bf16 %v3590
        %v4086 = vunpack.c.l.bf16 %v3591
        %v4087 = vunpack.c.h.bf16 %v3591
        %v4088 = vunpack.c.l.bf16 %v3592
        %v4089 = vunpack.c.h.bf16 %v3592
        %v4090 = vunpack.c.l.bf16 %v3593
        %v4091 = vunpack.c.h.bf16 %v3593
        %v4092 = vunpack.c.l.bf16 %v3594
        %v4093 = vunpack.c.h.bf16 %v3594
        %v4094 = vunpack.c.l.bf16 %v3595
        %v4095 = vunpack.c.h.bf16 %v3595
        %v4096 = vunpack.c.l.bf16 %v3596
        %v4097 = vunpack.c.h.bf16 %v3596
        %v4098 = vunpack.c.l.bf16 %v3597
        %v4099 = vunpack.c.h.bf16 %v3597
        %v4100 = vunpack.c.l.bf16 %v3598
        %v4101 = vunpack.c.h.bf16 %v3598
        %v4102 = vunpack.c.l.bf16 %v3599
        %v4103 = vunpack.c.h.bf16 %v3599
        %v4104 = vunpack.c.l.bf16 %v3600
        %v4105 = vunpack.c.h.bf16 %v3600
        %v4106 = vunpack.c.l.bf16 %v3601
        %v4107 = vunpack.c.h.bf16 %v3601
        %v4108 = vunpack.c.l.bf16 %v3602
        %v4109 = vunpack.c.h.bf16 %v3602
        %v4110 = vunpack.c.l.bf16 %v3603
        %v4111 = vunpack.c.h.bf16 %v3603
        %v4112 = vunpack.c.l.bf16 %v3604
        %v4113 = vunpack.c.h.bf16 %v3604
        %v4114 = vunpack.c.l.bf16 %v3605
        %v4115 = vunpack.c.h.bf16 %v3605
        %v4116 = vunpack.c.l.bf16 %v3606
        %v4117 = vunpack.c.h.bf16 %v3606
        %v4118 = vunpack.c.l.bf16 %v3607
        %v4119 = vunpack.c.h.bf16 %v3607
        %v4120 = vld [vmem:[%s299] sm:$0x3]
        %v4122 = vlaneseq
        %v4123 = vshrl.u32 %v4122, 7
        %v4124 = vsub.s32 0, %v4123
        %v4125 = vrot.slane %v4120, %v4124
        %v4126 = vlaneseq
        %v4127 = vshrl.u32 %v4126, 7
        %v4128 = vsub.s32 1, %v4127
        %v4129 = vrot.slane %v4120, %v4128
        %vm4164 = vcmask 1041409
        %v4165 = vsel %vm4164, %v3336, %v3320
        %v4166 = vsel %vm4164, %v3337, %v3321
        %v4167 = vsel %vm4164, %v3338, %v3322
        %v4168 = vsel %vm4164, %v3339, %v3323
        %v4169 = vsel %vm4164, %v3340, %v3324
        %v4170 = vsel %vm4164, %v3341, %v3325
        %v4171 = vsel %vm4164, %v3342, %v3326
        %v4172 = vsel %vm4164, %v3343, %v3327
        %v4173 = vsel %vm4164, %v3344, %v3328
        %v4174 = vsel %vm4164, %v3345, %v3329
        %v4175 = vsel %vm4164, %v3346, %v3330
        %v4176 = vsel %vm4164, %v3347, %v3331
        %v4177 = vsel %vm4164, %v3348, %v3332
        %v4178 = vsel %vm4164, %v3349, %v3333
        %v4179 = vsel %vm4164, %v3350, %v3334
        %v4180 = vsel %vm4164, %v3351, %v3335
        %4197 = vmatprep.subr.mxu0 %v3639
        %4198 = vmatpush1.msra.mxu0 %v3638
        %4199 = vmatprep.subr.mxu0 %v3637
        %4200 = vmatpush1.msra.mxu0 %v3636
        %4201 = vmatprep.subr.mxu0 %v3635
        %4202 = vmatpush1.msra.mxu0 %v3634
        %4203 = vmatprep.subr.mxu0 %v3633
        %4204 = vmatpush1.msra.mxu0 %v3632
        %4205 = vmatprep.subr.mxu0 %v3631
        %4206 = vmatpush1.msra.mxu0 %v3630
        %4207 = vmatprep.subr.mxu0 %v3629
        %4208 = vmatpush1.msra.mxu0 %v3628
        %4209 = vmatprep.subr.mxu0 %v3627
        %4210 = vmatpush1.msra.mxu0 %v3626
        %4211 = vmatprep.subr.mxu0 %v3625
        %4212 = vmatpush1.msra.mxu0 %v3624
        %4213 = vmatprep.subr.mxu0 %v3623
        %4214 = vmatpush1.msra.mxu0 %v3622
        %4215 = vmatprep.subr.mxu0 %v3621
        %4216 = vmatpush1.msra.mxu0 %v3620
        %4217 = vmatprep.subr.mxu0 %v3619
        %4218 = vmatpush1.msra.mxu0 %v3618
        %4219 = vmatprep.subr.mxu0 %v3617
        %4220 = vmatpush1.msra.mxu0 %v3616
        %4221 = vmatprep.subr.mxu0 %v3615
        %4222 = vmatpush1.msra.mxu0 %v3614
        %4223 = vmatprep.subr.mxu0 %v3613
        %4224 = vmatpush1.msra.mxu0 %v3612
        %4225 = vmatprep.subr.mxu0 %v3611
        %4226 = vmatpush1.msra.mxu0 %v3610
        %4227 = vmatprep.subr.mxu0 %v3609
        %4228 = vmatpush1.msra.mxu0 %v3608
        %4229 = vmatprep.subr.mxu0 %v3671
        %4230 = vmatpush2.msra.mxu0 %v3670
        %4231 = vmatprep.subr.mxu0 %v3669
        %4232 = vmatpush2.msra.mxu0 %v3668
        %4233 = vmatprep.subr.mxu0 %v3667
        %4234 = vmatpush2.msra.mxu0 %v3666
        %4235 = vmatprep.subr.mxu0 %v3665
        %4236 = vmatpush2.msra.mxu0 %v3664
        %4237 = vmatprep.subr.mxu0 %v3663
        %4238 = vmatpush2.msra.mxu0 %v3662
        %4239 = vmatprep.subr.mxu0 %v3661
        %4240 = vmatpush2.msra.mxu0 %v3660
        %4241 = vmatprep.subr.mxu0 %v3659
        %4242 = vmatpush2.msra.mxu0 %v3658
        %4243 = vmatprep.subr.mxu0 %v3657
        %4244 = vmatpush2.msra.mxu0 %v3656
        %4245 = vmatprep.subr.mxu0 %v3655
        %4246 = vmatpush2.msra.mxu0 %v3654
        %4247 = vmatprep.subr.mxu0 %v3653
        %4248 = vmatpush2.msra.mxu0 %v3652
        %4249 = vmatprep.subr.mxu0 %v3651
        %4250 = vmatpush2.msra.mxu0 %v3650
        %4251 = vmatprep.subr.mxu0 %v3649
        %4252 = vmatpush2.msra.mxu0 %v3648
        %4253 = vmatprep.subr.mxu0 %v3647
        %4254 = vmatpush2.msra.mxu0 %v3646
        %4255 = vmatprep.subr.mxu0 %v3645
        %4256 = vmatpush2.msra.mxu0 %v3644
        %4257 = vmatprep.subr.mxu0 %v3643
        %4258 = vmatpush2.msra.mxu0 %v3642
        %4259 = vmatprep.subr.mxu0 %v3641
        %4260 = vmatpush2.msra.mxu0 %v3640
        %4261 = vmatprep.mubr.f32.mxu0 %v4166
        %4262 = vmatmul.mubr.f32.gmra.mxu0 %v4165
        %v4263 = vpop.f32.mrf.mxu0
        %v4264 = vadd.f32 %v4125, %v4263
        %v4265 = vpop.f32.mrf.mxu0
        %v4266 = vadd.f32 %v4129, %v4265
        %4267 = vdwg.mxu0
        %4268 = vmatprep.subr.mxu0 %v3703
        %4269 = vmatpush1.msra.mxu0 %v3702
        %4270 = vmatprep.subr.mxu0 %v3701
        %4271 = vmatpush1.msra.mxu0 %v3700
        %4272 = vmatprep.subr.mxu0 %v3699
        %4273 = vmatpush1.msra.mxu0 %v3698
        %4274 = vmatprep.subr.mxu0 %v3697
        %4275 = vmatpush1.msra.mxu0 %v3696
        %4276 = vmatprep.subr.mxu0 %v3695
        %4277 = vmatpush1.msra.mxu0 %v3694
        %4278 = vmatprep.subr.mxu0 %v3693
        %4279 = vmatpush1.msra.mxu0 %v3692
        %4280 = vmatprep.subr.mxu0 %v3691
        %4281 = vmatpush1.msra.mxu0 %v3690
        %4282 = vmatprep.subr.mxu0 %v3689
        %4283 = vmatpush1.msra.mxu0 %v3688
        %4284 = vmatprep.subr.mxu0 %v3687
        %4285 = vmatpush1.msra.mxu0 %v3686
        %4286 = vmatprep.subr.mxu0 %v3685
        %4287 = vmatpush1.msra.mxu0 %v3684
        %4288 = vmatprep.subr.mxu0 %v3683
        %4289 = vmatpush1.msra.mxu0 %v3682
        %4290 = vmatprep.subr.mxu0 %v3681
        %4291 = vmatpush1.msra.mxu0 %v3680
        %4292 = vmatprep.subr.mxu0 %v3679
        %4293 = vmatpush1.msra.mxu0 %v3678
        %4294 = vmatprep.subr.mxu0 %v3677
        %4295 = vmatpush1.msra.mxu0 %v3676
        %4296 = vmatprep.subr.mxu0 %v3675
        %4297 = vmatpush1.msra.mxu0 %v3674
        %4298 = vmatprep.subr.mxu0 %v3673
        %4299 = vmatpush1.msra.mxu0 %v3672
        %4300 = vmatprep.subr.mxu0 %v3735
        %4301 = vmatpush2.msra.mxu0 %v3734
        %4302 = vmatprep.subr.mxu0 %v3733
        %4303 = vmatpush2.msra.mxu0 %v3732
        %4304 = vmatprep.subr.mxu0 %v3731
        %4305 = vmatpush2.msra.mxu0 %v3730
        %4306 = vmatprep.subr.mxu0 %v3729
        %4307 = vmatpush2.msra.mxu0 %v3728
        %4308 = vmatprep.subr.mxu0 %v3727
        %4309 = vmatpush2.msra.mxu0 %v3726
        %4310 = vmatprep.subr.mxu0 %v3725
        %4311 = vmatpush2.msra.mxu0 %v3724
        %4312 = vmatprep.subr.mxu0 %v3723
        %4313 = vmatpush2.msra.mxu0 %v3722
        %4314 = vmatprep.subr.mxu0 %v3721
        %4315 = vmatpush2.msra.mxu0 %v3720
        %4316 = vmatprep.subr.mxu0 %v3719
        %4317 = vmatpush2.msra.mxu0 %v3718
        %4318 = vmatprep.subr.mxu0 %v3717
        %4319 = vmatpush2.msra.mxu0 %v3716
        %4320 = vmatprep.subr.mxu0 %v3715
        %4321 = vmatpush2.msra.mxu0 %v3714
        %4322 = vmatprep.subr.mxu0 %v3713
        %4323 = vmatpush2.msra.mxu0 %v3712
        %4324 = vmatprep.subr.mxu0 %v3711
        %4325 = vmatpush2.msra.mxu0 %v3710
        %4326 = vmatprep.subr.mxu0 %v3709
        %4327 = vmatpush2.msra.mxu0 %v3708
        %4328 = vmatprep.subr.mxu0 %v3707
        %4329 = vmatpush2.msra.mxu0 %v3706
        %4330 = vmatprep.subr.mxu0 %v3705
        %4331 = vmatpush2.msra.mxu0 %v3704
        %4332 = vmatprep.mubr.f32.mxu0 %v4168
        %4333 = vmatmul.mubr.f32.gmra.mxu0 %v4167
        %v4334 = vpop.f32.mrf.mxu0
        %v4335 = vadd.f32 %v4264, %v4334
        %v4336 = vpop.f32.mrf.mxu0
        %v4337 = vadd.f32 %v4266, %v4336
        %4338 = vdwg.mxu0
        %4339 = vmatprep.subr.mxu0 %v3767
        %4340 = vmatpush1.msra.mxu0 %v3766
        %4341 = vmatprep.subr.mxu0 %v3765
        %4342 = vmatpush1.msra.mxu0 %v3764
        %4343 = vmatprep.subr.mxu0 %v3763
        %4344 = vmatpush1.msra.mxu0 %v3762
        %4345 = vmatprep.subr.mxu0 %v3761
        %4346 = vmatpush1.msra.mxu0 %v3760
        %4347 = vmatprep.subr.mxu0 %v3759
        %4348 = vmatpush1.msra.mxu0 %v3758
        %4349 = vmatprep.subr.mxu0 %v3757
        %4350 = vmatpush1.msra.mxu0 %v3756
        %4351 = vmatprep.subr.mxu0 %v3755
        %4352 = vmatpush1.msra.mxu0 %v3754
        %4353 = vmatprep.subr.mxu0 %v3753
        %4354 = vmatpush1.msra.mxu0 %v3752
        %4355 = vmatprep.subr.mxu0 %v3751
        %4356 = vmatpush1.msra.mxu0 %v3750
        %4357 = vmatprep.subr.mxu0 %v3749
        %4358 = vmatpush1.msra.mxu0 %v3748
        %4359 = vmatprep.subr.mxu0 %v3747
        %4360 = vmatpush1.msra.mxu0 %v3746
        %4361 = vmatprep.subr.mxu0 %v3745
        %4362 = vmatpush1.msra.mxu0 %v3744
        %4363 = vmatprep.subr.mxu0 %v3743
        %4364 = vmatpush1.msra.mxu0 %v3742
        %4365 = vmatprep.subr.mxu0 %v3741
        %4366 = vmatpush1.msra.mxu0 %v3740
        %4367 = vmatprep.subr.mxu0 %v3739
        %4368 = vmatpush1.msra.mxu0 %v3738
        %4369 = vmatprep.subr.mxu0 %v3737
        %4370 = vmatpush1.msra.mxu0 %v3736
        %4371 = vmatprep.subr.mxu0 %v3799
        %4372 = vmatpush2.msra.mxu0 %v3798
        %4373 = vmatprep.subr.mxu0 %v3797
        %4374 = vmatpush2.msra.mxu0 %v3796
        %4375 = vmatprep.subr.mxu0 %v3795
        %4376 = vmatpush2.msra.mxu0 %v3794
        %4377 = vmatprep.subr.mxu0 %v3793
        %4378 = vmatpush2.msra.mxu0 %v3792
        %4379 = vmatprep.subr.mxu0 %v3791
        %4380 = vmatpush2.msra.mxu0 %v3790
        %4381 = vmatprep.subr.mxu0 %v3789
        %4382 = vmatpush2.msra.mxu0 %v3788
        %4383 = vmatprep.subr.mxu0 %v3787
        %4384 = vmatpush2.msra.mxu0 %v3786
        %4385 = vmatprep.subr.mxu0 %v3785
        %4386 = vmatpush2.msra.mxu0 %v3784
        %4387 = vmatprep.subr.mxu0 %v3783
        %4388 = vmatpush2.msra.mxu0 %v3782
        %4389 = vmatprep.subr.mxu0 %v3781
        %4390 = vmatpush2.msra.mxu0 %v3780
        %4391 = vmatprep.subr.mxu0 %v3779
        %4392 = vmatpush2.msra.mxu0 %v3778
        %4393 = vmatprep.subr.mxu0 %v3777
        %4394 = vmatpush2.msra.mxu0 %v3776
        %4395 = vmatprep.subr.mxu0 %v3775
        %4396 = vmatpush2.msra.mxu0 %v3774
        %4397 = vmatprep.subr.mxu0 %v3773
        %4398 = vmatpush2.msra.mxu0 %v3772
        %4399 = vmatprep.subr.mxu0 %v3771
        %4400 = vmatpush2.msra.mxu0 %v3770
        %4401 = vmatprep.subr.mxu0 %v3769
        %4402 = vmatpush2.msra.mxu0 %v3768
        %4403 = vmatprep.mubr.f32.mxu0 %v4170
        %4404 = vmatmul.mubr.f32.gmra.mxu0 %v4169
        %v4405 = vpop.f32.mrf.mxu0
        %v4406 = vadd.f32 %v4335, %v4405
        %v4407 = vpop.f32.mrf.mxu0
        %v4408 = vadd.f32 %v4337, %v4407
        %4409 = vdwg.mxu0
        %4410 = vmatprep.subr.mxu0 %v3831
        %4411 = vmatpush1.msra.mxu0 %v3830
        %4412 = vmatprep.subr.mxu0 %v3829
        %4413 = vmatpush1.msra.mxu0 %v3828
        %4414 = vmatprep.subr.mxu0 %v3827
        %4415 = vmatpush1.msra.mxu0 %v3826
        %4416 = vmatprep.subr.mxu0 %v3825
        %4417 = vmatpush1.msra.mxu0 %v3824
        %4418 = vmatprep.subr.mxu0 %v3823
        %4419 = vmatpush1.msra.mxu0 %v3822
        %4420 = vmatprep.subr.mxu0 %v3821
        %4421 = vmatpush1.msra.mxu0 %v3820
        %4422 = vmatprep.subr.mxu0 %v3819
        %4423 = vmatpush1.msra.mxu0 %v3818
        %4424 = vmatprep.subr.mxu0 %v3817
        %4425 = vmatpush1.msra.mxu0 %v3816
        %4426 = vmatprep.subr.mxu0 %v3815
        %4427 = vmatpush1.msra.mxu0 %v3814
        %4428 = vmatprep.subr.mxu0 %v3813
        %4429 = vmatpush1.msra.mxu0 %v3812
        %4430 = vmatprep.subr.mxu0 %v3811
        %4431 = vmatpush1.msra.mxu0 %v3810
        %4432 = vmatprep.subr.mxu0 %v3809
        %4433 = vmatpush1.msra.mxu0 %v3808
        %4434 = vmatprep.subr.mxu0 %v3807
        %4435 = vmatpush1.msra.mxu0 %v3806
        %4436 = vmatprep.subr.mxu0 %v3805
        %4437 = vmatpush1.msra.mxu0 %v3804
        %4438 = vmatprep.subr.mxu0 %v3803
        %4439 = vmatpush1.msra.mxu0 %v3802
        %4440 = vmatprep.subr.mxu0 %v3801
        %4441 = vmatpush1.msra.mxu0 %v3800
        %4442 = vmatprep.subr.mxu0 %v3863
        %4443 = vmatpush2.msra.mxu0 %v3862
        %4444 = vmatprep.subr.mxu0 %v3861
        %4445 = vmatpush2.msra.mxu0 %v3860
        %4446 = vmatprep.subr.mxu0 %v3859
        %4447 = vmatpush2.msra.mxu0 %v3858
        %4448 = vmatprep.subr.mxu0 %v3857
        %4449 = vmatpush2.msra.mxu0 %v3856
        %4450 = vmatprep.subr.mxu0 %v3855
        %4451 = vmatpush2.msra.mxu0 %v3854
        %4452 = vmatprep.subr.mxu0 %v3853
        %4453 = vmatpush2.msra.mxu0 %v3852
        %4454 = vmatprep.subr.mxu0 %v3851
        %4455 = vmatpush2.msra.mxu0 %v3850
        %4456 = vmatprep.subr.mxu0 %v3849
        %4457 = vmatpush2.msra.mxu0 %v3848
        %4458 = vmatprep.subr.mxu0 %v3847
        %4459 = vmatpush2.msra.mxu0 %v3846
        %4460 = vmatprep.subr.mxu0 %v3845
        %4461 = vmatpush2.msra.mxu0 %v3844
        %4462 = vmatprep.subr.mxu0 %v3843
        %4463 = vmatpush2.msra.mxu0 %v3842
        %4464 = vmatprep.subr.mxu0 %v3841
        %4465 = vmatpush2.msra.mxu0 %v3840
        %4466 = vmatprep.subr.mxu0 %v3839
        %4467 = vmatpush2.msra.mxu0 %v3838
        %4468 = vmatprep.subr.mxu0 %v3837
        %4469 = vmatpush2.msra.mxu0 %v3836
        %4470 = vmatprep.subr.mxu0 %v3835
        %4471 = vmatpush2.msra.mxu0 %v3834
        %4472 = vmatprep.subr.mxu0 %v3833
        %4473 = vmatpush2.msra.mxu0 %v3832
        %4474 = vmatprep.mubr.f32.mxu0 %v4172
        %4475 = vmatmul.mubr.f32.gmra.mxu0 %v4171
        %v4476 = vpop.f32.mrf.mxu0
        %v4477 = vadd.f32 %v4406, %v4476
        %v4478 = vpop.f32.mrf.mxu0
        %v4479 = vadd.f32 %v4408, %v4478
        %4480 = vdwg.mxu0
        %4481 = vmatprep.subr.mxu0 %v3895
        %4482 = vmatpush1.msra.mxu0 %v3894
        %4483 = vmatprep.subr.mxu0 %v3893
        %4484 = vmatpush1.msra.mxu0 %v3892
        %4485 = vmatprep.subr.mxu0 %v3891
        %4486 = vmatpush1.msra.mxu0 %v3890
        %4487 = vmatprep.subr.mxu0 %v3889
        %4488 = vmatpush1.msra.mxu0 %v3888
        %4489 = vmatprep.subr.mxu0 %v3887
        %4490 = vmatpush1.msra.mxu0 %v3886
        %4491 = vmatprep.subr.mxu0 %v3885
        %4492 = vmatpush1.msra.mxu0 %v3884
        %4493 = vmatprep.subr.mxu0 %v3883
        %4494 = vmatpush1.msra.mxu0 %v3882
        %4495 = vmatprep.subr.mxu0 %v3881
        %4496 = vmatpush1.msra.mxu0 %v3880
        %4497 = vmatprep.subr.mxu0 %v3879
        %4498 = vmatpush1.msra.mxu0 %v3878
        %4499 = vmatprep.subr.mxu0 %v3877
        %4500 = vmatpush1.msra.mxu0 %v3876
        %4501 = vmatprep.subr.mxu0 %v3875
        %4502 = vmatpush1.msra.mxu0 %v3874
        %4503 = vmatprep.subr.mxu0 %v3873
        %4504 = vmatpush1.msra.mxu0 %v3872
        %4505 = vmatprep.subr.mxu0 %v3871
        %4506 = vmatpush1.msra.mxu0 %v3870
        %4507 = vmatprep.subr.mxu0 %v3869
        %4508 = vmatpush1.msra.mxu0 %v3868
        %4509 = vmatprep.subr.mxu0 %v3867
        %4510 = vmatpush1.msra.mxu0 %v3866
        %4511 = vmatprep.subr.mxu0 %v3865
        %4512 = vmatpush1.msra.mxu0 %v3864
        %4513 = vmatprep.subr.mxu0 %v3927
        %4514 = vmatpush2.msra.mxu0 %v3926
        %4515 = vmatprep.subr.mxu0 %v3925
        %4516 = vmatpush2.msra.mxu0 %v3924
        %4517 = vmatprep.subr.mxu0 %v3923
        %4518 = vmatpush2.msra.mxu0 %v3922
        %4519 = vmatprep.subr.mxu0 %v3921
        %4520 = vmatpush2.msra.mxu0 %v3920
        %4521 = vmatprep.subr.mxu0 %v3919
        %4522 = vmatpush2.msra.mxu0 %v3918
        %4523 = vmatprep.subr.mxu0 %v3917
        %4524 = vmatpush2.msra.mxu0 %v3916
        %4525 = vmatprep.subr.mxu0 %v3915
        %4526 = vmatpush2.msra.mxu0 %v3914
        %4527 = vmatprep.subr.mxu0 %v3913
        %4528 = vmatpush2.msra.mxu0 %v3912
        %4529 = vmatprep.subr.mxu0 %v3911
        %4530 = vmatpush2.msra.mxu0 %v3910
        %4531 = vmatprep.subr.mxu0 %v3909
        %4532 = vmatpush2.msra.mxu0 %v3908
        %4533 = vmatprep.subr.mxu0 %v3907
        %4534 = vmatpush2.msra.mxu0 %v3906
        %4535 = vmatprep.subr.mxu0 %v3905
        %4536 = vmatpush2.msra.mxu0 %v3904
        %4537 = vmatprep.subr.mxu0 %v3903
        %4538 = vmatpush2.msra.mxu0 %v3902
        %4539 = vmatprep.subr.mxu0 %v3901
        %4540 = vmatpush2.msra.mxu0 %v3900
        %4541 = vmatprep.subr.mxu0 %v3899
        %4542 = vmatpush2.msra.mxu0 %v3898
        %4543 = vmatprep.subr.mxu0 %v3897
        %4544 = vmatpush2.msra.mxu0 %v3896
        %4545 = vmatprep.mubr.f32.mxu0 %v4174
        %4546 = vmatmul.mubr.f32.gmra.mxu0 %v4173
        %v4547 = vpop.f32.mrf.mxu0
        %v4548 = vadd.f32 %v4477, %v4547
        %v4549 = vpop.f32.mrf.mxu0
        %v4550 = vadd.f32 %v4479, %v4549
        %4551 = vdwg.mxu0
        %4552 = vmatprep.subr.mxu0 %v3959
        %4553 = vmatpush1.msra.mxu0 %v3958
        %4554 = vmatprep.subr.mxu0 %v3957
        %4555 = vmatpush1.msra.mxu0 %v3956
        %4556 = vmatprep.subr.mxu0 %v3955
        %4557 = vmatpush1.msra.mxu0 %v3954
        %4558 = vmatprep.subr.mxu0 %v3953
        %4559 = vmatpush1.msra.mxu0 %v3952
        %4560 = vmatprep.subr.mxu0 %v3951
        %4561 = vmatpush1.msra.mxu0 %v3950
        %4562 = vmatprep.subr.mxu0 %v3949
        %4563 = vmatpush1.msra.mxu0 %v3948
        %4564 = vmatprep.subr.mxu0 %v3947
        %4565 = vmatpush1.msra.mxu0 %v3946
        %4566 = vmatprep.subr.mxu0 %v3945
        %4567 = vmatpush1.msra.mxu0 %v3944
        %4568 = vmatprep.subr.mxu0 %v3943
        %4569 = vmatpush1.msra.mxu0 %v3942
        %4570 = vmatprep.subr.mxu0 %v3941
        %4571 = vmatpush1.msra.mxu0 %v3940
        %4572 = vmatprep.subr.mxu0 %v3939
        %4573 = vmatpush1.msra.mxu0 %v3938
        %4574 = vmatprep.subr.mxu0 %v3937
        %4575 = vmatpush1.msra.mxu0 %v3936
        %4576 = vmatprep.subr.mxu0 %v3935
        %4577 = vmatpush1.msra.mxu0 %v3934
        %4578 = vmatprep.subr.mxu0 %v3933
        %4579 = vmatpush1.msra.mxu0 %v3932
        %4580 = vmatprep.subr.mxu0 %v3931
        %4581 = vmatpush1.msra.mxu0 %v3930
        %4582 = vmatprep.subr.mxu0 %v3929
        %4583 = vmatpush1.msra.mxu0 %v3928
        %4584 = vmatprep.subr.mxu0 %v3991
        %4585 = vmatpush2.msra.mxu0 %v3990
        %4586 = vmatprep.subr.mxu0 %v3989
        %4587 = vmatpush2.msra.mxu0 %v3988
        %4588 = vmatprep.subr.mxu0 %v3987
        %4589 = vmatpush2.msra.mxu0 %v3986
        %4590 = vmatprep.subr.mxu0 %v3985
        %4591 = vmatpush2.msra.mxu0 %v3984
        %4592 = vmatprep.subr.mxu0 %v3983
        %4593 = vmatpush2.msra.mxu0 %v3982
        %4594 = vmatprep.subr.mxu0 %v3981
        %4595 = vmatpush2.msra.mxu0 %v3980
        %4596 = vmatprep.subr.mxu0 %v3979
        %4597 = vmatpush2.msra.mxu0 %v3978
        %4598 = vmatprep.subr.mxu0 %v3977
        %4599 = vmatpush2.msra.mxu0 %v3976
        %4600 = vmatprep.subr.mxu0 %v3975
        %4601 = vmatpush2.msra.mxu0 %v3974
        %4602 = vmatprep.subr.mxu0 %v3973
        %4603 = vmatpush2.msra.mxu0 %v3972
        %4604 = vmatprep.subr.mxu0 %v3971
        %4605 = vmatpush2.msra.mxu0 %v3970
        %4606 = vmatprep.subr.mxu0 %v3969
        %4607 = vmatpush2.msra.mxu0 %v3968
        %4608 = vmatprep.subr.mxu0 %v3967
        %4609 = vmatpush2.msra.mxu0 %v3966
        %4610 = vmatprep.subr.mxu0 %v3965
        %4611 = vmatpush2.msra.mxu0 %v3964
        %4612 = vmatprep.subr.mxu0 %v3963
        %4613 = vmatpush2.msra.mxu0 %v3962
        %4614 = vmatprep.subr.mxu0 %v3961
        %4615 = vmatpush2.msra.mxu0 %v3960
        %4616 = vmatprep.mubr.f32.mxu0 %v4176
        %4617 = vmatmul.mubr.f32.gmra.mxu0 %v4175
        %v4618 = vpop.f32.mrf.mxu0
        %v4619 = vadd.f32 %v4548, %v4618
        %v4620 = vpop.f32.mrf.mxu0
        %v4621 = vadd.f32 %v4550, %v4620
        %4622 = vdwg.mxu0
        %4623 = vmatprep.subr.mxu0 %v4023
        %4624 = vmatpush1.msra.mxu0 %v4022
        %4625 = vmatprep.subr.mxu0 %v4021
        %4626 = vmatpush1.msra.mxu0 %v4020
        %4627 = vmatprep.subr.mxu0 %v4019
        %4628 = vmatpush1.msra.mxu0 %v4018
        %4629 = vmatprep.subr.mxu0 %v4017
        %4630 = vmatpush1.msra.mxu0 %v4016
        %4631 = vmatprep.subr.mxu0 %v4015
        %4632 = vmatpush1.msra.mxu0 %v4014
        %4633 = vmatprep.subr.mxu0 %v4013
        %4634 = vmatpush1.msra.mxu0 %v4012
        %4635 = vmatprep.subr.mxu0 %v4011
        %4636 = vmatpush1.msra.mxu0 %v4010
        %4637 = vmatprep.subr.mxu0 %v4009
        %4638 = vmatpush1.msra.mxu0 %v4008
        %4639 = vmatprep.subr.mxu0 %v4007
        %4640 = vmatpush1.msra.mxu0 %v4006
        %4641 = vmatprep.subr.mxu0 %v4005
        %4642 = vmatpush1.msra.mxu0 %v4004
        %4643 = vmatprep.subr.mxu0 %v4003
        %4644 = vmatpush1.msra.mxu0 %v4002
        %4645 = vmatprep.subr.mxu0 %v4001
        %4646 = vmatpush1.msra.mxu0 %v4000
        %4647 = vmatprep.subr.mxu0 %v3999
        %4648 = vmatpush1.msra.mxu0 %v3998
        %4649 = vmatprep.subr.mxu0 %v3997
        %4650 = vmatpush1.msra.mxu0 %v3996
        %4651 = vmatprep.subr.mxu0 %v3995
        %4652 = vmatpush1.msra.mxu0 %v3994
        %4653 = vmatprep.subr.mxu0 %v3993
        %4654 = vmatpush1.msra.mxu0 %v3992
        %4655 = vmatprep.subr.mxu0 %v4055
        %4656 = vmatpush2.msra.mxu0 %v4054
        %4657 = vmatprep.subr.mxu0 %v4053
        %4658 = vmatpush2.msra.mxu0 %v4052
        %4659 = vmatprep.subr.mxu0 %v4051
        %4660 = vmatpush2.msra.mxu0 %v4050
        %4661 = vmatprep.subr.mxu0 %v4049
        %4662 = vmatpush2.msra.mxu0 %v4048
        %4663 = vmatprep.subr.mxu0 %v4047
        %4664 = vmatpush2.msra.mxu0 %v4046
        %4665 = vmatprep.subr.mxu0 %v4045
        %4666 = vmatpush2.msra.mxu0 %v4044
        %4667 = vmatprep.subr.mxu0 %v4043
        %4668 = vmatpush2.msra.mxu0 %v4042
        %4669 = vmatprep.subr.mxu0 %v4041
        %4670 = vmatpush2.msra.mxu0 %v4040
        %4671 = vmatprep.subr.mxu0 %v4039
        %4672 = vmatpush2.msra.mxu0 %v4038
        %4673 = vmatprep.subr.mxu0 %v4037
        %4674 = vmatpush2.msra.mxu0 %v4036
        %4675 = vmatprep.subr.mxu0 %v4035
        %4676 = vmatpush2.msra.mxu0 %v4034
        %4677 = vmatprep.subr.mxu0 %v4033
        %4678 = vmatpush2.msra.mxu0 %v4032
        %4679 = vmatprep.subr.mxu0 %v4031
        %4680 = vmatpush2.msra.mxu0 %v4030
        %4681 = vmatprep.subr.mxu0 %v4029
        %4682 = vmatpush2.msra.mxu0 %v4028
        %4683 = vmatprep.subr.mxu0 %v4027
        %4684 = vmatpush2.msra.mxu0 %v4026
        %4685 = vmatprep.subr.mxu0 %v4025
        %4686 = vmatpush2.msra.mxu0 %v4024
        %4687 = vmatprep.mubr.f32.mxu0 %v4178
        %4688 = vmatmul.mubr.f32.gmra.mxu0 %v4177
        %v4689 = vpop.f32.mrf.mxu0
        %v4690 = vadd.f32 %v4619, %v4689
        %v4691 = vpop.f32.mrf.mxu0
        %v4692 = vadd.f32 %v4621, %v4691
        %4693 = vdwg.mxu0
        %4694 = vmatprep.subr.mxu0 %v4087
        %4695 = vmatpush1.msra.mxu0 %v4086
        %4696 = vmatprep.subr.mxu0 %v4085
        %4697 = vmatpush1.msra.mxu0 %v4084
        %4698 = vmatprep.subr.mxu0 %v4083
        %4699 = vmatpush1.msra.mxu0 %v4082
        %4700 = vmatprep.subr.mxu0 %v4081
        %4701 = vmatpush1.msra.mxu0 %v4080
        %4702 = vmatprep.subr.mxu0 %v4079
        %4703 = vmatpush1.msra.mxu0 %v4078
        %4704 = vmatprep.subr.mxu0 %v4077
        %4705 = vmatpush1.msra.mxu0 %v4076
        %4706 = vmatprep.subr.mxu0 %v4075
        %4707 = vmatpush1.msra.mxu0 %v4074
        %4708 = vmatprep.subr.mxu0 %v4073
        %4709 = vmatpush1.msra.mxu0 %v4072
        %4710 = vmatprep.subr.mxu0 %v4071
        %4711 = vmatpush1.msra.mxu0 %v4070
        %4712 = vmatprep.subr.mxu0 %v4069
        %4713 = vmatpush1.msra.mxu0 %v4068
        %4714 = vmatprep.subr.mxu0 %v4067
        %4715 = vmatpush1.msra.mxu0 %v4066
        %4716 = vmatprep.subr.mxu0 %v4065
        %4717 = vmatpush1.msra.mxu0 %v4064
        %4718 = vmatprep.subr.mxu0 %v4063
        %4719 = vmatpush1.msra.mxu0 %v4062
        %4720 = vmatprep.subr.mxu0 %v4061
        %4721 = vmatpush1.msra.mxu0 %v4060
        %4722 = vmatprep.subr.mxu0 %v4059
        %4723 = vmatpush1.msra.mxu0 %v4058
        %4724 = vmatprep.subr.mxu0 %v4057
        %4725 = vmatpush1.msra.mxu0 %v4056
        %4726 = vmatprep.subr.mxu0 %v4119
        %4727 = vmatpush2.msra.mxu0 %v4118
        %4728 = vmatprep.subr.mxu0 %v4117
        %4729 = vmatpush2.msra.mxu0 %v4116
        %4730 = vmatprep.subr.mxu0 %v4115
        %4731 = vmatpush2.msra.mxu0 %v4114
        %4732 = vmatprep.subr.mxu0 %v4113
        %4733 = vmatpush2.msra.mxu0 %v4112
        %4734 = vmatprep.subr.mxu0 %v4111
        %4735 = vmatpush2.msra.mxu0 %v4110
        %4736 = vmatprep.subr.mxu0 %v4109
        %4737 = vmatpush2.msra.mxu0 %v4108
        %4738 = vmatprep.subr.mxu0 %v4107
        %4739 = vmatpush2.msra.mxu0 %v4106
        %4740 = vmatprep.subr.mxu0 %v4105
        %4741 = vmatpush2.msra.mxu0 %v4104
        %4742 = vmatprep.subr.mxu0 %v4103
        %4743 = vmatpush2.msra.mxu0 %v4102
        %4744 = vmatprep.subr.mxu0 %v4101
        %4745 = vmatpush2.msra.mxu0 %v4100
        %4746 = vmatprep.subr.mxu0 %v4099
        %4747 = vmatpush2.msra.mxu0 %v4098
        %4748 = vmatprep.subr.mxu0 %v4097
        %4749 = vmatpush2.msra.mxu0 %v4096
        %4750 = vmatprep.subr.mxu0 %v4095
        %4751 = vmatpush2.msra.mxu0 %v4094
        %4752 = vmatprep.subr.mxu0 %v4093
        %4753 = vmatpush2.msra.mxu0 %v4092
        %4754 = vmatprep.subr.mxu0 %v4091
        %4755 = vmatpush2.msra.mxu0 %v4090
        %4756 = vmatprep.subr.mxu0 %v4089
        %4757 = vmatpush2.msra.mxu0 %v4088
        %4758 = vmatprep.mubr.f32.mxu0 %v4180
        %4759 = vmatmul.mubr.f32.gmra.mxu0 %v4179
        %v4760 = vpop.f32.mrf.mxu0
        %v4761 = vadd.f32 %v4690, %v4760
        %v4762 = vpop.f32.mrf.mxu0
        %v4763 = vadd.f32 %v4692, %v4762
        %4764 = vdwg.mxu0
        %v4765 = vmul.f32 %v4761, %v4761
        %v4766 = vmul.f32 %v4763, %v4763
        %vm4767 = vcmask 1041408
        %v4768 = vsel %vm4767, %v4765, 0.0
        %v4769 = vsel %vm4767, %v4766, 0.0
        %v4770 = vadd.f32 %v4768, %v4769
        %4771 = vadd.xlane.f32.xlu0 %v4770
        %v4772 = vpop.xlane.xlu0 %4771
        %v4773 = vmax.f32 %v4772, 1e-24
        %v4774 = vrsqrt.pop %v4773
        %v4775 = vmul.f32 %v4761, %v4774
        %v4776 = vmul.f32 %v4763, %v4774
        %v4779 = vcombine.low %v4775, %v4776
        %v4781 = vunpack.c.l.s4 1983009808
        %v4782 = vunpack.c.0.s8 %v4781
        %v4783 = vlaneseq
        %v4784 = vshrl.u32 %v4783, 7
        %v4785 = vsub.s32 %v4782, %v4784
        %v4786 = vrot.slane %v4779, %v4785
        %4788 = vst [vmem:[%s345] sm:$0xf] %v4786
        %s4789 = sand.u32 %s163, 1
        %s4790 = scalar_lea.sflag [#allocation4], %s4789
        %s4791 = sand.u32 %s163, 1
        %s4792 = smul.addr %s4791, 4
        %s4793 = scalar_lea.vmem [#allocation8], %s4792
        // Predicated region
        $region53: #{tpu_custom_call.1} parent=39 // pred_check
          %p4794 = pneg %p173
        $region54: #{tpu_custom_call.1} parent=39 // pred_check_branch
          %4796 = sbr.rel (%p4794) target = $region56
        $region55: #{tpu_custom_call.1} parent=39 // pred_region
          %s4798 = ssub.s32 64, 64
          %4799 = vsyncadd %s4790, %s4798
          %s4800 = smul.addr %s25, 2
          %s4801 = smul.addr %s4800, 32
          %s4802 = scalar_lea.hbm %s5, %s4801
          %s4804 = sshll.u32 %s4793, 4
          %s4805 = int_to_ptr.vmem [resolvable:$true] %s4804
          %4807 = dma.vmem_to_hbm [thread:$0]  %s4805, 64, %s4802, %s4790
        $region56: #{tpu_custom_call.1} parent=39 // pred_fallthru
          _
      $region40: #{tpu_custom_call.1} parent=5 // pred_fallthru
        _
      %p4808 = scmp.le.s32.totalorder 2, %s20
      // Predicated region
      $region57: #{tpu_custom_call.1} parent=5 // pred_check
        %p4809 = pneg %p4808
      $region58: #{tpu_custom_call.1} parent=5 // pred_check_branch
        %4811 = sbr.rel (%p4809) target = $region60
      $region59: #{tpu_custom_call.1} parent=5 // pred_region
        %s4812 = ssub.s32 %s20, 2
        // Predicated region
        $region61: #{tpu_custom_call.1} parent=59 // pred_check
          %p4813 = pneg %p179
        $region62: #{tpu_custom_call.1} parent=59 // pred_check_branch
          %4815 = sbr.rel (%p4813) target = $region64
        $region63: #{tpu_custom_call.1} parent=59 // pred_region
          %s4816 = sand.u32 %s164, 1
          %s4817 = scalar_lea.sflag [#allocation4], %s4816
          %s4818 = sand.u32 %s164, 1
          %s4819 = smul.addr %s4818, 4
          %s4820 = scalar_lea.vmem [#allocation8], %s4819
          %4821 = dma.done %s4817, 64
        $region64: #{tpu_custom_call.1} parent=59 // pred_fallthru
          _
      $region60: #{tpu_custom_call.1} parent=5 // pred_fallthru
        _
    $region6: #{tpu_custom_call.1} parent=1 // loop_footer
      %s24 = sadd.s32 1, %s20
    $region7: #{tpu_custom_call.1} parent=1 // loop_footer_branch
      %19 = sbr.rel target = $region3
    $region8: #{tpu_custom_call.1} parent=1 // loop_exit
      _
    %4822 = vsyncpa [#allocation3], 1
    %s4823 = scalar_lea.sflag [#allocation3], 1
    %4824 = vsyncpa %s4823, 1
    %4825 = vsyncpa [#allocation6], 1
    %s4826 = scalar_lea.sflag [#allocation6], 1
    %4827 = vsyncpa %s4826, 1
    %4828 = vsyncpa [#allocation4], 1
    %s4829 = scalar_lea.sflag [#allocation4], 1
    %4830 = vsyncpa %s4829, 1

</llo_original>
